<compile_context>
chip_gen: v5e
topology: v5e:2x2
jax: 0.10.0
libtpu: 0.0.40
codegen_flags: <defaults>
</compile_context>

<pallas_src>
import functools

import jax
import jax.numpy as jnp
from jax.experimental import pallas as pl
from jax.experimental.pallas import tpu as pltpu


# ---------------------------------------------------------------------------
# Generation-aware limits (v7x: 64 MiB physical VMEM vs 128 MiB on v5e/v6e).
# ---------------------------------------------------------------------------
def _vmem_capacity_bytes():
    try:
        return int(pltpu.get_tpu_info().vmem_capacity_bytes)
    except Exception:
        return 128 * 1024 * 1024


_VMEM_CAP = _vmem_capacity_bytes()
_SMALL_VMEM = _VMEM_CAP <= 96 * 1024 * 1024                    # v7x-class part
_VMEM_LIMIT = min(48 * 1024 * 1024, (_VMEM_CAP * 5) // 8)      # 40 MiB v7x / 48 MiB v5e,v6e
_TILE_M_CAP = 256 if _SMALL_VMEM else 512
_ROW_TILE_CAP = 16 if _SMALL_VMEM else 32


# ---------------------------------------------------------------------------
# Tile-size helpers (always exact divisors -> no pad/slice round trips).
# ---------------------------------------------------------------------------
def _pick_tile_m(m, cap):
    """Largest divisor of m that is a multiple of 8, <= cap and (if possible)
    leaves >= 2 grid steps so both v7x TensorCores get work."""
    fallback = None
    for t in range(min(m, cap), 0, -1):
        if m % t == 0 and t % 8 == 0:
            if m // t >= 2:
                return t
            if fallback is None:
                fallback = t
    tile = fallback if fallback is not None else m
    # Only a full-M block may violate the multiple-of-8 rule (allowed by the
    # (8,128) exemption for full-extent blocks).
    assert tile % 8 == 0 or tile == m, (m, tile)
    return tile


def _pick_tile_n(n, cap=256):
    """Output-channel tile: whole when small, else a lane-dense (128-multiple)
    divisor <= cap so stores stay unmasked."""
    if n <= cap:
        return n
    for t in range(cap, 127, -1):
        if n % t == 0 and t % 128 == 0:
            return t
    return n


def _pick_row_tile(h, max_rows):
    """Row tile: divisor of h, <= max_rows, >= 2 tiles when possible."""
    for t in range(min(max(h // 2, 1), max_rows), 0, -1):
        if h % t == 0:
            return t
    return h


def _row_semantics(n):
    # Prefer splitting the megacore on batch; only expose the row axis as
    # parallel when there is a single image (keeps the resident whole-image
    # block from being DMA'd once per core).
    return "parallel" if n == 1 else "arbitrary"


# ---------------------------------------------------------------------------
# Kernel 1: fused 3x3 conv (+ folded-BN shift + ReLU + LAB).  Taps are built
# in-kernel from a halo'd activation tile (no im2col in HBM); the 3 dx taps of
# each dy are fused into one deep-K matmul; Cout is tiled in the grid.
# ---------------------------------------------------------------------------
def _conv3x3_bn_act_kernel(x_ref, w_ref, shift_ref, o_ref, *, th, width, relu,
                           lab_scale, lab_bias):
    # x_ref:     (1, H+2, W+2, Cin)  padded bf16 image (resident per batch)
    # w_ref:     (3, 3*Cin, tn)      bf16 weights, BN scale folded; [dy, dx*Cin+c, o]
    # shift_ref: (1, tn)             f32 folded BN shift
    # o_ref:     (th*W, tn)          flattened output rows for this (row, cout) tile
    cin = x_ref.shape[-1]
    tn = o_ref.shape[-1]
    y0 = pl.program_id(1) * th
    acc = jnp.zeros((th * width, tn), jnp.float32)
    for dy in range(3):
        rows = x_ref[0, pl.ds(y0 + dy, th), :, :]                       # (th, W+2, Cin)
        slab = jnp.concatenate([rows[:, dx:dx + width, :] for dx in range(3)],
                               axis=-1)                                  # (th, W, 3*Cin)
        acc = acc + jnp.dot(slab.reshape(th * width, 3 * cin), w_ref[dy],
                            preferred_element_type=jnp.float32)
    y = acc + shift_ref[...]
    if relu:
        y = jnp.maximum(y, 0.0)
    if lab_scale != 1.0 or lab_bias != 0.0:   # LearnableAffineBlock (identity here)
        y = y * lab_scale + lab_bias
    o_ref[...] = y.astype(o_ref.dtype)


def conv3x3_bn_act(x, p, *, relu=True, out_dtype=jnp.bfloat16,
                   lab_scale=1.0, lab_bias=0.0):
    """ConvBNAct(k=3, s=1, pad=1).  NHWC in, flattened (N*H*W, Cout) out."""
    n, h, w, cin = x.shape
    cout = p["w"].shape[-1]
    th = _pick_row_tile(h, _ROW_TILE_CAP)
    rt = h // th
    tn = _pick_tile_n(cout)
    nt = cout // tn
    xp = jnp.pad(x, ((0, 0), (1, 1), (1, 1), (0, 0)))   # 1-px halo (cheap vs im2col)
    kernel = functools.partial(_conv3x3_bn_act_kernel, th=th, width=w, relu=relu,
                               lab_scale=float(lab_scale), lab_bias=float(lab_bias))
    out = pl.pallas_call(
        kernel,
        out_shape=jax.ShapeDtypeStruct((n * h * w, cout), out_dtype),
        grid=(n, rt, nt),
        in_specs=[
            pl.BlockSpec((1, h + 2, w + 2, cin), lambda i, r, j: (i, 0, 0, 0)),
            pl.BlockSpec((3, 3 * cin, tn), lambda i, r, j: (0, 0, j)),
            pl.BlockSpec((1, tn), lambda i, r, j: (0, j)),
        ],
        out_specs=pl.BlockSpec((th * w, tn),
                               lambda i, r, j, _rt=rt: (i * _rt + r, j)),
        compiler_params=pltpu.CompilerParams(
            dimension_semantics=("parallel", _row_semantics(n), "arbitrary"),
            vmem_limit_bytes=_VMEM_LIMIT),
    )(xp, p["w"], p["shift"])
    return out


# ---------------------------------------------------------------------------
# Kernel 2: multi-branch matmul + BN shift + ReLU (+ LAB) (+ fused residual).
# Implements 1x1 convs and the fused [channel-concat -> aggregation squeeze]
# without materializing the concat in HBM.  When per-branch K is small the
# branch tiles are concatenated in VMEM and one deep-K matmul is issued.
# ---------------------------------------------------------------------------
def _multi_matmul_bn_act_kernel(*refs, nb, k_sizes, fuse_k, relu, has_res,
                                lab_scale, lab_bias):
    xs = refs[:nb]
    w_ref = refs[nb]
    shift_ref = refs[nb + 1]
    res_ref = refs[nb + 2] if has_res else None
    o_ref = refs[-1]
    if fuse_k and nb > 1:
        xcat = jnp.concatenate([x[...] for x in xs], axis=-1)   # in-VMEM concat
        acc = jnp.dot(xcat, w_ref[...], preferred_element_type=jnp.float32)
    else:
        acc = jnp.zeros(o_ref.shape, jnp.float32)
        off = 0
        for x, kb in zip(xs, k_sizes):
            acc = acc + jnp.dot(x[...], w_ref[off:off + kb, :],
                                preferred_element_type=jnp.float32)
            off += kb
    y = acc + shift_ref[...]
    if relu:
        y = jnp.maximum(y, 0.0)
    if lab_scale != 1.0 or lab_bias != 0.0:
        y = y * lab_scale + lab_bias
    if has_res:
        y = y + res_ref[...].astype(jnp.float32)   # drop_path=0.0 -> identity add
    o_ref[...] = y.astype(o_ref.dtype)


def multi_matmul_bn_act(xs, w, shift, *, relu=True, residual=None,
                        out_dtype=jnp.bfloat16, lab_scale=1.0, lab_bias=0.0):
    m = xs[0].shape[0]
    ks = [int(x.shape[1]) for x in xs]
    ktot, cout = w.shape
    assert ktot == sum(ks)
    tm = _pick_tile_m(m, _TILE_M_CAP)
    tn = _pick_tile_n(cout)
    fuse_k = len(xs) > 1 and max(ks) < 128     # shallow branches -> one deep matmul
    has_res = residual is not None
    kernel = functools.partial(
        _multi_matmul_bn_act_kernel, nb=len(xs), k_sizes=tuple(ks), fuse_k=fuse_k,
        relu=relu, has_res=has_res, lab_scale=float(lab_scale),
        lab_bias=float(lab_bias))
    in_specs = ([pl.BlockSpec((tm, k), lambda i, j: (i, 0)) for k in ks]
                + [pl.BlockSpec((ktot, tn), lambda i, j: (0, j)),
                   pl.BlockSpec((1, tn), lambda i, j: (0, j))])
    args = list(xs) + [w, shift]
    if has_res:
        in_specs.append(pl.BlockSpec((tm, tn), lambda i, j: (i, j)))
        args.append(residual)
    out = pl.pallas_call(
        kernel,
        out_shape=jax.ShapeDtypeStruct((m, cout), out_dtype),
        grid=(m // tm, cout // tn),
        in_specs=in_specs,
        out_specs=pl.BlockSpec((tm, tn), lambda i, j: (i, j)),
        compiler_params=pltpu.CompilerParams(
            dimension_semantics=("parallel", "arbitrary"),
            vmem_limit_bytes=_VMEM_LIMIT),
    )(*args)
    return out


# ---------------------------------------------------------------------------
# Kernel 3: depthwise 3x3 stride-2 conv + folded BN (HG_Stage downsample,
# use_act=False).  Only the Ho*Wo stride-2 outputs are computed; the four
# even/odd (row, col) phase inputs keep every in-kernel slice contiguous.
# Row-tiled grid keeps the f32 accumulator small; bf16->f32 convert is done
# once per phase window (4x) instead of once per tap (9x).
# ---------------------------------------------------------------------------
def _dwconv3x3_s2_bn_kernel(pee_ref, peo_ref, poe_ref, poo_ref, w_ref, shift_ref,
                            o_ref, *, tr, wo, relu):
    c = o_ref.shape[-1]
    y0 = pl.program_id(1) * tr
    wk = w_ref[...]                                         # (9, C), scale folded, f32
    win = [pref[0, pl.ds(y0, tr + 1), :, :].astype(jnp.float32)   # (tr+1, Wo+1, C)
           for pref in (pee_ref, peo_ref, poe_ref, poo_ref)]
    phases = ((win[0], win[1]), (win[2], win[3]))           # [row parity][col parity]
    acc = jnp.zeros((tr, wo, c), jnp.float32)
    for dy in range(3):
        for dx in range(3):
            src = phases[dy % 2][dx % 2]
            oy, ox = dy // 2, dx // 2
            acc = acc + src[oy:oy + tr, ox:ox + wo, :] * wk[dy * 3 + dx]
    y = acc + shift_ref[0]
    if relu:
        y = jnp.maximum(y, 0.0)
    o_ref[0] = y.astype(o_ref.dtype)


def dwconv3x3_s2_bn(x, p, *, relu=False, out_dtype=jnp.bfloat16):
    n, h, w, c = x.shape
    ho, wo = (h + 1) // 2, (w + 1) // 2
    # Pad so every parity phase has exactly (Ho+1, Wo+1) rows/cols of zeros halo.
    hp, wp = 2 * (ho + 1), 2 * (wo + 1)
    xp = jnp.pad(x, ((0, 0), (1, hp - h - 1), (1, wp - w - 1), (0, 0)))
    pee = xp[:, 0::2, 0::2, :]
    peo = xp[:, 0::2, 1::2, :]
    poe = xp[:, 1::2, 0::2, :]
    poo = xp[:, 1::2, 1::2, :]
    tr = _pick_row_tile(ho, max(_ROW_TILE_CAP // 2, 4))
    rt = ho // tr
    kernel = functools.partial(_dwconv3x3_s2_bn_kernel, tr=tr, wo=wo, relu=relu)

    def _phase_spec(a):
        return pl.BlockSpec((1,) + a.shape[1:], lambda i, r: (i, 0, 0, 0))

    out = pl.pallas_call(
        kernel,
        out_shape=jax.ShapeDtypeStruct((n, ho, wo, c), out_dtype),
        grid=(n, rt),
        in_specs=[_phase_spec(pee), _phase_spec(peo), _phase_spec(poe), _phase_spec(poo),
                  pl.BlockSpec((9, c), lambda i, r: (0, 0)),
                  pl.BlockSpec((1, c), lambda i, r: (0, 0))],
        out_specs=pl.BlockSpec((1, tr, wo, c), lambda i, r: (i, r, 0, 0)),
        compiler_params=pltpu.CompilerParams(
            dimension_semantics=("parallel", _row_semantics(n)),
            vmem_limit_bytes=_VMEM_LIMIT),
    )(pee, peo, poe, poo, p["w"], p["shift"])
    return out


# ---------------------------------------------------------------------------
# Deterministic parameter init (inference-mode BN folded; scale folded into W).
# ---------------------------------------------------------------------------
def _fold_bn(key, c):
    kg, kb, km, kv = jax.random.split(key, 4)
    gamma = jax.random.uniform(kg, (c,), minval=0.5, maxval=1.5)
    beta = 0.1 * jax.random.normal(kb, (c,))
    mean = 0.1 * jax.random.normal(km, (c,))
    var = jax.random.uniform(kv, (c,), minval=0.5, maxval=1.5)
    scale = gamma / jnp.sqrt(var + 1e-5)
    shift = beta - mean * scale
    return scale, shift


def _init_convbnact(key, cin, cout, ksize):
    kw, kb = jax.random.split(key)
    fan_in = cin * ksize * ksize
    w = jax.random.normal(kw, (ksize, ksize, cin, cout)) * fan_in ** -0.5
    scale, shift = _fold_bn(kb, cout)
    wf = (w * scale).astype(jnp.bfloat16)          # fold BN scale into weights
    if ksize == 1:
        wf = wf.reshape(cin, cout)
    else:
        # (k, k, cin, cout) -> (k, k*cin, cout): per-dy weight with dx taps fused
        # along K so the conv kernel runs 3 deep-K matmuls.
        wf = wf.reshape(ksize, ksize * cin, cout)
    return {"w": wf, "shift": shift.reshape(1, cout).astype(jnp.float32)}


def _init_dwconvbnact(key, chs, ksize):
    kw, kb = jax.random.split(key)
    w = jax.random.normal(kw, (ksize, ksize, chs)) * (ksize * ksize) ** -0.5
    scale, shift = _fold_bn(kb, chs)
    wf = (w * scale).reshape(ksize * ksize, chs).astype(jnp.float32)  # VPU path: f32
    return {"w": wf, "shift": shift.reshape(1, chs).astype(jnp.float32)}


def init_hg_stage(key, in_chs, mid_chs, out_chs, block_num, layer_num):
    keys = jax.random.split(key, block_num + 1)
    params = {"downsample": _init_dwconvbnact(keys[0], in_chs, 3), "blocks": []}
    for i in range(block_num):
        bkeys = jax.random.split(keys[i + 1], layer_num + 2)
        blk_in = in_chs if i == 0 else out_chs
        layers, c = [], blk_in
        for j in range(layer_num):
            layers.append(_init_convbnact(bkeys[j], c, mid_chs, 3))
            c = mid_chs
        total_chs = blk_in + layer_num * mid_chs
        params["blocks"].append({
            "layers": layers,
            # Full squeeze weight; the kernel concatenates branches in VMEM
            # (or slices the weight per branch) -- no concat tensor in HBM.
            "agg_squeeze": _init_convbnact(bkeys[layer_num], total_chs, out_chs // 2, 1),
            "agg_excite": _init_convbnact(bkeys[layer_num + 1], out_chs // 2, out_chs, 1),
        })
    return params


# ---------------------------------------------------------------------------
# HG_Stage forward (NCHW in / NCHW out).
# ---------------------------------------------------------------------------
def hg_stage_forward(params, x_nchw):
    x = jnp.transpose(x_nchw, (0, 2, 3, 1)).astype(jnp.bfloat16)   # NCHW -> NHWC

    # Downsample: depthwise 3x3 stride-2 + BN (use_act=False), stride-2 in-kernel.
    x = dwconv3x3_s2_bn(x, params["downsample"], relu=False)

    n, h, w, _ = x.shape
    m = n * h * w
    num_blocks = len(params["blocks"])
    for bi, blk in enumerate(params["blocks"]):
        residual = bi != 0                       # HG_Block(residual = i != 0)
        last = bi == num_blocks - 1
        identity2d = x.reshape(m, x.shape[-1])
        outs2d = [identity2d]
        cur = x
        for lyr in blk["layers"]:
            out2d = conv3x3_bn_act(cur, lyr, relu=True)   # ConvBNAct(k=3, s=1) + ReLU
            cur = out2d.reshape(n, h, w, -1)
            outs2d.append(out2d)
        # Aggregation (agg='se'): fused [concat -> 1x1 squeeze], then 1x1 excite
        # with the residual add fused into its epilogue (drop_path=0 -> identity).
        sq = blk["agg_squeeze"]
        y = multi_matmul_bn_act(outs2d, sq["w"], sq["shift"], relu=True)
        ex = blk["agg_excite"]
        y = multi_matmul_bn_act(
            [y], ex["w"], ex["shift"], relu=True,
            residual=identity2d if residual else None,
            out_dtype=jnp.float32 if last else jnp.bfloat16)
        x = y.reshape(n, h, w, -1)
    return jnp.transpose(x, (0, 3, 1, 2)).astype(jnp.float32)      # NHWC -> NCHW


if __name__ == "__main__":
    key = jax.random.PRNGKey(0)
    kx, kp = jax.random.split(key)

    N, C, H, W = 2, 16, 16, 16
    x = jax.random.normal(kx, (N, C, H, W), dtype=jnp.float32)     # NCHW input

    params = init_hg_stage(kp, in_chs=C, mid_chs=16, out_chs=32,
                           block_num=2, layer_num=2)

    fwd = jax.jit(hg_stage_forward)
    y = fwd(params, x)
    y = jax.block_until_ready(y)
    assert y.shape == (N, 32, H // 2, W // 2), y.shape
    assert jnp.all(jnp.isfinite(y))
    print("KERNEL_OK")
</pallas_src>

<mosaic_0001>
module attributes {stable_mosaic.version = 11 : i64} {
  func.func @_dwconv3x3_s2_bn_kernel(%arg0: i32, %arg1: i32, %arg2: memref<1x9x9x16xbf16, #tpu.memory_space<vmem>>, %arg3: memref<1x9x9x16xbf16, #tpu.memory_space<vmem>>, %arg4: memref<1x9x9x16xbf16, #tpu.memory_space<vmem>>, %arg5: memref<1x9x9x16xbf16, #tpu.memory_space<vmem>>, %arg6: memref<9x16xf32, #tpu.memory_space<vmem>>, %arg7: memref<1x16xf32, #tpu.memory_space<vmem>>, %arg8: memref<1x4x8x16xbf16, #tpu.memory_space<vmem>>) attributes {dimension_semantics = [#tpu.dimension_semantics<parallel>, #tpu.dimension_semantics<arbitrary>], iteration_bounds = array<i64: 2, 2>, scalar_prefetch = 0 : i64, scratch_operands = 0 : i64, tpu.core_type = #tpu.core_type<tc>, window_params = [{transform_indices = @transform_0, window_bounds = array<i64: 1, 9, 9, 16>}, {transform_indices = @transform_1, window_bounds = array<i64: 1, 9, 9, 16>}, {transform_indices = @transform_2, window_bounds = array<i64: 1, 9, 9, 16>}, {transform_indices = @transform_3, window_bounds = array<i64: 1, 9, 9, 16>}, {pipeline_mode = #tpu.pipeline_mode<synchronous>, transform_indices = @transform_4, window_bounds = array<i64: 9, 16>}, {pipeline_mode = #tpu.pipeline_mode<synchronous>, transform_indices = @transform_5, window_bounds = array<i64: 1, 16>}, {transform_indices = @transform_6, window_bounds = array<i64: 1, 4, 8, 16>}]} {
    %c4_i32 = arith.constant 4 : i32
    %0 = arith.muli %arg1, %c4_i32 : i32
    %c0 = arith.constant 0 : index
    %c0_0 = arith.constant 0 : index
    %1 = vector.load %arg6[%c0, %c0_0] : memref<9x16xf32, #tpu.memory_space<vmem>>, vector<9x16xf32>
    %c0_1 = arith.constant 0 : index
    %2 = arith.index_cast %0 : i32 to index
    %c0_2 = arith.constant 0 : index
    %c0_3 = arith.constant 0 : index
    %3 = vector.load %arg2[%c0_1, %2, %c0_2, %c0_3] : memref<1x9x9x16xbf16, #tpu.memory_space<vmem>>, vector<1x5x9x16xbf16>
    %4 = vector.shape_cast %3 : vector<1x5x9x16xbf16> to vector<5x9x16xbf16>
    %5 = arith.extf %4 : vector<5x9x16xbf16> to vector<5x9x16xf32>
    %c0_4 = arith.constant 0 : index
    %6 = arith.index_cast %0 : i32 to index
    %c0_5 = arith.constant 0 : index
    %c0_6 = arith.constant 0 : index
    %7 = vector.load %arg3[%c0_4, %6, %c0_5, %c0_6] : memref<1x9x9x16xbf16, #tpu.memory_space<vmem>>, vector<1x5x9x16xbf16>
    %8 = vector.shape_cast %7 : vector<1x5x9x16xbf16> to vector<5x9x16xbf16>
    %9 = arith.extf %8 : vector<5x9x16xbf16> to vector<5x9x16xf32>
    %c0_7 = arith.constant 0 : index
    %10 = arith.index_cast %0 : i32 to index
    %c0_8 = arith.constant 0 : index
    %c0_9 = arith.constant 0 : index
    %11 = vector.load %arg4[%c0_7, %10, %c0_8, %c0_9] : memref<1x9x9x16xbf16, #tpu.memory_space<vmem>>, vector<1x5x9x16xbf16>
    %12 = vector.shape_cast %11 : vector<1x5x9x16xbf16> to vector<5x9x16xbf16>
    %13 = arith.extf %12 : vector<5x9x16xbf16> to vector<5x9x16xf32>
    %c0_10 = arith.constant 0 : index
    %14 = arith.index_cast %0 : i32 to index
    %c0_11 = arith.constant 0 : index
    %c0_12 = arith.constant 0 : index
    %15 = vector.load %arg5[%c0_10, %14, %c0_11, %c0_12] : memref<1x9x9x16xbf16, #tpu.memory_space<vmem>>, vector<1x5x9x16xbf16>
    %16 = vector.shape_cast %15 : vector<1x5x9x16xbf16> to vector<5x9x16xbf16>
    %17 = arith.extf %16 : vector<5x9x16xbf16> to vector<5x9x16xf32>
    %cst = arith.constant 0.000000e+00 : f32
    %18 = vector.broadcast %cst : f32 to vector<4x8x16xf32>
    %19 = vector.extract_strided_slice %5 {offsets = [0, 0, 0], sizes = [4, 8, 16], strides = [1, 1, 1]} : vector<5x9x16xf32> to vector<4x8x16xf32>
    %20 = vector.extract_strided_slice %1 {offsets = [0, 0], sizes = [1, 16], strides = [1, 1]} : vector<9x16xf32> to vector<1x16xf32>
    %21 = vector.shape_cast %20 : vector<1x16xf32> to vector<16xf32>
    %22 = vector.shape_cast %21 : vector<16xf32> to vector<1x1x16xf32>
    %23 = vector.broadcast %22 : vector<1x1x16xf32> to vector<4x8x16xf32>
    %24 = arith.mulf %19, %23 : vector<4x8x16xf32>
    %25 = arith.addf %18, %24 : vector<4x8x16xf32>
    %26 = vector.extract_strided_slice %9 {offsets = [0, 0, 0], sizes = [4, 8, 16], strides = [1, 1, 1]} : vector<5x9x16xf32> to vector<4x8x16xf32>
    %27 = vector.extract_strided_slice %1 {offsets = [1, 0], sizes = [1, 16], strides = [1, 1]} : vector<9x16xf32> to vector<1x16xf32>
    %28 = vector.shape_cast %27 : vector<1x16xf32> to vector<16xf32>
    %29 = vector.shape_cast %28 : vector<16xf32> to vector<1x1x16xf32>
    %30 = vector.broadcast %29 : vector<1x1x16xf32> to vector<4x8x16xf32>
    %31 = arith.mulf %26, %30 : vector<4x8x16xf32>
    %32 = arith.addf %25, %31 : vector<4x8x16xf32>
    %33 = vector.extract_strided_slice %5 {offsets = [0, 1, 0], sizes = [4, 8, 16], strides = [1, 1, 1]} : vector<5x9x16xf32> to vector<4x8x16xf32>
    %34 = vector.extract_strided_slice %1 {offsets = [2, 0], sizes = [1, 16], strides = [1, 1]} : vector<9x16xf32> to vector<1x16xf32>
    %35 = vector.shape_cast %34 : vector<1x16xf32> to vector<16xf32>
    %36 = vector.shape_cast %35 : vector<16xf32> to vector<1x1x16xf32>
    %37 = vector.broadcast %36 : vector<1x1x16xf32> to vector<4x8x16xf32>
    %38 = arith.mulf %33, %37 : vector<4x8x16xf32>
    %39 = arith.addf %32, %38 : vector<4x8x16xf32>
    %40 = vector.extract_strided_slice %13 {offsets = [0, 0, 0], sizes = [4, 8, 16], strides = [1, 1, 1]} : vector<5x9x16xf32> to vector<4x8x16xf32>
    %41 = vector.extract_strided_slice %1 {offsets = [3, 0], sizes = [1, 16], strides = [1, 1]} : vector<9x16xf32> to vector<1x16xf32>
    %42 = vector.shape_cast %41 : vector<1x16xf32> to vector<16xf32>
    %43 = vector.shape_cast %42 : vector<16xf32> to vector<1x1x16xf32>
    %44 = vector.broadcast %43 : vector<1x1x16xf32> to vector<4x8x16xf32>
    %45 = arith.mulf %40, %44 : vector<4x8x16xf32>
    %46 = arith.addf %39, %45 : vector<4x8x16xf32>
    %47 = vector.extract_strided_slice %17 {offsets = [0, 0, 0], sizes = [4, 8, 16], strides = [1, 1, 1]} : vector<5x9x16xf32> to vector<4x8x16xf32>
    %48 = vector.extract_strided_slice %1 {offsets = [4, 0], sizes = [1, 16], strides = [1, 1]} : vector<9x16xf32> to vector<1x16xf32>
    %49 = vector.shape_cast %48 : vector<1x16xf32> to vector<16xf32>
    %50 = vector.shape_cast %49 : vector<16xf32> to vector<1x1x16xf32>
    %51 = vector.broadcast %50 : vector<1x1x16xf32> to vector<4x8x16xf32>
    %52 = arith.mulf %47, %51 : vector<4x8x16xf32>
    %53 = arith.addf %46, %52 : vector<4x8x16xf32>
    %54 = vector.extract_strided_slice %13 {offsets = [0, 1, 0], sizes = [4, 8, 16], strides = [1, 1, 1]} : vector<5x9x16xf32> to vector<4x8x16xf32>
    %55 = vector.extract_strided_slice %1 {offsets = [5, 0], sizes = [1, 16], strides = [1, 1]} : vector<9x16xf32> to vector<1x16xf32>
    %56 = vector.shape_cast %55 : vector<1x16xf32> to vector<16xf32>
    %57 = vector.shape_cast %56 : vector<16xf32> to vector<1x1x16xf32>
    %58 = vector.broadcast %57 : vector<1x1x16xf32> to vector<4x8x16xf32>
    %59 = arith.mulf %54, %58 : vector<4x8x16xf32>
    %60 = arith.addf %53, %59 : vector<4x8x16xf32>
    %61 = vector.extract_strided_slice %5 {offsets = [1, 0, 0], sizes = [4, 8, 16], strides = [1, 1, 1]} : vector<5x9x16xf32> to vector<4x8x16xf32>
    %62 = vector.extract_strided_slice %1 {offsets = [6, 0], sizes = [1, 16], strides = [1, 1]} : vector<9x16xf32> to vector<1x16xf32>
    %63 = vector.shape_cast %62 : vector<1x16xf32> to vector<16xf32>
    %64 = vector.shape_cast %63 : vector<16xf32> to vector<1x1x16xf32>
    %65 = vector.broadcast %64 : vector<1x1x16xf32> to vector<4x8x16xf32>
    %66 = arith.mulf %61, %65 : vector<4x8x16xf32>
    %67 = arith.addf %60, %66 : vector<4x8x16xf32>
    %68 = vector.extract_strided_slice %9 {offsets = [1, 0, 0], sizes = [4, 8, 16], strides = [1, 1, 1]} : vector<5x9x16xf32> to vector<4x8x16xf32>
    %69 = vector.extract_strided_slice %1 {offsets = [7, 0], sizes = [1, 16], strides = [1, 1]} : vector<9x16xf32> to vector<1x16xf32>
    %70 = vector.shape_cast %69 : vector<1x16xf32> to vector<16xf32>
    %71 = vector.shape_cast %70 : vector<16xf32> to vector<1x1x16xf32>
    %72 = vector.broadcast %71 : vector<1x1x16xf32> to vector<4x8x16xf32>
    %73 = arith.mulf %68, %72 : vector<4x8x16xf32>
    %74 = arith.addf %67, %73 : vector<4x8x16xf32>
    %75 = vector.extract_strided_slice %5 {offsets = [1, 1, 0], sizes = [4, 8, 16], strides = [1, 1, 1]} : vector<5x9x16xf32> to vector<4x8x16xf32>
    %76 = vector.extract_strided_slice %1 {offsets = [8, 0], sizes = [1, 16], strides = [1, 1]} : vector<9x16xf32> to vector<1x16xf32>
    %77 = vector.shape_cast %76 : vector<1x16xf32> to vector<16xf32>
    %78 = vector.shape_cast %77 : vector<16xf32> to vector<1x1x16xf32>
    %79 = vector.broadcast %78 : vector<1x1x16xf32> to vector<4x8x16xf32>
    %80 = arith.mulf %75, %79 : vector<4x8x16xf32>
    %81 = arith.addf %74, %80 : vector<4x8x16xf32>
    %c0_13 = arith.constant 0 : index
    %c0_14 = arith.constant 0 : index
    %82 = vector.load %arg7[%c0_13, %c0_14] : memref<1x16xf32, #tpu.memory_space<vmem>>, vector<1x16xf32>
    %83 = vector.shape_cast %82 : vector<1x16xf32> to vector<16xf32>
    %84 = vector.shape_cast %83 : vector<16xf32> to vector<1x1x16xf32>
    %85 = vector.broadcast %84 : vector<1x1x16xf32> to vector<4x8x16xf32>
    %86 = arith.addf %81, %85 : vector<4x8x16xf32>
    %87 = arith.truncf %86 : vector<4x8x16xf32> to vector<4x8x16xbf16>
    %c0_15 = arith.constant 0 : index
    %c0_16 = arith.constant 0 : index
    %c0_17 = arith.constant 0 : index
    %c0_18 = arith.constant 0 : index
    %88 = vector.load %arg8[%c0_15, %c0_16, %c0_17, %c0_18] : memref<1x4x8x16xbf16, #tpu.memory_space<vmem>>, vector<1x4x8x16xbf16>
    %89 = vector.shape_cast %88 : vector<1x4x8x16xbf16> to vector<4x8x16xbf16>
    %90 = vector.shape_cast %87 : vector<4x8x16xbf16> to vector<1x4x8x16xbf16>
    tpu.vector_store %arg8[%c0_15, %c0_16, %c0_17, %c0_18], %90 {strides = array<i32>} : memref<1x4x8x16xbf16, #tpu.memory_space<vmem>>, vector<1x4x8x16xbf16>,
    return
  }
  func.func @transform_0(%arg0: i32, %arg1: i32) -> (i32, i32, i32, i32) {
    %c0_i32 = arith.constant 0 : i32
    %c0_i32_0 = arith.constant 0 : i32
    %c0_i32_1 = arith.constant 0 : i32
    %c0_i32_2 = arith.constant 0 : i32
    return %arg0, %c0_i32, %c0_i32_0, %c0_i32_1 : i32, i32, i32, i32
  }
  func.func @transform_1(%arg0: i32, %arg1: i32) -> (i32, i32, i32, i32) {
    %c0_i32 = arith.constant 0 : i32
    %c0_i32_0 = arith.constant 0 : i32
    %c0_i32_1 = arith.constant 0 : i32
    %c0_i32_2 = arith.constant 0 : i32
    return %arg0, %c0_i32, %c0_i32_0, %c0_i32_1 : i32, i32, i32, i32
  }
  func.func @transform_2(%arg0: i32, %arg1: i32) -> (i32, i32, i32, i32) {
    %c0_i32 = arith.constant 0 : i32
    %c0_i32_0 = arith.constant 0 : i32
    %c0_i32_1 = arith.constant 0 : i32
    %c0_i32_2 = arith.constant 0 : i32
    return %arg0, %c0_i32, %c0_i32_0, %c0_i32_1 : i32, i32, i32, i32
  }
  func.func @transform_3(%arg0: i32, %arg1: i32) -> (i32, i32, i32, i32) {
    %c0_i32 = arith.constant 0 : i32
    %c0_i32_0 = arith.constant 0 : i32
    %c0_i32_1 = arith.constant 0 : i32
    %c0_i32_2 = arith.constant 0 : i32
    return %arg0, %c0_i32, %c0_i32_0, %c0_i32_1 : i32, i32, i32, i32
  }
  func.func @transform_4(%arg0: i32, %arg1: i32) -> (i32, i32) {
    %c0_i32 = arith.constant 0 : i32
    %c0_i32_0 = arith.constant 0 : i32
    %c0_i32_1 = arith.constant 0 : i32
    return %c0_i32, %c0_i32_0 : i32, i32
  }
  func.func @transform_5(%arg0: i32, %arg1: i32) -> (i32, i32) {
    %c0_i32 = arith.constant 0 : i32
    %c0_i32_0 = arith.constant 0 : i32
    %c0_i32_1 = arith.constant 0 : i32
    return %c0_i32, %c0_i32_0 : i32, i32
  }
  func.func @transform_6(%arg0: i32, %arg1: i32) -> (i32, i32, i32, i32) {
    %c0_i32 = arith.constant 0 : i32
    %c0_i32_0 = arith.constant 0 : i32
    %c0_i32_1 = arith.constant 0 : i32
    return %arg0, %arg1, %c0_i32, %c0_i32_0 : i32, i32, i32, i32
  }
}

module attributes {stable_mosaic.version = 11 : i64} {
  func.func @_conv3x3_bn_act_kernel(%arg0: i32, %arg1: i32, %arg2: i32, %arg3: memref<1x10x10x16xbf16, #tpu.memory_space<vmem>>, %arg4: memref<3x48x16xbf16, #tpu.memory_space<vmem>>, %arg5: memref<1x16xf32, #tpu.memory_space<vmem>>, %arg6: memref<32x16xbf16, #tpu.memory_space<vmem>>) attributes {dimension_semantics = [#tpu.dimension_semantics<parallel>, #tpu.dimension_semantics<arbitrary>, #tpu.dimension_semantics<arbitrary>], iteration_bounds = array<i64: 2, 2, 1>, scalar_prefetch = 0 : i64, scratch_operands = 0 : i64, tpu.core_type = #tpu.core_type<tc>, window_params = [{transform_indices = @transform_0, window_bounds = array<i64: 1, 10, 10, 16>}, {transform_indices = @transform_1, window_bounds = array<i64: 3, 48, 16>}, {transform_indices = @transform_2, window_bounds = array<i64: 1, 16>}, {transform_indices = @transform_3, window_bounds = array<i64: 32, 16>}]} {
    %c4_i32 = arith.constant 4 : i32
    %0 = arith.muli %arg1, %c4_i32 : i32
    %cst = arith.constant 0.000000e+00 : f32
    %1 = vector.broadcast %cst : f32 to vector<32x16xf32>
    %c0_i32 = arith.constant 0 : i32
    %2 = arith.addi %0, %c0_i32 : i32
    %c0 = arith.constant 0 : index
    %3 = arith.index_cast %2 : i32 to index
    %c0_0 = arith.constant 0 : index
    %c0_1 = arith.constant 0 : index
    %4 = vector.load %arg3[%c0, %3, %c0_0, %c0_1] : memref<1x10x10x16xbf16, #tpu.memory_space<vmem>>, vector<1x4x10x16xbf16>
    %5 = vector.shape_cast %4 : vector<1x4x10x16xbf16> to vector<4x10x16xbf16>
    %6 = vector.extract_strided_slice %5 {offsets = [0, 0, 0], sizes = [4, 8, 16], strides = [1, 1, 1]} : vector<4x10x16xbf16> to vector<4x8x16xbf16>
    %7 = vector.extract_strided_slice %5 {offsets = [0, 1, 0], sizes = [4, 8, 16], strides = [1, 1, 1]} : vector<4x10x16xbf16> to vector<4x8x16xbf16>
    %8 = vector.extract_strided_slice %5 {offsets = [0, 2, 0], sizes = [4, 8, 16], strides = [1, 1, 1]} : vector<4x10x16xbf16> to vector<4x8x16xbf16>
    %9 = tpu.concatenate %6, %7, %8 in 2 : vector<4x8x16xbf16>, vector<4x8x16xbf16>, vector<4x8x16xbf16> -> vector<4x8x48xbf16>
    %10 = vector.shape_cast %9 : vector<4x8x48xbf16> to vector<32x48xbf16>
    %c0_2 = arith.constant 0 : index
    %c0_3 = arith.constant 0 : index
    %c0_4 = arith.constant 0 : index
    %11 = vector.load %arg4[%c0_2, %c0_3, %c0_4] : memref<3x48x16xbf16, #tpu.memory_space<vmem>>, vector<1x48x16xbf16>
    %12 = vector.shape_cast %11 : vector<1x48x16xbf16> to vector<48x16xbf16>
    %cst_5 = arith.constant dense<0.000000e+00> : vector<32x16xf32>
    %13 = tpu.matmul %10, %12, %cst_5 {dimension_numbers = #tpu.dot_dimension_numbers<[1], [0], [0], [1], [0, 0, 1, 1], [], []>} : vector<32x48xbf16>, vector<48x16xbf16>, vector<32x16xf32> -> vector<32x16xf32>
    %14 = arith.addf %1, %13 : vector<32x16xf32>
    %c1_i32 = arith.constant 1 : i32
    %15 = arith.addi %0, %c1_i32 : i32
    %c0_6 = arith.constant 0 : index
    %16 = arith.index_cast %15 : i32 to index
    %c0_7 = arith.constant 0 : index
    %c0_8 = arith.constant 0 : index
    %17 = vector.load %arg3[%c0_6, %16, %c0_7, %c0_8] : memref<1x10x10x16xbf16, #tpu.memory_space<vmem>>, vector<1x4x10x16xbf16>
    %18 = vector.shape_cast %17 : vector<1x4x10x16xbf16> to vector<4x10x16xbf16>
    %19 = vector.extract_strided_slice %18 {offsets = [0, 0, 0], sizes = [4, 8, 16], strides = [1, 1, 1]} : vector<4x10x16xbf16> to vector<4x8x16xbf16>
    %20 = vector.extract_strided_slice %18 {offsets = [0, 1, 0], sizes = [4, 8, 16], strides = [1, 1, 1]} : vector<4x10x16xbf16> to vector<4x8x16xbf16>
    %21 = vector.extract_strided_slice %18 {offsets = [0, 2, 0], sizes = [4, 8, 16], strides = [1, 1, 1]} : vector<4x10x16xbf16> to vector<4x8x16xbf16>
    %22 = tpu.concatenate %19, %20, %21 in 2 : vector<4x8x16xbf16>, vector<4x8x16xbf16>, vector<4x8x16xbf16> -> vector<4x8x48xbf16>
    %23 = vector.shape_cast %22 : vector<4x8x48xbf16> to vector<32x48xbf16>
    %c1 = arith.constant 1 : index
    %c0_9 = arith.constant 0 : index
    %c0_10 = arith.constant 0 : index
    %24 = vector.load %arg4[%c1, %c0_9, %c0_10] : memref<3x48x16xbf16, #tpu.memory_space<vmem>>, vector<1x48x16xbf16>
    %25 = vector.shape_cast %24 : vector<1x48x16xbf16> to vector<48x16xbf16>
    %cst_11 = arith.constant dense<0.000000e+00> : vector<32x16xf32>
    %26 = tpu.matmul %23, %25, %cst_11 {dimension_numbers = #tpu.dot_dimension_numbers<[1], [0], [0], [1], [0, 0, 1, 1], [], []>} : vector<32x48xbf16>, vector<48x16xbf16>, vector<32x16xf32> -> vector<32x16xf32>
    %27 = arith.addf %14, %26 : vector<32x16xf32>
    %c2_i32 = arith.constant 2 : i32
    %28 = arith.addi %0, %c2_i32 : i32
    %c0_12 = arith.constant 0 : index
    %29 = arith.index_cast %28 : i32 to index
    %c0_13 = arith.constant 0 : index
    %c0_14 = arith.constant 0 : index
    %30 = vector.load %arg3[%c0_12, %29, %c0_13, %c0_14] : memref<1x10x10x16xbf16, #tpu.memory_space<vmem>>, vector<1x4x10x16xbf16>
    %31 = vector.shape_cast %30 : vector<1x4x10x16xbf16> to vector<4x10x16xbf16>
    %32 = vector.extract_strided_slice %31 {offsets = [0, 0, 0], sizes = [4, 8, 16], strides = [1, 1, 1]} : vector<4x10x16xbf16> to vector<4x8x16xbf16>
    %33 = vector.extract_strided_slice %31 {offsets = [0, 1, 0], sizes = [4, 8, 16], strides = [1, 1, 1]} : vector<4x10x16xbf16> to vector<4x8x16xbf16>
    %34 = vector.extract_strided_slice %31 {offsets = [0, 2, 0], sizes = [4, 8, 16], strides = [1, 1, 1]} : vector<4x10x16xbf16> to vector<4x8x16xbf16>
    %35 = tpu.concatenate %32, %33, %34 in 2 : vector<4x8x16xbf16>, vector<4x8x16xbf16>, vector<4x8x16xbf16> -> vector<4x8x48xbf16>
    %36 = vector.shape_cast %35 : vector<4x8x48xbf16> to vector<32x48xbf16>
    %c2 = arith.constant 2 : index
    %c0_15 = arith.constant 0 : index
    %c0_16 = arith.constant 0 : index
    %37 = vector.load %arg4[%c2, %c0_15, %c0_16] : memref<3x48x16xbf16, #tpu.memory_space<vmem>>, vector<1x48x16xbf16>
    %38 = vector.shape_cast %37 : vector<1x48x16xbf16> to vector<48x16xbf16>
    %cst_17 = arith.constant dense<0.000000e+00> : vector<32x16xf32>
    %39 = tpu.matmul %36, %38, %cst_17 {dimension_numbers = #tpu.dot_dimension_numbers<[1], [0], [0], [1], [0, 0, 1, 1], [], []>} : vector<32x48xbf16>, vector<48x16xbf16>, vector<32x16xf32> -> vector<32x16xf32>
    %40 = arith.addf %27, %39 : vector<32x16xf32>
    %c0_18 = arith.constant 0 : index
    %c0_19 = arith.constant 0 : index
    %41 = vector.load %arg5[%c0_18, %c0_19] : memref<1x16xf32, #tpu.memory_space<vmem>>, vector<1x16xf32>
    %42 = vector.broadcast %41 : vector<1x16xf32> to vector<32x16xf32>
    %43 = arith.addf %40, %42 : vector<32x16xf32>
    %cst_20 = arith.constant 0.000000e+00 : f32
    %44 = vector.broadcast %cst_20 : f32 to vector<32x16xf32>
    %45 = arith.maximumf %43, %44 : vector<32x16xf32>
    %46 = arith.truncf %45 : vector<32x16xf32> to vector<32x16xbf16>
    %c0_21 = arith.constant 0 : index
    %c0_22 = arith.constant 0 : index
    %47 = vector.load %arg6[%c0_21, %c0_22] : memref<32x16xbf16, #tpu.memory_space<vmem>>, vector<32x16xbf16>
    tpu.vector_store %arg6[%c0_21, %c0_22], %46 {strides = array<i32>} : memref<32x16xbf16, #tpu.memory_space<vmem>>, vector<32x16xbf16>,
    return
  }
  func.func @transform_0(%arg0: i32, %arg1: i32, %arg2: i32) -> (i32, i32, i32, i32) {
    %c0_i32 = arith.constant 0 : i32
    %c0_i32_0 = arith.constant 0 : i32
    %c0_i32_1 = arith.constant 0 : i32
    %c0_i32_2 = arith.constant 0 : i32
    return %arg0, %c0_i32, %c0_i32_0, %c0_i32_1 : i32, i32, i32, i32
  }
  func.func @transform_1(%arg0: i32, %arg1: i32, %arg2: i32) -> (i32, i32, i32) {
    %c0_i32 = arith.constant 0 : i32
    %c0_i32_0 = arith.constant 0 : i32
    %c0_i32_1 = arith.constant 0 : i32
    return %c0_i32, %c0_i32_0, %arg2 : i32, i32, i32
  }
  func.func @transform_2(%arg0: i32, %arg1: i32, %arg2: i32) -> (i32, i32) {
    %c0_i32 = arith.constant 0 : i32
    %c0_i32_0 = arith.constant 0 : i32
    return %c0_i32, %arg2 : i32, i32
  }
  func.func @transform_3(%arg0: i32, %arg1: i32, %arg2: i32) -> (i32, i32) {
    %c2_i32 = arith.constant 2 : i32
    %0 = arith.muli %arg0, %c2_i32 : i32
    %1 = arith.addi %0, %arg1 : i32
    %c0_i32 = arith.constant 0 : i32
    return %1, %arg2 : i32, i32
  }
}

module attributes {stable_mosaic.version = 11 : i64} {
  func.func @_multi_matmul_bn_act_kernel(%arg0: i32, %arg1: i32, %arg2: memref<64x16xbf16, #tpu.memory_space<vmem>>, %arg3: memref<16x32xbf16, #tpu.memory_space<vmem>>, %arg4: memref<1x32xf32, #tpu.memory_space<vmem>>, %arg5: memref<64x32xbf16, #tpu.memory_space<vmem>>) attributes {dimension_semantics = [#tpu.dimension_semantics<parallel>, #tpu.dimension_semantics<arbitrary>], iteration_bounds = array<i64: 2, 1>, scalar_prefetch = 0 : i64, scratch_operands = 0 : i64, tpu.core_type = #tpu.core_type<tc>, window_params = [{transform_indices = @transform_0, window_bounds = array<i64: 64, 16>}, {transform_indices = @transform_1, window_bounds = array<i64: 16, 32>}, {transform_indices = @transform_2, window_bounds = array<i64: 1, 32>}, {transform_indices = @transform_3, window_bounds = array<i64: 64, 32>}]} {
    %cst = arith.constant 0.000000e+00 : f32
    %0 = vector.broadcast %cst : f32 to vector<64x32xf32>
    %c0 = arith.constant 0 : index
    %c0_0 = arith.constant 0 : index
    %1 = vector.load %arg2[%c0, %c0_0] : memref<64x16xbf16, #tpu.memory_space<vmem>>, vector<64x16xbf16>
    %c0_1 = arith.constant 0 : index
    %c0_2 = arith.constant 0 : index
    %2 = vector.load %arg3[%c0_1, %c0_2] : memref<16x32xbf16, #tpu.memory_space<vmem>>, vector<16x32xbf16>
    %cst_3 = arith.constant dense<0.000000e+00> : vector<64x32xf32>
    %3 = tpu.matmul %1, %2, %cst_3 {dimension_numbers = #tpu.dot_dimension_numbers<[1], [0], [0], [1], [0, 0, 1, 1], [], []>} : vector<64x16xbf16>, vector<16x32xbf16>, vector<64x32xf32> -> vector<64x32xf32>
    %4 = arith.addf %0, %3 : vector<64x32xf32>
    %c0_4 = arith.constant 0 : index
    %c0_5 = arith.constant 0 : index
    %5 = vector.load %arg4[%c0_4, %c0_5] : memref<1x32xf32, #tpu.memory_space<vmem>>, vector<1x32xf32>
    %6 = vector.broadcast %5 : vector<1x32xf32> to vector<64x32xf32>
    %7 = arith.addf %4, %6 : vector<64x32xf32>
    %cst_6 = arith.constant 0.000000e+00 : f32
    %8 = vector.broadcast %cst_6 : f32 to vector<64x32xf32>
    %9 = arith.maximumf %7, %8 : vector<64x32xf32>
    %10 = arith.truncf %9 : vector<64x32xf32> to vector<64x32xbf16>
    %c0_7 = arith.constant 0 : index
    %c0_8 = arith.constant 0 : index
    %11 = vector.load %arg5[%c0_7, %c0_8] : memref<64x32xbf16, #tpu.memory_space<vmem>>, vector<64x32xbf16>
    tpu.vector_store %arg5[%c0_7, %c0_8], %10 {strides = array<i32>} : memref<64x32xbf16, #tpu.memory_space<vmem>>, vector<64x32xbf16>,
    return
  }
  func.func @transform_0(%arg0: i32, %arg1: i32) -> (i32, i32) {
    %c0_i32 = arith.constant 0 : i32
    %c0_i32_0 = arith.constant 0 : i32
    return %arg0, %c0_i32 : i32, i32
  }
  func.func @transform_1(%arg0: i32, %arg1: i32) -> (i32, i32) {
    %c0_i32 = arith.constant 0 : i32
    %c0_i32_0 = arith.constant 0 : i32
    return %c0_i32, %arg1 : i32, i32
  }
  func.func @transform_2(%arg0: i32, %arg1: i32) -> (i32, i32) {
    %c0_i32 = arith.constant 0 : i32
    %c0_i32_0 = arith.constant 0 : i32
    return %c0_i32, %arg1 : i32, i32
  }
  func.func @transform_3(%arg0: i32, %arg1: i32) -> (i32, i32) {
    %c0_i32 = arith.constant 0 : i32
    return %arg0, %arg1 : i32, i32
  }
}

module attributes {stable_mosaic.version = 11 : i64} {
  func.func @_multi_matmul_bn_act_kernel(%arg0: i32, %arg1: i32, %arg2: memref<64x16xbf16, #tpu.memory_space<vmem>>, %arg3: memref<64x16xbf16, #tpu.memory_space<vmem>>, %arg4: memref<64x16xbf16, #tpu.memory_space<vmem>>, %arg5: memref<48x16xbf16, #tpu.memory_space<vmem>>, %arg6: memref<1x16xf32, #tpu.memory_space<vmem>>, %arg7: memref<64x16xbf16, #tpu.memory_space<vmem>>) attributes {dimension_semantics = [#tpu.dimension_semantics<parallel>, #tpu.dimension_semantics<arbitrary>], iteration_bounds = array<i64: 2, 1>, scalar_prefetch = 0 : i64, scratch_operands = 0 : i64, tpu.core_type = #tpu.core_type<tc>, window_params = [{transform_indices = @transform_0, window_bounds = array<i64: 64, 16>}, {transform_indices = @transform_1, window_bounds = array<i64: 64, 16>}, {transform_indices = @transform_2, window_bounds = array<i64: 64, 16>}, {transform_indices = @transform_3, window_bounds = array<i64: 48, 16>}, {transform_indices = @transform_4, window_bounds = array<i64: 1, 16>}, {transform_indices = @transform_5, window_bounds = array<i64: 64, 16>}]} {
    %c0 = arith.constant 0 : index
    %c0_0 = arith.constant 0 : index
    %0 = vector.load %arg2[%c0, %c0_0] : memref<64x16xbf16, #tpu.memory_space<vmem>>, vector<64x16xbf16>
    %c0_1 = arith.constant 0 : index
    %c0_2 = arith.constant 0 : index
    %1 = vector.load %arg3[%c0_1, %c0_2] : memref<64x16xbf16, #tpu.memory_space<vmem>>, vector<64x16xbf16>
    %c0_3 = arith.constant 0 : index
    %c0_4 = arith.constant 0 : index
    %2 = vector.load %arg4[%c0_3, %c0_4] : memref<64x16xbf16, #tpu.memory_space<vmem>>, vector<64x16xbf16>
    %3 = tpu.concatenate %0, %1, %2 in 1 : vector<64x16xbf16>, vector<64x16xbf16>, vector<64x16xbf16> -> vector<64x48xbf16>
    %c0_5 = arith.constant 0 : index
    %c0_6 = arith.constant 0 : index
    %4 = vector.load %arg5[%c0_5, %c0_6] : memref<48x16xbf16, #tpu.memory_space<vmem>>, vector<48x16xbf16>
    %cst = arith.constant dense<0.000000e+00> : vector<64x16xf32>
    %5 = tpu.matmul %3, %4, %cst {dimension_numbers = #tpu.dot_dimension_numbers<[1], [0], [0], [1], [0, 0, 1, 1], [], []>} : vector<64x48xbf16>, vector<48x16xbf16>, vector<64x16xf32> -> vector<64x16xf32>
    %c0_7 = arith.constant 0 : index
    %c0_8 = arith.constant 0 : index
    %6 = vector.load %arg6[%c0_7, %c0_8] : memref<1x16xf32, #tpu.memory_space<vmem>>, vector<1x16xf32>
    %7 = vector.broadcast %6 : vector<1x16xf32> to vector<64x16xf32>
    %8 = arith.addf %5, %7 : vector<64x16xf32>
    %cst_9 = arith.constant 0.000000e+00 : f32
    %9 = vector.broadcast %cst_9 : f32 to vector<64x16xf32>
    %10 = arith.maximumf %8, %9 : vector<64x16xf32>
    %11 = arith.truncf %10 : vector<64x16xf32> to vector<64x16xbf16>
    %c0_10 = arith.constant 0 : index
    %c0_11 = arith.constant 0 : index
    %12 = vector.load %arg7[%c0_10, %c0_11] : memref<64x16xbf16, #tpu.memory_space<vmem>>, vector<64x16xbf16>
    tpu.vector_store %arg7[%c0_10, %c0_11], %11 {strides = array<i32>} : memref<64x16xbf16, #tpu.memory_space<vmem>>, vector<64x16xbf16>,
    return
  }
  func.func @transform_0(%arg0: i32, %arg1: i32) -> (i32, i32) {
    %c0_i32 = arith.constant 0 : i32
    %c0_i32_0 = arith.constant 0 : i32
    return %arg0, %c0_i32 : i32, i32
  }
  func.func @transform_1(%arg0: i32, %arg1: i32) -> (i32, i32) {
    %c0_i32 = arith.constant 0 : i32
    %c0_i32_0 = arith.constant 0 : i32
    return %arg0, %c0_i32 : i32, i32
  }
  func.func @transform_2(%arg0: i32, %arg1: i32) -> (i32, i32) {
    %c0_i32 = arith.constant 0 : i32
    %c0_i32_0 = arith.constant 0 : i32
    return %arg0, %c0_i32 : i32, i32
  }
  func.func @transform_3(%arg0: i32, %arg1: i32) -> (i32, i32) {
    %c0_i32 = arith.constant 0 : i32
    %c0_i32_0 = arith.constant 0 : i32
    return %c0_i32, %arg1 : i32, i32
  }
  func.func @transform_4(%arg0: i32, %arg1: i32) -> (i32, i32) {
    %c0_i32 = arith.constant 0 : i32
    %c0_i32_0 = arith.constant 0 : i32
    return %c0_i32, %arg1 : i32, i32
  }
  func.func @transform_5(%arg0: i32, %arg1: i32) -> (i32, i32) {
    %c0_i32 = arith.constant 0 : i32
    return %arg0, %arg1 : i32, i32
  }
}

module attributes {stable_mosaic.version = 11 : i64} {
  func.func @_conv3x3_bn_act_kernel(%arg0: i32, %arg1: i32, %arg2: i32, %arg3: memref<1x10x10x32xbf16, #tpu.memory_space<vmem>>, %arg4: memref<3x96x16xbf16, #tpu.memory_space<vmem>>, %arg5: memref<1x16xf32, #tpu.memory_space<vmem>>, %arg6: memref<32x16xbf16, #tpu.memory_space<vmem>>) attributes {dimension_semantics = [#tpu.dimension_semantics<parallel>, #tpu.dimension_semantics<arbitrary>, #tpu.dimension_semantics<arbitrary>], iteration_bounds = array<i64: 2, 2, 1>, scalar_prefetch = 0 : i64, scratch_operands = 0 : i64, tpu.core_type = #tpu.core_type<tc>, window_params = [{transform_indices = @transform_0, window_bounds = array<i64: 1, 10, 10, 32>}, {transform_indices = @transform_1, window_bounds = array<i64: 3, 96, 16>}, {transform_indices = @transform_2, window_bounds = array<i64: 1, 16>}, {transform_indices = @transform_3, window_bounds = array<i64: 32, 16>}]} {
    %c4_i32 = arith.constant 4 : i32
    %0 = arith.muli %arg1, %c4_i32 : i32
    %cst = arith.constant 0.000000e+00 : f32
    %1 = vector.broadcast %cst : f32 to vector<32x16xf32>
    %c0_i32 = arith.constant 0 : i32
    %2 = arith.addi %0, %c0_i32 : i32
    %c0 = arith.constant 0 : index
    %3 = arith.index_cast %2 : i32 to index
    %c0_0 = arith.constant 0 : index
    %c0_1 = arith.constant 0 : index
    %4 = vector.load %arg3[%c0, %3, %c0_0, %c0_1] : memref<1x10x10x32xbf16, #tpu.memory_space<vmem>>, vector<1x4x10x32xbf16>
    %5 = vector.shape_cast %4 : vector<1x4x10x32xbf16> to vector<4x10x32xbf16>
    %6 = vector.extract_strided_slice %5 {offsets = [0, 0, 0], sizes = [4, 8, 32], strides = [1, 1, 1]} : vector<4x10x32xbf16> to vector<4x8x32xbf16>
    %7 = vector.extract_strided_slice %5 {offsets = [0, 1, 0], sizes = [4, 8, 32], strides = [1, 1, 1]} : vector<4x10x32xbf16> to vector<4x8x32xbf16>
    %8 = vector.extract_strided_slice %5 {offsets = [0, 2, 0], sizes = [4, 8, 32], strides = [1, 1, 1]} : vector<4x10x32xbf16> to vector<4x8x32xbf16>
    %9 = tpu.concatenate %6, %7, %8 in 2 : vector<4x8x32xbf16>, vector<4x8x32xbf16>, vector<4x8x32xbf16> -> vector<4x8x96xbf16>
    %10 = vector.shape_cast %9 : vector<4x8x96xbf16> to vector<32x96xbf16>
    %c0_2 = arith.constant 0 : index
    %c0_3 = arith.constant 0 : index
    %c0_4 = arith.constant 0 : index
    %11 = vector.load %arg4[%c0_2, %c0_3, %c0_4] : memref<3x96x16xbf16, #tpu.memory_space<vmem>>, vector<1x96x16xbf16>
    %12 = vector.shape_cast %11 : vector<1x96x16xbf16> to vector<96x16xbf16>
    %cst_5 = arith.constant dense<0.000000e+00> : vector<32x16xf32>
    %13 = tpu.matmul %10, %12, %cst_5 {dimension_numbers = #tpu.dot_dimension_numbers<[1], [0], [0], [1], [0, 0, 1, 1], [], []>} : vector<32x96xbf16>, vector<96x16xbf16>, vector<32x16xf32> -> vector<32x16xf32>
    %14 = arith.addf %1, %13 : vector<32x16xf32>
    %c1_i32 = arith.constant 1 : i32
    %15 = arith.addi %0, %c1_i32 : i32
    %c0_6 = arith.constant 0 : index
    %16 = arith.index_cast %15 : i32 to index
    %c0_7 = arith.constant 0 : index
    %c0_8 = arith.constant 0 : index
    %17 = vector.load %arg3[%c0_6, %16, %c0_7, %c0_8] : memref<1x10x10x32xbf16, #tpu.memory_space<vmem>>, vector<1x4x10x32xbf16>
    %18 = vector.shape_cast %17 : vector<1x4x10x32xbf16> to vector<4x10x32xbf16>
    %19 = vector.extract_strided_slice %18 {offsets = [0, 0, 0], sizes = [4, 8, 32], strides = [1, 1, 1]} : vector<4x10x32xbf16> to vector<4x8x32xbf16>
    %20 = vector.extract_strided_slice %18 {offsets = [0, 1, 0], sizes = [4, 8, 32], strides = [1, 1, 1]} : vector<4x10x32xbf16> to vector<4x8x32xbf16>
    %21 = vector.extract_strided_slice %18 {offsets = [0, 2, 0], sizes = [4, 8, 32], strides = [1, 1, 1]} : vector<4x10x32xbf16> to vector<4x8x32xbf16>
    %22 = tpu.concatenate %19, %20, %21 in 2 : vector<4x8x32xbf16>, vector<4x8x32xbf16>, vector<4x8x32xbf16> -> vector<4x8x96xbf16>
    %23 = vector.shape_cast %22 : vector<4x8x96xbf16> to vector<32x96xbf16>
    %c1 = arith.constant 1 : index
    %c0_9 = arith.constant 0 : index
    %c0_10 = arith.constant 0 : index
    %24 = vector.load %arg4[%c1, %c0_9, %c0_10] : memref<3x96x16xbf16, #tpu.memory_space<vmem>>, vector<1x96x16xbf16>
    %25 = vector.shape_cast %24 : vector<1x96x16xbf16> to vector<96x16xbf16>
    %cst_11 = arith.constant dense<0.000000e+00> : vector<32x16xf32>
    %26 = tpu.matmul %23, %25, %cst_11 {dimension_numbers = #tpu.dot_dimension_numbers<[1], [0], [0], [1], [0, 0, 1, 1], [], []>} : vector<32x96xbf16>, vector<96x16xbf16>, vector<32x16xf32> -> vector<32x16xf32>
    %27 = arith.addf %14, %26 : vector<32x16xf32>
    %c2_i32 = arith.constant 2 : i32
    %28 = arith.addi %0, %c2_i32 : i32
    %c0_12 = arith.constant 0 : index
    %29 = arith.index_cast %28 : i32 to index
    %c0_13 = arith.constant 0 : index
    %c0_14 = arith.constant 0 : index
    %30 = vector.load %arg3[%c0_12, %29, %c0_13, %c0_14] : memref<1x10x10x32xbf16, #tpu.memory_space<vmem>>, vector<1x4x10x32xbf16>
    %31 = vector.shape_cast %30 : vector<1x4x10x32xbf16> to vector<4x10x32xbf16>
    %32 = vector.extract_strided_slice %31 {offsets = [0, 0, 0], sizes = [4, 8, 32], strides = [1, 1, 1]} : vector<4x10x32xbf16> to vector<4x8x32xbf16>
    %33 = vector.extract_strided_slice %31 {offsets = [0, 1, 0], sizes = [4, 8, 32], strides = [1, 1, 1]} : vector<4x10x32xbf16> to vector<4x8x32xbf16>
    %34 = vector.extract_strided_slice %31 {offsets = [0, 2, 0], sizes = [4, 8, 32], strides = [1, 1, 1]} : vector<4x10x32xbf16> to vector<4x8x32xbf16>
    %35 = tpu.concatenate %32, %33, %34 in 2 : vector<4x8x32xbf16>, vector<4x8x32xbf16>, vector<4x8x32xbf16> -> vector<4x8x96xbf16>
    %36 = vector.shape_cast %35 : vector<4x8x96xbf16> to vector<32x96xbf16>
    %c2 = arith.constant 2 : index
    %c0_15 = arith.constant 0 : index
    %c0_16 = arith.constant 0 : index
    %37 = vector.load %arg4[%c2, %c0_15, %c0_16] : memref<3x96x16xbf16, #tpu.memory_space<vmem>>, vector<1x96x16xbf16>
    %38 = vector.shape_cast %37 : vector<1x96x16xbf16> to vector<96x16xbf16>
    %cst_17 = arith.constant dense<0.000000e+00> : vector<32x16xf32>
    %39 = tpu.matmul %36, %38, %cst_17 {dimension_numbers = #tpu.dot_dimension_numbers<[1], [0], [0], [1], [0, 0, 1, 1], [], []>} : vector<32x96xbf16>, vector<96x16xbf16>, vector<32x16xf32> -> vector<32x16xf32>
    %40 = arith.addf %27, %39 : vector<32x16xf32>
    %c0_18 = arith.constant 0 : index
    %c0_19 = arith.constant 0 : index
    %41 = vector.load %arg5[%c0_18, %c0_19] : memref<1x16xf32, #tpu.memory_space<vmem>>, vector<1x16xf32>
    %42 = vector.broadcast %41 : vector<1x16xf32> to vector<32x16xf32>
    %43 = arith.addf %40, %42 : vector<32x16xf32>
    %cst_20 = arith.constant 0.000000e+00 : f32
    %44 = vector.broadcast %cst_20 : f32 to vector<32x16xf32>
    %45 = arith.maximumf %43, %44 : vector<32x16xf32>
    %46 = arith.truncf %45 : vector<32x16xf32> to vector<32x16xbf16>
    %c0_21 = arith.constant 0 : index
    %c0_22 = arith.constant 0 : index
    %47 = vector.load %arg6[%c0_21, %c0_22] : memref<32x16xbf16, #tpu.memory_space<vmem>>, vector<32x16xbf16>
    tpu.vector_store %arg6[%c0_21, %c0_22], %46 {strides = array<i32>} : memref<32x16xbf16, #tpu.memory_space<vmem>>, vector<32x16xbf16>,
    return
  }
  func.func @transform_0(%arg0: i32, %arg1: i32, %arg2: i32) -> (i32, i32, i32, i32) {
    %c0_i32 = arith.constant 0 : i32
    %c0_i32_0 = arith.constant 0 : i32
    %c0_i32_1 = arith.constant 0 : i32
    %c0_i32_2 = arith.constant 0 : i32
    return %arg0, %c0_i32, %c0_i32_0, %c0_i32_1 : i32, i32, i32, i32
  }
  func.func @transform_1(%arg0: i32, %arg1: i32, %arg2: i32) -> (i32, i32, i32) {
    %c0_i32 = arith.constant 0 : i32
    %c0_i32_0 = arith.constant 0 : i32
    %c0_i32_1 = arith.constant 0 : i32
    return %c0_i32, %c0_i32_0, %arg2 : i32, i32, i32
  }
  func.func @transform_2(%arg0: i32, %arg1: i32, %arg2: i32) -> (i32, i32) {
    %c0_i32 = arith.constant 0 : i32
    %c0_i32_0 = arith.constant 0 : i32
    return %c0_i32, %arg2 : i32, i32
  }
  func.func @transform_3(%arg0: i32, %arg1: i32, %arg2: i32) -> (i32, i32) {
    %c2_i32 = arith.constant 2 : i32
    %0 = arith.muli %arg0, %c2_i32 : i32
    %1 = arith.addi %0, %arg1 : i32
    %c0_i32 = arith.constant 0 : i32
    return %1, %arg2 : i32, i32
  }
}

module attributes {stable_mosaic.version = 11 : i64} {
  func.func @_multi_matmul_bn_act_kernel(%arg0: i32, %arg1: i32, %arg2: memref<64x32xbf16, #tpu.memory_space<vmem>>, %arg3: memref<64x16xbf16, #tpu.memory_space<vmem>>, %arg4: memref<64x16xbf16, #tpu.memory_space<vmem>>, %arg5: memref<64x16xbf16, #tpu.memory_space<vmem>>, %arg6: memref<1x16xf32, #tpu.memory_space<vmem>>, %arg7: memref<64x16xbf16, #tpu.memory_space<vmem>>) attributes {dimension_semantics = [#tpu.dimension_semantics<parallel>, #tpu.dimension_semantics<arbitrary>], iteration_bounds = array<i64: 2, 1>, scalar_prefetch = 0 : i64, scratch_operands = 0 : i64, tpu.core_type = #tpu.core_type<tc>, window_params = [{transform_indices = @transform_0, window_bounds = array<i64: 64, 32>}, {transform_indices = @transform_1, window_bounds = array<i64: 64, 16>}, {transform_indices = @transform_2, window_bounds = array<i64: 64, 16>}, {transform_indices = @transform_3, window_bounds = array<i64: 64, 16>}, {transform_indices = @transform_4, window_bounds = array<i64: 1, 16>}, {transform_indices = @transform_5, window_bounds = array<i64: 64, 16>}]} {
    %c0 = arith.constant 0 : index
    %c0_0 = arith.constant 0 : index
    %0 = vector.load %arg2[%c0, %c0_0] : memref<64x32xbf16, #tpu.memory_space<vmem>>, vector<64x32xbf16>
    %c0_1 = arith.constant 0 : index
    %c0_2 = arith.constant 0 : index
    %1 = vector.load %arg3[%c0_1, %c0_2] : memref<64x16xbf16, #tpu.memory_space<vmem>>, vector<64x16xbf16>
    %c0_3 = arith.constant 0 : index
    %c0_4 = arith.constant 0 : index
    %2 = vector.load %arg4[%c0_3, %c0_4] : memref<64x16xbf16, #tpu.memory_space<vmem>>, vector<64x16xbf16>
    %3 = tpu.concatenate %0, %1, %2 in 1 : vector<64x32xbf16>, vector<64x16xbf16>, vector<64x16xbf16> -> vector<64x64xbf16>
    %c0_5 = arith.constant 0 : index
    %c0_6 = arith.constant 0 : index
    %4 = vector.load %arg5[%c0_5, %c0_6] : memref<64x16xbf16, #tpu.memory_space<vmem>>, vector<64x16xbf16>
    %cst = arith.constant dense<0.000000e+00> : vector<64x16xf32>
    %5 = tpu.matmul %3, %4, %cst {dimension_numbers = #tpu.dot_dimension_numbers<[1], [0], [0], [1], [0, 0, 1, 1], [], []>} : vector<64x64xbf16>, vector<64x16xbf16>, vector<64x16xf32> -> vector<64x16xf32>
    %c0_7 = arith.constant 0 : index
    %c0_8 = arith.constant 0 : index
    %6 = vector.load %arg6[%c0_7, %c0_8] : memref<1x16xf32, #tpu.memory_space<vmem>>, vector<1x16xf32>
    %7 = vector.broadcast %6 : vector<1x16xf32> to vector<64x16xf32>
    %8 = arith.addf %5, %7 : vector<64x16xf32>
    %cst_9 = arith.constant 0.000000e+00 : f32
    %9 = vector.broadcast %cst_9 : f32 to vector<64x16xf32>
    %10 = arith.maximumf %8, %9 : vector<64x16xf32>
    %11 = arith.truncf %10 : vector<64x16xf32> to vector<64x16xbf16>
    %c0_10 = arith.constant 0 : index
    %c0_11 = arith.constant 0 : index
    %12 = vector.load %arg7[%c0_10, %c0_11] : memref<64x16xbf16, #tpu.memory_space<vmem>>, vector<64x16xbf16>
    tpu.vector_store %arg7[%c0_10, %c0_11], %11 {strides = array<i32>} : memref<64x16xbf16, #tpu.memory_space<vmem>>, vector<64x16xbf16>,
    return
  }
  func.func @transform_0(%arg0: i32, %arg1: i32) -> (i32, i32) {
    %c0_i32 = arith.constant 0 : i32
    %c0_i32_0 = arith.constant 0 : i32
    return %arg0, %c0_i32 : i32, i32
  }
  func.func @transform_1(%arg0: i32, %arg1: i32) -> (i32, i32) {
    %c0_i32 = arith.constant 0 : i32
    %c0_i32_0 = arith.constant 0 : i32
    return %arg0, %c0_i32 : i32, i32
  }
  func.func @transform_2(%arg0: i32, %arg1: i32) -> (i32, i32) {
    %c0_i32 = arith.constant 0 : i32
    %c0_i32_0 = arith.constant 0 : i32
    return %arg0, %c0_i32 : i32, i32
  }
  func.func @transform_3(%arg0: i32, %arg1: i32) -> (i32, i32) {
    %c0_i32 = arith.constant 0 : i32
    %c0_i32_0 = arith.constant 0 : i32
    return %c0_i32, %arg1 : i32, i32
  }
  func.func @transform_4(%arg0: i32, %arg1: i32) -> (i32, i32) {
    %c0_i32 = arith.constant 0 : i32
    %c0_i32_0 = arith.constant 0 : i32
    return %c0_i32, %arg1 : i32, i32
  }
  func.func @transform_5(%arg0: i32, %arg1: i32) -> (i32, i32) {
    %c0_i32 = arith.constant 0 : i32
    return %arg0, %arg1 : i32, i32
  }
}

module attributes {stable_mosaic.version = 11 : i64} {
  func.func @_multi_matmul_bn_act_kernel(%arg0: i32, %arg1: i32, %arg2: memref<64x16xbf16, #tpu.memory_space<vmem>>, %arg3: memref<16x32xbf16, #tpu.memory_space<vmem>>, %arg4: memref<1x32xf32, #tpu.memory_space<vmem>>, %arg5: memref<64x32xbf16, #tpu.memory_space<vmem>>, %arg6: memref<64x32xf32, #tpu.memory_space<vmem>>) attributes {dimension_semantics = [#tpu.dimension_semantics<parallel>, #tpu.dimension_semantics<arbitrary>], iteration_bounds = array<i64: 2, 1>, scalar_prefetch = 0 : i64, scratch_operands = 0 : i64, tpu.core_type = #tpu.core_type<tc>, window_params = [{transform_indices = @transform_0, window_bounds = array<i64: 64, 16>}, {transform_indices = @transform_1, window_bounds = array<i64: 16, 32>}, {transform_indices = @transform_2, window_bounds = array<i64: 1, 32>}, {transform_indices = @transform_3, window_bounds = array<i64: 64, 32>}, {transform_indices = @transform_4, window_bounds = array<i64: 64, 32>}]} {
    %cst = arith.constant 0.000000e+00 : f32
    %0 = vector.broadcast %cst : f32 to vector<64x32xf32>
    %c0 = arith.constant 0 : index
    %c0_0 = arith.constant 0 : index
    %1 = vector.load %arg2[%c0, %c0_0] : memref<64x16xbf16, #tpu.memory_space<vmem>>, vector<64x16xbf16>
    %c0_1 = arith.constant 0 : index
    %c0_2 = arith.constant 0 : index
    %2 = vector.load %arg3[%c0_1, %c0_2] : memref<16x32xbf16, #tpu.memory_space<vmem>>, vector<16x32xbf16>
    %cst_3 = arith.constant dense<0.000000e+00> : vector<64x32xf32>
    %3 = tpu.matmul %1, %2, %cst_3 {dimension_numbers = #tpu.dot_dimension_numbers<[1], [0], [0], [1], [0, 0, 1, 1], [], []>} : vector<64x16xbf16>, vector<16x32xbf16>, vector<64x32xf32> -> vector<64x32xf32>
    %4 = arith.addf %0, %3 : vector<64x32xf32>
    %c0_4 = arith.constant 0 : index
    %c0_5 = arith.constant 0 : index
    %5 = vector.load %arg4[%c0_4, %c0_5] : memref<1x32xf32, #tpu.memory_space<vmem>>, vector<1x32xf32>
    %6 = vector.broadcast %5 : vector<1x32xf32> to vector<64x32xf32>
    %7 = arith.addf %4, %6 : vector<64x32xf32>
    %cst_6 = arith.constant 0.000000e+00 : f32
    %8 = vector.broadcast %cst_6 : f32 to vector<64x32xf32>
    %9 = arith.maximumf %7, %8 : vector<64x32xf32>
    %c0_7 = arith.constant 0 : index
    %c0_8 = arith.constant 0 : index
    %10 = vector.load %arg5[%c0_7, %c0_8] : memref<64x32xbf16, #tpu.memory_space<vmem>>, vector<64x32xbf16>
    %11 = arith.extf %10 : vector<64x32xbf16> to vector<64x32xf32>
    %12 = arith.addf %9, %11 : vector<64x32xf32>
    %c0_9 = arith.constant 0 : index
    %c0_10 = arith.constant 0 : index
    %13 = vector.load %arg6[%c0_9, %c0_10] : memref<64x32xf32, #tpu.memory_space<vmem>>, vector<64x32xf32>
    tpu.vector_store %arg6[%c0_9, %c0_10], %12 {strides = array<i32>} : memref<64x32xf32, #tpu.memory_space<vmem>>, vector<64x32xf32>,
    return
  }
  func.func @transform_0(%arg0: i32, %arg1: i32) -> (i32, i32) {
    %c0_i32 = arith.constant 0 : i32
    %c0_i32_0 = arith.constant 0 : i32
    return %arg0, %c0_i32 : i32, i32
  }
  func.func @transform_1(%arg0: i32, %arg1: i32) -> (i32, i32) {
    %c0_i32 = arith.constant 0 : i32
    %c0_i32_0 = arith.constant 0 : i32
    return %c0_i32, %arg1 : i32, i32
  }
  func.func @transform_2(%arg0: i32, %arg1: i32) -> (i32, i32) {
    %c0_i32 = arith.constant 0 : i32
    %c0_i32_0 = arith.constant 0 : i32
    return %c0_i32, %arg1 : i32, i32
  }
  func.func @transform_3(%arg0: i32, %arg1: i32) -> (i32, i32) {
    %c0_i32 = arith.constant 0 : i32
    return %arg0, %arg1 : i32, i32
  }
  func.func @transform_4(%arg0: i32, %arg1: i32) -> (i32, i32) {
    %c0_i32 = arith.constant 0 : i32
    return %arg0, %arg1 : i32, i32
  }
}

</mosaic_0001>

<llo_original>
// kernel: hg_stage_forward.13
$region0: #{hg_stage_forward.13}
  #allocation0 [shape = 'u32[]', space=smem, size = 0x4, offset = 0x4, fixed_abs, tag = 'smem constant byte address 0x4 - core index']
  #allocation1 [shape = 'u32[72,128]{1,0:T(1,128)}', space=vmem, size = 0x9000, scoped, tag = 'internal scratch']
  %s0 = inlined_call_operand.vmem [shape: bf16[128,16], index: 0, kind: input, shape index: {}]
  %s1 = inlined_call_operand.vmem [shape: bf16[16,32], index: 1, kind: input, shape index: {}]
  %s2 = inlined_call_operand.vmem [shape: f32[1,32], index: 2, kind: input, shape index: {}]
  %s3 = inlined_call_operand.vmem [shape: bf16[128,32], index: 3, kind: output, shape index: {}]
  %s4 = sld [smem:[#allocation0]]
  $region45: #{hg_stage_forward.13} parent=0
    _
  %s6 = ssub.s32 1, %s4
  %s7 = scalar_select 0, %s6, %s4
  loop: start=0, step=1, limit=4
  $region2: #{hg_stage_forward.13} parent=0 // loop_pre_header
    _
  $region3: #{hg_stage_forward.13} parent=0 // loop_header
    %s9 = sphi 0, %s13
    %p10 = scmp.ge.s32.totalorder %s9, 4
    %s16 = sphi 0, %s28
    %s17 = sphi 0, %s24
    %s18 = sphi 0, %s16
    %s19 = sphi 0, %s17
    %s20 = sphi 0, %s18
    %s21 = sphi 0, %s19
    %s31 = sphi 0, %s33
    %s34 = sphi 0, %s31
    %s35 = sphi 0, %s34
    %s51 = sphi 0, %s35
    %s57 = sphi 0, %s59
    %s60 = sphi 0, %s57
    %s61 = sphi 0, %s60
    %s77 = sphi 0, %s61
    %s83 = sphi 0, %s85
    %s86 = sphi 0, %s83
    %s87 = sphi 0, %s86
    %s103 = sphi 0, %s87
    %s111 = sphi 0, %s113
    %s114 = sphi 0, %s111
    %s115 = sphi 0, %s114
    %s131 = sphi 0, %s115
  $region4: #{hg_stage_forward.13} parent=0 // loop_header_branch
    %12 = sbr.rel (%p10) target = $region8
  $region5: #{hg_stage_forward.13} parent=0 // loop_body
    %s14 = ssub.s32 %s9, 1
    %s15 = ssub.s32 %s9, 2
    %s22 = sadd.s32 1, %s17
    %p23 = scmp.ge.s32.totalorder %s22, 1
    %s24 = scalar_select %p23, 0, %s22
    %s25 = sadd.s32 1, %s16
    %s26 = scalar_select %p23, %s25, %s16
    %p27 = scmp.ge.s32.totalorder %s26, 2
    %s28 = scalar_select %p27, 0, %s26
    %s29 = ssub.s32 %s16, %s28
    %p30 = scmp.eq.s32.totalorder %s29, 0
    %s32 = sadd.s32 %s31, 1
    %s33 = scalar_select %p30, %s31, %s32
    %p36 = pneg %p30
    %p37 = scmp.eq.s32.totalorder %s9, 1
    %p38 = por %p36, %p37
    %p39 = scmp.ne.s32.totalorder %s31, %s34
    %p40 = scmp.eq.s32.totalorder %s9, 0
    %p41 = por %p39, %p40
    %p42 = scmp.ne.s32.totalorder %s31, %s34
    %p43 = scmp.eq.s32.totalorder %s14, 1
    %p44 = por %p42, %p43
    %p45 = scmp.ne.s32.totalorder %s34, %s35
    %p46 = scmp.eq.s32.totalorder %s14, 0
    %p47 = por %p45, %p46
    %p48 = scmp.ne.s32.totalorder %s34, %s35
    %p49 = scmp.eq.s32.totalorder %s15, 1
    %p50 = por %p48, %p49
    %p52 = scmp.ne.s32.totalorder %s35, %s51
    %p53 = scmp.eq.s32.totalorder %s15, 0
    %p54 = por %p52, %p53
    %s55 = ssub.s32 %s17, %s24
    %p56 = scmp.eq.s32.totalorder %s55, 0
    %s58 = sadd.s32 %s57, 1
    %s59 = scalar_select %p56, %s57, %s58
    %p62 = pneg %p56
    %p63 = scmp.eq.s32.totalorder %s9, 1
    %p64 = por %p62, %p63
    %p65 = scmp.ne.s32.totalorder %s57, %s60
    %p66 = scmp.eq.s32.totalorder %s9, 0
    %p67 = por %p65, %p66
    %p68 = scmp.ne.s32.totalorder %s57, %s60
    %p69 = scmp.eq.s32.totalorder %s14, 1
    %p70 = por %p68, %p69
    %p71 = scmp.ne.s32.totalorder %s60, %s61
    %p72 = scmp.eq.s32.totalorder %s14, 0
    %p73 = por %p71, %p72
    %p74 = scmp.ne.s32.totalorder %s60, %s61
    %p75 = scmp.eq.s32.totalorder %s15, 1
    %p76 = por %p74, %p75
    %p78 = scmp.ne.s32.totalorder %s61, %s77
    %p79 = scmp.eq.s32.totalorder %s15, 0
    %p80 = por %p78, %p79
    %s81 = ssub.s32 %s17, %s24
    %p82 = scmp.eq.s32.totalorder %s81, 0
    %s84 = sadd.s32 %s83, 1
    %s85 = scalar_select %p82, %s83, %s84
    %p88 = pneg %p82
    %p89 = scmp.eq.s32.totalorder %s9, 1
    %p90 = por %p88, %p89
    %p91 = scmp.ne.s32.totalorder %s83, %s86
    %p92 = scmp.eq.s32.totalorder %s9, 0
    %p93 = por %p91, %p92
    %p94 = scmp.ne.s32.totalorder %s83, %s86
    %p95 = scmp.eq.s32.totalorder %s14, 1
    %p96 = por %p94, %p95
    %p97 = scmp.ne.s32.totalorder %s86, %s87
    %p98 = scmp.eq.s32.totalorder %s14, 0
    %p99 = por %p97, %p98
    %p100 = scmp.ne.s32.totalorder %s86, %s87
    %p101 = scmp.eq.s32.totalorder %s15, 1
    %p102 = por %p100, %p101
    %p104 = scmp.ne.s32.totalorder %s87, %s103
    %p105 = scmp.eq.s32.totalorder %s15, 0
    %p106 = por %p104, %p105
    %s107 = ssub.s32 %s16, %s28
    %s108 = ssub.s32 %s17, %s24
    %s109 = sor.u32 %s107, %s108
    %p110 = scmp.eq.s32.totalorder %s109, 0
    %s112 = sadd.s32 %s111, 1
    %s113 = scalar_select %p110, %s111, %s112
    %p116 = pneg %p110
    %p117 = scmp.eq.s32.totalorder %s9, 1
    %p118 = por %p116, %p117
    %p119 = scmp.ne.s32.totalorder %s111, %s114
    %p120 = scmp.eq.s32.totalorder %s9, 0
    %p121 = por %p119, %p120
    %p122 = scmp.ne.s32.totalorder %s111, %s114
    %p123 = scmp.eq.s32.totalorder %s14, 1
    %p124 = por %p122, %p123
    %p125 = scmp.ne.s32.totalorder %s114, %s115
    %p126 = scmp.eq.s32.totalorder %s14, 0
    %p127 = por %p125, %p126
    %p128 = scmp.ne.s32.totalorder %s114, %s115
    %p129 = scmp.eq.s32.totalorder %s15, 1
    %p130 = por %p128, %p129
    %p132 = scmp.ne.s32.totalorder %s115, %s131
    %p133 = scmp.eq.s32.totalorder %s15, 0
    %p134 = por %p132, %p133
    %p135 = scmp.le.s32.totalorder 1, %s9
    %p136 = scmp.lt.s32.totalorder %s9, 3
    %p137 = pnand %p135, %p136
    %p138 = pneg %p137
    // Predicated region
    $region9: #{hg_stage_forward.13} parent=5 // pred_check
      _
    $region10: #{hg_stage_forward.13} parent=5 // pred_check_branch
      %140 = sbr.rel (%p137) target = $region12
    $region11: #{hg_stage_forward.13} parent=5 // pred_region
      %s141 = ssub.s32 %s9, 1
      // Predicated region
      $region13: #{hg_stage_forward.13} parent=11 // pred_check
        %p142 = pneg %p73
      $region14: #{hg_stage_forward.13} parent=11 // pred_check_branch
        %144 = sbr.rel (%p142) target = $region16
      $region15: #{hg_stage_forward.13} parent=11 // pred_region
        %p145 = scmp.lt.s32.totalorder %s19, 0
        %s146 = scalar_select %p145, %s19, 0
        %s147 = smul.addr %s146, 4
        %s148 = scalar_lea.vmem %s1, %s147
      $region16: #{hg_stage_forward.13} parent=11 // pred_fallthru
        _
      // Predicated region
      $region17: #{hg_stage_forward.13} parent=11 // pred_check
        %p149 = pneg %p99
      $region18: #{hg_stage_forward.13} parent=11 // pred_check_branch
        %151 = sbr.rel (%p149) target = $region20
      $region19: #{hg_stage_forward.13} parent=11 // pred_region
        %p152 = scmp.lt.s32.totalorder %s19, 0
        %s153 = scalar_select %p152, %s19, 0
        %s154 = scalar_lea.vmem %s2, %s153
      $region20: #{hg_stage_forward.13} parent=11 // pred_fallthru
        _
    $region12: #{hg_stage_forward.13} parent=5 // pred_fallthru
      _
    %p155 = scmp.lt.s32.totalorder %s9, 2
    // Predicated region
    $region21: #{hg_stage_forward.13} parent=5 // pred_check
      %p156 = pneg %p155
    $region22: #{hg_stage_forward.13} parent=5 // pred_check_branch
      %158 = sbr.rel (%p156) target = $region24
    $region23: #{hg_stage_forward.13} parent=5 // pred_region
      // Predicated region
      $region25: #{hg_stage_forward.13} parent=23 // pred_check
        %p159 = pneg %p41
      $region26: #{hg_stage_forward.13} parent=23 // pred_check_branch
        %161 = sbr.rel (%p159) target = $region28
      $region27: #{hg_stage_forward.13} parent=23 // pred_region
        %s162 = smul.u32 8, %s16
        %p163 = scmp.lt.s32.totalorder %s162, 15
        %s164 = scalar_select %p163, %s162, 15
        %s165 = smul.addr %s164, 4
        %s166 = scalar_lea.vmem %s0, %s165
        %s167 = smul.u32 8, %s16
      $region28: #{hg_stage_forward.13} parent=23 // pred_fallthru
        _
    $region24: #{hg_stage_forward.13} parent=5 // pred_fallthru
      _
    %p168 = scmp.le.s32.totalorder 1, %s9
    %p169 = scmp.lt.s32.totalorder %s9, 3
    %p170 = pnand %p168, %p169
    %p171 = pneg %p170
    // Predicated region
    $region29: #{hg_stage_forward.13} parent=5 // pred_check
      _
    $region30: #{hg_stage_forward.13} parent=5 // pred_check_branch
      %173 = sbr.rel (%p170) target = $region32
    $region31: #{hg_stage_forward.13} parent=5 // pred_region
      %s174 = ssub.s32 %s9, 1
      %s175 = smul.u32 8, %s18
      %p176 = scmp.lt.s32.totalorder %s175, 15
      %s177 = scalar_select %p176, %s175, 15
      %s178 = smul.addr %s177, 4
      %s179 = scalar_lea.vmem %s0, %s178
      %p180 = pneg %p47
      %p181 = pneg %p44
      %p182 = scmp.lt.s32.totalorder %s19, 0
      %s183 = scalar_select %p182, %s19, 0
      %s184 = smul.addr %s183, 4
      %s185 = scalar_lea.vmem %s1, %s184
      %p186 = pneg %p73
      %p187 = pneg %p70
      %p188 = scmp.lt.s32.totalorder %s19, 0
      %s189 = scalar_select %p188, %s19, 0
      %s190 = scalar_lea.vmem %s2, %s189
      %p191 = pneg %p99
      %p192 = pneg %p96
      %p193 = pneg %p127
      %p194 = pneg %p124
      %s195 = smul.u32 8, %s18
      %p196 = scmp.lt.s32.totalorder %s195, 15
      %s197 = scalar_select %p196, %s195, 15
      %p198 = scmp.lt.s32.totalorder %s19, 0
      %s199 = scalar_select %p198, %s19, 0
      %s200 = sadd.s32 %s199, %s197
      %s201 = smul.addr %s200, 4
      %s202 = scalar_lea.vmem %s3, %s201
      %s203 = smul.u32 8, %s18
      %p204 = scmp.lt.s32.totalorder %s203, 15
      %s205 = scalar_select %p204, %s203, 15
      %s206 = smul.addr %s205, 4
      %s207 = scalar_lea.vmem %s0, %s206
      %s208 = smul.u32 8, %s18
      %p209 = scmp.lt.s32.totalorder %s19, 0
      %s210 = scalar_select %p209, %s19, 0
      %s211 = smul.addr %s210, 4
      %s212 = scalar_lea.vmem %s1, %s211
      %p213 = scmp.lt.s32.totalorder %s19, 0
      %s214 = scalar_select %p213, %s19, 0
      %s215 = scalar_lea.vmem %s2, %s214
      %s216 = smul.u32 8, %s18
      %p217 = scmp.lt.s32.totalorder %s216, 15
      %s218 = scalar_select %p217, %s216, 15
      %p219 = scmp.lt.s32.totalorder %s19, 0
      %s220 = scalar_select %p219, %s19, 0
      %s221 = sadd.s32 %s220, %s218
      %s222 = smul.addr %s221, 4
      %s223 = scalar_lea.vmem %s3, %s222
      %s224 = smul.u32 8, %s18
      %v226 = vld [vmem:[%s207] sm:$0xf]
      %v227 = vld [vmem:[%s207 + $0x4] sm:$0xf]
      %v228 = vld [vmem:[%s207 + $0x8] sm:$0xf]
      %v229 = vld [vmem:[%s207 + $0xc] sm:$0xf]
      %v230 = vld [vmem:[%s207 + $0x10] sm:$0xf]
      %v231 = vld [vmem:[%s207 + $0x14] sm:$0xf]
      %v232 = vld [vmem:[%s207 + $0x18] sm:$0xf]
      %v233 = vld [vmem:[%s207 + $0x1c] sm:$0xf]
      %v234 = vld [vmem:[%s212] sm:$0xf]
      %v235 = vld [vmem:[%s212 + $0x4] sm:$0xf]
      %v236 = vld [vmem:[%s215] sm:$0x1]
      %v238 = vperm.slane %v236, 0
      %v248 = vunpack.c.l.b16 %v226
      %v249 = vunpack.c.l.b16 %v227
      %v250 = vunpack.c.l.b16 %v228
      %v251 = vunpack.c.l.b16 %v229
      %v252 = vunpack.c.l.b16 %v230
      %v253 = vunpack.c.l.b16 %v231
      %v254 = vunpack.c.l.b16 %v232
      %v255 = vunpack.c.l.b16 %v233
      %v256 = vpack.c.b16 %v249, %v248
      %v257 = vpack.c.b16 %v251, %v250
      %v258 = vpack.c.b16 %v253, %v252
      %v259 = vpack.c.b16 %v255, %v254
      %v262 = vunpack.c.l.b16 %v234
      %v263 = vunpack.c.l.b16 %v235
      %v264 = vpack.c.b16 %v263, %v262
      %vm266 = vcmask 130048
      %v268 = vsel %vm266, %v256, 0
      %v271 = vsel %vm266, %v257, 0
      %v274 = vsel %vm266, %v258, 0
      %v277 = vsel %vm266, %v259, 0
      %279 = vmatpush.bf16.msra.mxu0 0
      %280 = vmatpush.bf16.msra.mxu0 0
      %281 = vmatpush.bf16.msra.mxu0 0
      %282 = vmatpush.bf16.msra.mxu0 0
      %283 = vmatpush.bf16.msra.mxu0 0
      %284 = vmatpush.bf16.msra.mxu0 0
      %285 = vmatpush.bf16.msra.mxu0 0
      %286 = vmatpush.bf16.msra.mxu0 %v264
      %287 = vmatmul.bf16.gmra.mxu0 %v268
      %v288 = vpop.f32.mrf.mxu0
      %v289 = vadd.f32 %v238, %v288
      %v290 = vpop.f32.mrf.mxu0
      %v291 = vadd.f32 %v238, %v290
      %292 = vmatmul.bf16.gmra.mxu0 %v271
      %v293 = vpop.f32.mrf.mxu0
      %v294 = vadd.f32 %v238, %v293
      %v295 = vpop.f32.mrf.mxu0
      %v296 = vadd.f32 %v238, %v295
      %297 = vmatmul.bf16.gmra.mxu0 %v274
      %v298 = vpop.f32.mrf.mxu0
      %v299 = vadd.f32 %v238, %v298
      %v300 = vpop.f32.mrf.mxu0
      %v301 = vadd.f32 %v238, %v300
      %302 = vmatmul.bf16.gmra.mxu0 %v277
      %v303 = vpop.f32.mrf.mxu0
      %v304 = vadd.f32 %v238, %v303
      %v305 = vpop.f32.mrf.mxu0
      %v306 = vadd.f32 %v238, %v305
      %307 = vdwg.mxu0
      %v308 = vmax.f32 %v289, 0.0
      %v309 = vmax.f32 %v291, 0.0
      %v310 = vmax.f32 %v294, 0.0
      %v311 = vmax.f32 %v296, 0.0
      %v312 = vmax.f32 %v299, 0.0
      %v313 = vmax.f32 %v301, 0.0
      %v314 = vmax.f32 %v304, 0.0
      %v315 = vmax.f32 %v306, 0.0
      %v316 = vpack.c.bf16 %v308, %v308
      %v317 = vpack.c.bf16 %v309, %v309
      %v318 = vpack.c.bf16 %v310, %v310
      %v319 = vpack.c.bf16 %v311, %v311
      %v320 = vpack.c.bf16 %v312, %v312
      %v321 = vpack.c.bf16 %v313, %v313
      %v322 = vpack.c.bf16 %v314, %v314
      %v323 = vpack.c.bf16 %v315, %v315
      %vm324 = vcmask 257024
      %325 = vst.msk [vmem:[%s223] sm:$0xf] %vm324, %v316
      %326 = vst.msk [vmem:[%s223 + $0x4] sm:$0xf] %vm324, %v317
      %327 = vst.msk [vmem:[%s223 + $0x8] sm:$0xf] %vm324, %v318
      %328 = vst.msk [vmem:[%s223 + $0xc] sm:$0xf] %vm324, %v319
      %329 = vst.msk [vmem:[%s223 + $0x10] sm:$0xf] %vm324, %v320
      %330 = vst.msk [vmem:[%s223 + $0x14] sm:$0xf] %vm324, %v321
      %331 = vst.msk [vmem:[%s223 + $0x18] sm:$0xf] %vm324, %v322
      %332 = vst.msk [vmem:[%s223 + $0x1c] sm:$0xf] %vm324, %v323
      %s333 = smul.u32 8, %s18
      %p334 = scmp.lt.s32.totalorder %s333, 15
      %s335 = scalar_select %p334, %s333, 15
      %p336 = scmp.lt.s32.totalorder %s19, 0
      %s337 = scalar_select %p336, %s19, 0
      %s338 = sadd.s32 %s337, %s335
      %s339 = smul.addr %s338, 4
      %s340 = scalar_lea.vmem %s3, %s339
      // Predicated region
      $region33: #{hg_stage_forward.13} parent=31 // pred_check
        %p341 = pneg %p124
      $region34: #{hg_stage_forward.13} parent=31 // pred_check_branch
        %343 = sbr.rel (%p341) target = $region36
      $region35: #{hg_stage_forward.13} parent=31 // pred_region
        %s344 = smul.u32 8, %s18
      $region36: #{hg_stage_forward.13} parent=31 // pred_fallthru
        _
    $region32: #{hg_stage_forward.13} parent=5 // pred_fallthru
      _
    %p345 = scmp.le.s32.totalorder 2, %s9
    // Predicated region
    $region37: #{hg_stage_forward.13} parent=5 // pred_check
      %p346 = pneg %p345
    $region38: #{hg_stage_forward.13} parent=5 // pred_check_branch
      %348 = sbr.rel (%p346) target = $region40
    $region39: #{hg_stage_forward.13} parent=5 // pred_region
      %s349 = ssub.s32 %s9, 2
      // Predicated region
      $region41: #{hg_stage_forward.13} parent=39 // pred_check
        %p350 = pneg %p130
      $region42: #{hg_stage_forward.13} parent=39 // pred_check_branch
        %352 = sbr.rel (%p350) target = $region44
      $region43: #{hg_stage_forward.13} parent=39 // pred_region
        %s353 = smul.u32 8, %s20
        %p354 = scmp.lt.s32.totalorder %s353, 15
        %s355 = scalar_select %p354, %s353, 15
        %p356 = scmp.lt.s32.totalorder %s21, 0
        %s357 = scalar_select %p356, %s21, 0
        %s358 = sadd.s32 %s357, %s355
        %s359 = smul.addr %s358, 4
        %s360 = scalar_lea.vmem %s3, %s359
      $region44: #{hg_stage_forward.13} parent=39 // pred_fallthru
        _
    $region40: #{hg_stage_forward.13} parent=5 // pred_fallthru
      _
  $region6: #{hg_stage_forward.13} parent=0 // loop_footer
    %s13 = sadd.s32 1, %s9
  $region7: #{hg_stage_forward.13} parent=0 // loop_footer_branch
    %8 = sbr.rel target = $region3
  $region8: #{hg_stage_forward.13} parent=0 // loop_exit
    _

// kernel: hg_stage_forward.12
$region0: #{hg_stage_forward.12}
  #allocation0 [shape = 'u32[]', space=smem, size = 0x4, offset = 0x4, fixed_abs, tag = 'smem constant byte address 0x4 - core index']
  #allocation1 [shape = 'u32[72,128]{1,0:T(1,128)}', space=vmem, size = 0x9000, scoped, tag = 'internal scratch']
  %s0 = inlined_call_operand.vmem [shape: bf16[128,16], index: 0, kind: input, shape index: {}]
  %s1 = inlined_call_operand.vmem [shape: bf16[128,16], index: 1, kind: input, shape index: {}]
  %s2 = inlined_call_operand.vmem [shape: bf16[128,16], index: 2, kind: input, shape index: {}]
  %s3 = inlined_call_operand.vmem [shape: bf16[48,16], index: 3, kind: input, shape index: {}]
  %s4 = inlined_call_operand.vmem [shape: f32[1,16], index: 4, kind: input, shape index: {}]
  %s5 = inlined_call_operand.vmem [shape: bf16[128,16], index: 5, kind: output, shape index: {}]
  %s6 = sld [smem:[#allocation0]]
  $region53: #{hg_stage_forward.12} parent=0
    _
  %s8 = ssub.s32 1, %s6
  %s9 = scalar_select 0, %s8, %s6
  loop: start=0, step=1, limit=4
  $region2: #{hg_stage_forward.12} parent=0 // loop_pre_header
    _
  $region3: #{hg_stage_forward.12} parent=0 // loop_header
    %s11 = sphi 0, %s15
    %p12 = scmp.ge.s32.totalorder %s11, 4
    %s18 = sphi 0, %s30
    %s19 = sphi 0, %s26
    %s20 = sphi 0, %s18
    %s21 = sphi 0, %s19
    %s22 = sphi 0, %s20
    %s23 = sphi 0, %s21
    %s33 = sphi 0, %s35
    %s36 = sphi 0, %s33
    %s37 = sphi 0, %s36
    %s53 = sphi 0, %s37
    %s59 = sphi 0, %s61
    %s62 = sphi 0, %s59
    %s63 = sphi 0, %s62
    %s79 = sphi 0, %s63
    %s85 = sphi 0, %s87
    %s88 = sphi 0, %s85
    %s89 = sphi 0, %s88
    %s105 = sphi 0, %s89
    %s111 = sphi 0, %s113
    %s114 = sphi 0, %s111
    %s115 = sphi 0, %s114
    %s131 = sphi 0, %s115
    %s137 = sphi 0, %s139
    %s140 = sphi 0, %s137
    %s141 = sphi 0, %s140
    %s157 = sphi 0, %s141
    %s165 = sphi 0, %s167
    %s168 = sphi 0, %s165
    %s169 = sphi 0, %s168
    %s185 = sphi 0, %s169
  $region4: #{hg_stage_forward.12} parent=0 // loop_header_branch
    %14 = sbr.rel (%p12) target = $region8
  $region5: #{hg_stage_forward.12} parent=0 // loop_body
    %s16 = ssub.s32 %s11, 1
    %s17 = ssub.s32 %s11, 2
    %s24 = sadd.s32 1, %s19
    %p25 = scmp.ge.s32.totalorder %s24, 1
    %s26 = scalar_select %p25, 0, %s24
    %s27 = sadd.s32 1, %s18
    %s28 = scalar_select %p25, %s27, %s18
    %p29 = scmp.ge.s32.totalorder %s28, 2
    %s30 = scalar_select %p29, 0, %s28
    %s31 = ssub.s32 %s18, %s30
    %p32 = scmp.eq.s32.totalorder %s31, 0
    %s34 = sadd.s32 %s33, 1
    %s35 = scalar_select %p32, %s33, %s34
    %p38 = pneg %p32
    %p39 = scmp.eq.s32.totalorder %s11, 1
    %p40 = por %p38, %p39
    %p41 = scmp.ne.s32.totalorder %s33, %s36
    %p42 = scmp.eq.s32.totalorder %s11, 0
    %p43 = por %p41, %p42
    %p44 = scmp.ne.s32.totalorder %s33, %s36
    %p45 = scmp.eq.s32.totalorder %s16, 1
    %p46 = por %p44, %p45
    %p47 = scmp.ne.s32.totalorder %s36, %s37
    %p48 = scmp.eq.s32.totalorder %s16, 0
    %p49 = por %p47, %p48
    %p50 = scmp.ne.s32.totalorder %s36, %s37
    %p51 = scmp.eq.s32.totalorder %s17, 1
    %p52 = por %p50, %p51
    %p54 = scmp.ne.s32.totalorder %s37, %s53
    %p55 = scmp.eq.s32.totalorder %s17, 0
    %p56 = por %p54, %p55
    %s57 = ssub.s32 %s18, %s30
    %p58 = scmp.eq.s32.totalorder %s57, 0
    %s60 = sadd.s32 %s59, 1
    %s61 = scalar_select %p58, %s59, %s60
    %p64 = pneg %p58
    %p65 = scmp.eq.s32.totalorder %s11, 1
    %p66 = por %p64, %p65
    %p67 = scmp.ne.s32.totalorder %s59, %s62
    %p68 = scmp.eq.s32.totalorder %s11, 0
    %p69 = por %p67, %p68
    %p70 = scmp.ne.s32.totalorder %s59, %s62
    %p71 = scmp.eq.s32.totalorder %s16, 1
    %p72 = por %p70, %p71
    %p73 = scmp.ne.s32.totalorder %s62, %s63
    %p74 = scmp.eq.s32.totalorder %s16, 0
    %p75 = por %p73, %p74
    %p76 = scmp.ne.s32.totalorder %s62, %s63
    %p77 = scmp.eq.s32.totalorder %s17, 1
    %p78 = por %p76, %p77
    %p80 = scmp.ne.s32.totalorder %s63, %s79
    %p81 = scmp.eq.s32.totalorder %s17, 0
    %p82 = por %p80, %p81
    %s83 = ssub.s32 %s18, %s30
    %p84 = scmp.eq.s32.totalorder %s83, 0
    %s86 = sadd.s32 %s85, 1
    %s87 = scalar_select %p84, %s85, %s86
    %p90 = pneg %p84
    %p91 = scmp.eq.s32.totalorder %s11, 1
    %p92 = por %p90, %p91
    %p93 = scmp.ne.s32.totalorder %s85, %s88
    %p94 = scmp.eq.s32.totalorder %s11, 0
    %p95 = por %p93, %p94
    %p96 = scmp.ne.s32.totalorder %s85, %s88
    %p97 = scmp.eq.s32.totalorder %s16, 1
    %p98 = por %p96, %p97
    %p99 = scmp.ne.s32.totalorder %s88, %s89
    %p100 = scmp.eq.s32.totalorder %s16, 0
    %p101 = por %p99, %p100
    %p102 = scmp.ne.s32.totalorder %s88, %s89
    %p103 = scmp.eq.s32.totalorder %s17, 1
    %p104 = por %p102, %p103
    %p106 = scmp.ne.s32.totalorder %s89, %s105
    %p107 = scmp.eq.s32.totalorder %s17, 0
    %p108 = por %p106, %p107
    %s109 = ssub.s32 %s19, %s26
    %p110 = scmp.eq.s32.totalorder %s109, 0
    %s112 = sadd.s32 %s111, 1
    %s113 = scalar_select %p110, %s111, %s112
    %p116 = pneg %p110
    %p117 = scmp.eq.s32.totalorder %s11, 1
    %p118 = por %p116, %p117
    %p119 = scmp.ne.s32.totalorder %s111, %s114
    %p120 = scmp.eq.s32.totalorder %s11, 0
    %p121 = por %p119, %p120
    %p122 = scmp.ne.s32.totalorder %s111, %s114
    %p123 = scmp.eq.s32.totalorder %s16, 1
    %p124 = por %p122, %p123
    %p125 = scmp.ne.s32.totalorder %s114, %s115
    %p126 = scmp.eq.s32.totalorder %s16, 0
    %p127 = por %p125, %p126
    %p128 = scmp.ne.s32.totalorder %s114, %s115
    %p129 = scmp.eq.s32.totalorder %s17, 1
    %p130 = por %p128, %p129
    %p132 = scmp.ne.s32.totalorder %s115, %s131
    %p133 = scmp.eq.s32.totalorder %s17, 0
    %p134 = por %p132, %p133
    %s135 = ssub.s32 %s19, %s26
    %p136 = scmp.eq.s32.totalorder %s135, 0
    %s138 = sadd.s32 %s137, 1
    %s139 = scalar_select %p136, %s137, %s138
    %p142 = pneg %p136
    %p143 = scmp.eq.s32.totalorder %s11, 1
    %p144 = por %p142, %p143
    %p145 = scmp.ne.s32.totalorder %s137, %s140
    %p146 = scmp.eq.s32.totalorder %s11, 0
    %p147 = por %p145, %p146
    %p148 = scmp.ne.s32.totalorder %s137, %s140
    %p149 = scmp.eq.s32.totalorder %s16, 1
    %p150 = por %p148, %p149
    %p151 = scmp.ne.s32.totalorder %s140, %s141
    %p152 = scmp.eq.s32.totalorder %s16, 0
    %p153 = por %p151, %p152
    %p154 = scmp.ne.s32.totalorder %s140, %s141
    %p155 = scmp.eq.s32.totalorder %s17, 1
    %p156 = por %p154, %p155
    %p158 = scmp.ne.s32.totalorder %s141, %s157
    %p159 = scmp.eq.s32.totalorder %s17, 0
    %p160 = por %p158, %p159
    %s161 = ssub.s32 %s18, %s30
    %s162 = ssub.s32 %s19, %s26
    %s163 = sor.u32 %s161, %s162
    %p164 = scmp.eq.s32.totalorder %s163, 0
    %s166 = sadd.s32 %s165, 1
    %s167 = scalar_select %p164, %s165, %s166
    %p170 = pneg %p164
    %p171 = scmp.eq.s32.totalorder %s11, 1
    %p172 = por %p170, %p171
    %p173 = scmp.ne.s32.totalorder %s165, %s168
    %p174 = scmp.eq.s32.totalorder %s11, 0
    %p175 = por %p173, %p174
    %p176 = scmp.ne.s32.totalorder %s165, %s168
    %p177 = scmp.eq.s32.totalorder %s16, 1
    %p178 = por %p176, %p177
    %p179 = scmp.ne.s32.totalorder %s168, %s169
    %p180 = scmp.eq.s32.totalorder %s16, 0
    %p181 = por %p179, %p180
    %p182 = scmp.ne.s32.totalorder %s168, %s169
    %p183 = scmp.eq.s32.totalorder %s17, 1
    %p184 = por %p182, %p183
    %p186 = scmp.ne.s32.totalorder %s169, %s185
    %p187 = scmp.eq.s32.totalorder %s17, 0
    %p188 = por %p186, %p187
    %p189 = scmp.le.s32.totalorder 1, %s11
    %p190 = scmp.lt.s32.totalorder %s11, 3
    %p191 = pnand %p189, %p190
    %p192 = pneg %p191
    // Predicated region
    $region9: #{hg_stage_forward.12} parent=5 // pred_check
      _
    $region10: #{hg_stage_forward.12} parent=5 // pred_check_branch
      %194 = sbr.rel (%p191) target = $region12
    $region11: #{hg_stage_forward.12} parent=5 // pred_region
      %s195 = ssub.s32 %s11, 1
      // Predicated region
      $region13: #{hg_stage_forward.12} parent=11 // pred_check
        %p196 = pneg %p127
      $region14: #{hg_stage_forward.12} parent=11 // pred_check_branch
        %198 = sbr.rel (%p196) target = $region16
      $region15: #{hg_stage_forward.12} parent=11 // pred_region
        %p199 = scmp.lt.s32.totalorder %s21, 0
        %s200 = scalar_select %p199, %s21, 0
        %s201 = smul.addr %s200, 4
        %s202 = scalar_lea.vmem %s3, %s201
      $region16: #{hg_stage_forward.12} parent=11 // pred_fallthru
        _
      // Predicated region
      $region17: #{hg_stage_forward.12} parent=11 // pred_check
        %p203 = pneg %p153
      $region18: #{hg_stage_forward.12} parent=11 // pred_check_branch
        %205 = sbr.rel (%p203) target = $region20
      $region19: #{hg_stage_forward.12} parent=11 // pred_region
        %p206 = scmp.lt.s32.totalorder %s21, 0
        %s207 = scalar_select %p206, %s21, 0
        %s208 = scalar_lea.vmem %s4, %s207
      $region20: #{hg_stage_forward.12} parent=11 // pred_fallthru
        _
    $region12: #{hg_stage_forward.12} parent=5 // pred_fallthru
      _
    %p209 = scmp.lt.s32.totalorder %s11, 2
    // Predicated region
    $region21: #{hg_stage_forward.12} parent=5 // pred_check
      %p210 = pneg %p209
    $region22: #{hg_stage_forward.12} parent=5 // pred_check_branch
      %212 = sbr.rel (%p210) target = $region24
    $region23: #{hg_stage_forward.12} parent=5 // pred_region
      // Predicated region
      $region25: #{hg_stage_forward.12} parent=23 // pred_check
        %p213 = pneg %p43
      $region26: #{hg_stage_forward.12} parent=23 // pred_check_branch
        %215 = sbr.rel (%p213) target = $region28
      $region27: #{hg_stage_forward.12} parent=23 // pred_region
        %s216 = smul.u32 8, %s18
        %p217 = scmp.lt.s32.totalorder %s216, 15
        %s218 = scalar_select %p217, %s216, 15
        %s219 = smul.addr %s218, 4
        %s220 = scalar_lea.vmem %s0, %s219
        %s221 = smul.u32 8, %s18
      $region28: #{hg_stage_forward.12} parent=23 // pred_fallthru
        _
      // Predicated region
      $region29: #{hg_stage_forward.12} parent=23 // pred_check
        %p222 = pneg %p69
      $region30: #{hg_stage_forward.12} parent=23 // pred_check_branch
        %224 = sbr.rel (%p222) target = $region32
      $region31: #{hg_stage_forward.12} parent=23 // pred_region
        %s225 = smul.u32 8, %s18
        %p226 = scmp.lt.s32.totalorder %s225, 15
        %s227 = scalar_select %p226, %s225, 15
        %s228 = smul.addr %s227, 4
        %s229 = scalar_lea.vmem %s1, %s228
        %s230 = smul.u32 8, %s18
      $region32: #{hg_stage_forward.12} parent=23 // pred_fallthru
        _
      // Predicated region
      $region33: #{hg_stage_forward.12} parent=23 // pred_check
        %p231 = pneg %p95
      $region34: #{hg_stage_forward.12} parent=23 // pred_check_branch
        %233 = sbr.rel (%p231) target = $region36
      $region35: #{hg_stage_forward.12} parent=23 // pred_region
        %s234 = smul.u32 8, %s18
        %p235 = scmp.lt.s32.totalorder %s234, 15
        %s236 = scalar_select %p235, %s234, 15
        %s237 = smul.addr %s236, 4
        %s238 = scalar_lea.vmem %s2, %s237
        %s239 = smul.u32 8, %s18
      $region36: #{hg_stage_forward.12} parent=23 // pred_fallthru
        _
    $region24: #{hg_stage_forward.12} parent=5 // pred_fallthru
      _
    %p240 = scmp.le.s32.totalorder 1, %s11
    %p241 = scmp.lt.s32.totalorder %s11, 3
    %p242 = pnand %p240, %p241
    %p243 = pneg %p242
    // Predicated region
    $region37: #{hg_stage_forward.12} parent=5 // pred_check
      _
    $region38: #{hg_stage_forward.12} parent=5 // pred_check_branch
      %245 = sbr.rel (%p242) target = $region40
    $region39: #{hg_stage_forward.12} parent=5 // pred_region
      %s246 = ssub.s32 %s11, 1
      %s247 = smul.u32 8, %s20
      %p248 = scmp.lt.s32.totalorder %s247, 15
      %s249 = scalar_select %p248, %s247, 15
      %s250 = smul.addr %s249, 4
      %s251 = scalar_lea.vmem %s0, %s250
      %p252 = pneg %p49
      %p253 = pneg %p46
      %s254 = smul.u32 8, %s20
      %p255 = scmp.lt.s32.totalorder %s254, 15
      %s256 = scalar_select %p255, %s254, 15
      %s257 = smul.addr %s256, 4
      %s258 = scalar_lea.vmem %s1, %s257
      %p259 = pneg %p75
      %p260 = pneg %p72
      %s261 = smul.u32 8, %s20
      %p262 = scmp.lt.s32.totalorder %s261, 15
      %s263 = scalar_select %p262, %s261, 15
      %s264 = smul.addr %s263, 4
      %s265 = scalar_lea.vmem %s2, %s264
      %p266 = pneg %p101
      %p267 = pneg %p98
      %p268 = scmp.lt.s32.totalorder %s21, 0
      %s269 = scalar_select %p268, %s21, 0
      %s270 = smul.addr %s269, 4
      %s271 = scalar_lea.vmem %s3, %s270
      %p272 = pneg %p127
      %p273 = pneg %p124
      %p274 = scmp.lt.s32.totalorder %s21, 0
      %s275 = scalar_select %p274, %s21, 0
      %s276 = scalar_lea.vmem %s4, %s275
      %p277 = pneg %p153
      %p278 = pneg %p150
      %p279 = pneg %p181
      %p280 = pneg %p178
      %s281 = smul.u32 8, %s20
      %p282 = scmp.lt.s32.totalorder %s281, 15
      %s283 = scalar_select %p282, %s281, 15
      %p284 = scmp.lt.s32.totalorder %s21, 0
      %s285 = scalar_select %p284, %s21, 0
      %s286 = sadd.s32 %s285, %s283
      %s287 = smul.addr %s286, 4
      %s288 = scalar_lea.vmem %s5, %s287
      %s289 = smul.u32 8, %s20
      %p290 = scmp.lt.s32.totalorder %s289, 15
      %s291 = scalar_select %p290, %s289, 15
      %s292 = smul.addr %s291, 4
      %s293 = scalar_lea.vmem %s0, %s292
      %s294 = smul.u32 8, %s20
      %s295 = smul.u32 8, %s20
      %p296 = scmp.lt.s32.totalorder %s295, 15
      %s297 = scalar_select %p296, %s295, 15
      %s298 = smul.addr %s297, 4
      %s299 = scalar_lea.vmem %s1, %s298
      %s300 = smul.u32 8, %s20
      %s301 = smul.u32 8, %s20
      %p302 = scmp.lt.s32.totalorder %s301, 15
      %s303 = scalar_select %p302, %s301, 15
      %s304 = smul.addr %s303, 4
      %s305 = scalar_lea.vmem %s2, %s304
      %s306 = smul.u32 8, %s20
      %p307 = scmp.lt.s32.totalorder %s21, 0
      %s308 = scalar_select %p307, %s21, 0
      %s309 = smul.addr %s308, 4
      %s310 = scalar_lea.vmem %s3, %s309
      %p311 = scmp.lt.s32.totalorder %s21, 0
      %s312 = scalar_select %p311, %s21, 0
      %s313 = scalar_lea.vmem %s4, %s312
      %s314 = smul.u32 8, %s20
      %p315 = scmp.lt.s32.totalorder %s314, 15
      %s316 = scalar_select %p315, %s314, 15
      %p317 = scmp.lt.s32.totalorder %s21, 0
      %s318 = scalar_select %p317, %s21, 0
      %s319 = sadd.s32 %s318, %s316
      %s320 = smul.addr %s319, 4
      %s321 = scalar_lea.vmem %s5, %s320
      %s322 = smul.u32 8, %s20
      %v324 = vld [vmem:[%s293] sm:$0xf]
      %v325 = vld [vmem:[%s293 + $0x4] sm:$0xf]
      %v326 = vld [vmem:[%s293 + $0x8] sm:$0xf]
      %v327 = vld [vmem:[%s293 + $0xc] sm:$0xf]
      %v328 = vld [vmem:[%s293 + $0x10] sm:$0xf]
      %v329 = vld [vmem:[%s293 + $0x14] sm:$0xf]
      %v330 = vld [vmem:[%s293 + $0x18] sm:$0xf]
      %v331 = vld [vmem:[%s293 + $0x1c] sm:$0xf]
      %v332 = vld [vmem:[%s299] sm:$0xf]
      %v333 = vld [vmem:[%s299 + $0x4] sm:$0xf]
      %v334 = vld [vmem:[%s299 + $0x8] sm:$0xf]
      %v335 = vld [vmem:[%s299 + $0xc] sm:$0xf]
      %v336 = vld [vmem:[%s299 + $0x10] sm:$0xf]
      %v337 = vld [vmem:[%s299 + $0x14] sm:$0xf]
      %v338 = vld [vmem:[%s299 + $0x18] sm:$0xf]
      %v339 = vld [vmem:[%s299 + $0x1c] sm:$0xf]
      %v340 = vld [vmem:[%s305] sm:$0xf]
      %v341 = vld [vmem:[%s305 + $0x4] sm:$0xf]
      %v342 = vld [vmem:[%s305 + $0x8] sm:$0xf]
      %v343 = vld [vmem:[%s305 + $0xc] sm:$0xf]
      %v344 = vld [vmem:[%s305 + $0x10] sm:$0xf]
      %v345 = vld [vmem:[%s305 + $0x14] sm:$0xf]
      %v346 = vld [vmem:[%s305 + $0x18] sm:$0xf]
      %v347 = vld [vmem:[%s305 + $0x1c] sm:$0xf]
      %v356 = vunpack.c.l.b16 %v324
      %v357 = vunpack.c.l.b16 %v325
      %v358 = vunpack.c.l.b16 %v326
      %v359 = vunpack.c.l.b16 %v327
      %v360 = vunpack.c.l.b16 %v328
      %v361 = vunpack.c.l.b16 %v329
      %v362 = vunpack.c.l.b16 %v330
      %v363 = vunpack.c.l.b16 %v331
      %v364 = vpack.c.b16 %v357, %v356
      %v365 = vpack.c.b16 %v359, %v358
      %v366 = vpack.c.b16 %v361, %v360
      %v367 = vpack.c.b16 %v363, %v362
      %v376 = vunpack.c.l.b16 %v332
      %v377 = vunpack.c.l.b16 %v333
      %v378 = vunpack.c.l.b16 %v334
      %v379 = vunpack.c.l.b16 %v335
      %v380 = vunpack.c.l.b16 %v336
      %v381 = vunpack.c.l.b16 %v337
      %v382 = vunpack.c.l.b16 %v338
      %v383 = vunpack.c.l.b16 %v339
      %v384 = vpack.c.b16 %v377, %v376
      %v385 = vpack.c.b16 %v379, %v378
      %v386 = vpack.c.b16 %v381, %v380
      %v387 = vpack.c.b16 %v383, %v382
      %388 = vrot.lane.b32.xlu0 %v384, 16
      %v389 = vpop.permute.xlu0 %388
      %390 = vrot.lane.b32.xlu0 %v385, 16
      %v391 = vpop.permute.xlu0 %390
      %392 = vrot.lane.b32.xlu0 %v386, 16
      %v393 = vpop.permute.xlu0 %392
      %394 = vrot.lane.b32.xlu0 %v387, 16
      %v395 = vpop.permute.xlu0 %394
      %v404 = vunpack.c.l.b16 %v340
      %v405 = vunpack.c.l.b16 %v341
      %v406 = vunpack.c.l.b16 %v342
      %v407 = vunpack.c.l.b16 %v343
      %v408 = vunpack.c.l.b16 %v344
      %v409 = vunpack.c.l.b16 %v345
      %v410 = vunpack.c.l.b16 %v346
      %v411 = vunpack.c.l.b16 %v347
      %v412 = vpack.c.b16 %v405, %v404
      %v413 = vpack.c.b16 %v407, %v406
      %v414 = vpack.c.b16 %v409, %v408
      %v415 = vpack.c.b16 %v411, %v410
      %416 = vrot.lane.b32.xlu0 %v412, 32
      %v417 = vpop.permute.xlu0 %416
      %418 = vrot.lane.b32.xlu0 %v413, 32
      %v419 = vpop.permute.xlu0 %418
      %420 = vrot.lane.b32.xlu0 %v414, 32
      %v421 = vpop.permute.xlu0 %420
      %422 = vrot.lane.b32.xlu0 %v415, 32
      %v423 = vpop.permute.xlu0 %422
      %vm424 = vcmask 130048
      %v427 = vsel %vm424, %v364, %v389
      %v430 = vsel %vm424, %v365, %v391
      %v433 = vsel %vm424, %v366, %v393
      %v436 = vsel %vm424, %v367, %v395
      %vm437 = vcmask 261120
      %v439 = vsel %vm437, %v427, %v417
      %v441 = vsel %vm437, %v430, %v419
      %v443 = vsel %vm437, %v433, %v421
      %v445 = vsel %vm437, %v436, %v423
      %v446 = vld [vmem:[%s310] sm:$0xf]
      %v447 = vld [vmem:[%s310 + $0x4] sm:$0xf]
      %v448 = vld [vmem:[%s310 + $0x8] sm:$0xf]
      %v449 = vld [vmem:[%s310 + $0xc] sm:$0xf]
      %v450 = vld [vmem:[%s310 + $0x10] sm:$0xf]
      %v451 = vld [vmem:[%s310 + $0x14] sm:$0xf]
      %v452 = vld [vmem:[%s313] sm:$0x1]
      %v454 = vperm.slane %v452, 0
      %v462 = vunpack.c.l.b16 %v446
      %v463 = vunpack.c.l.b16 %v447
      %v464 = vunpack.c.l.b16 %v448
      %v465 = vunpack.c.l.b16 %v449
      %v466 = vunpack.c.l.b16 %v450
      %v467 = vunpack.c.l.b16 %v451
      %v468 = vpack.c.b16 %v463, %v462
      %v469 = vpack.c.b16 %v465, %v464
      %v470 = vpack.c.b16 %v467, %v466
      %vm474 = vcmask 392192
      %v475 = vsel %vm474, %v439, 0
      %v477 = vsel %vm474, %v441, 0
      %v479 = vsel %vm474, %v443, 0
      %v481 = vsel %vm474, %v445, 0
      %483 = vmatpush.bf16.msra.mxu0 0
      %484 = vmatpush.bf16.msra.mxu0 0
      %485 = vmatpush.bf16.msra.mxu0 0
      %486 = vmatpush.bf16.msra.mxu0 0
      %487 = vmatpush.bf16.msra.mxu0 0
      %488 = vmatpush.bf16.msra.mxu0 %v470
      %489 = vmatpush.bf16.msra.mxu0 %v469
      %490 = vmatpush.bf16.msra.mxu0 %v468
      %491 = vmatmul.bf16.gmra.mxu0 %v475
      %v492 = vpop.f32.mrf.mxu0
      %v493 = vadd.f32 %v454, %v492
      %v494 = vpop.f32.mrf.mxu0
      %v495 = vadd.f32 %v454, %v494
      %496 = vmatmul.bf16.gmra.mxu0 %v477
      %v497 = vpop.f32.mrf.mxu0
      %v498 = vadd.f32 %v454, %v497
      %v499 = vpop.f32.mrf.mxu0
      %v500 = vadd.f32 %v454, %v499
      %501 = vmatmul.bf16.gmra.mxu0 %v479
      %v502 = vpop.f32.mrf.mxu0
      %v503 = vadd.f32 %v454, %v502
      %v504 = vpop.f32.mrf.mxu0
      %v505 = vadd.f32 %v454, %v504
      %506 = vmatmul.bf16.gmra.mxu0 %v481
      %v507 = vpop.f32.mrf.mxu0
      %v508 = vadd.f32 %v454, %v507
      %v509 = vpop.f32.mrf.mxu0
      %v510 = vadd.f32 %v454, %v509
      %511 = vdwg.mxu0
      %v512 = vmax.f32 %v493, 0.0
      %v513 = vmax.f32 %v495, 0.0
      %v514 = vmax.f32 %v498, 0.0
      %v515 = vmax.f32 %v500, 0.0
      %v516 = vmax.f32 %v503, 0.0
      %v517 = vmax.f32 %v505, 0.0
      %v518 = vmax.f32 %v508, 0.0
      %v519 = vmax.f32 %v510, 0.0
      %v520 = vpack.c.bf16 %v512, %v512
      %v521 = vpack.c.bf16 %v513, %v513
      %v522 = vpack.c.bf16 %v514, %v514
      %v523 = vpack.c.bf16 %v515, %v515
      %v524 = vpack.c.bf16 %v516, %v516
      %v525 = vpack.c.bf16 %v517, %v517
      %v526 = vpack.c.bf16 %v518, %v518
      %v527 = vpack.c.bf16 %v519, %v519
      %vm528 = vcmask 125952
      %529 = vst.msk [vmem:[%s321] sm:$0xf] %vm528, %v520
      %530 = vst.msk [vmem:[%s321 + $0x4] sm:$0xf] %vm528, %v521
      %531 = vst.msk [vmem:[%s321 + $0x8] sm:$0xf] %vm528, %v522
      %532 = vst.msk [vmem:[%s321 + $0xc] sm:$0xf] %vm528, %v523
      %533 = vst.msk [vmem:[%s321 + $0x10] sm:$0xf] %vm528, %v524
      %534 = vst.msk [vmem:[%s321 + $0x14] sm:$0xf] %vm528, %v525
      %535 = vst.msk [vmem:[%s321 + $0x18] sm:$0xf] %vm528, %v526
      %536 = vst.msk [vmem:[%s321 + $0x1c] sm:$0xf] %vm528, %v527
      %s537 = smul.u32 8, %s20
      %p538 = scmp.lt.s32.totalorder %s537, 15
      %s539 = scalar_select %p538, %s537, 15
      %p540 = scmp.lt.s32.totalorder %s21, 0
      %s541 = scalar_select %p540, %s21, 0
      %s542 = sadd.s32 %s541, %s539
      %s543 = smul.addr %s542, 4
      %s544 = scalar_lea.vmem %s5, %s543
      // Predicated region
      $region41: #{hg_stage_forward.12} parent=39 // pred_check
        %p545 = pneg %p178
      $region42: #{hg_stage_forward.12} parent=39 // pred_check_branch
        %547 = sbr.rel (%p545) target = $region44
      $region43: #{hg_stage_forward.12} parent=39 // pred_region
        %s548 = smul.u32 8, %s20
      $region44: #{hg_stage_forward.12} parent=39 // pred_fallthru
        _
    $region40: #{hg_stage_forward.12} parent=5 // pred_fallthru
      _
    %p549 = scmp.le.s32.totalorder 2, %s11
    // Predicated region
    $region45: #{hg_stage_forward.12} parent=5 // pred_check
      %p550 = pneg %p549
    $region46: #{hg_stage_forward.12} parent=5 // pred_check_branch
      %552 = sbr.rel (%p550) target = $region48
    $region47: #{hg_stage_forward.12} parent=5 // pred_region
      %s553 = ssub.s32 %s11, 2
      // Predicated region
      $region49: #{hg_stage_forward.12} parent=47 // pred_check
        %p554 = pneg %p184
      $region50: #{hg_stage_forward.12} parent=47 // pred_check_branch
        %556 = sbr.rel (%p554) target = $region52
      $region51: #{hg_stage_forward.12} parent=47 // pred_region
        %s557 = smul.u32 8, %s22
        %p558 = scmp.lt.s32.totalorder %s557, 15
        %s559 = scalar_select %p558, %s557, 15
        %p560 = scmp.lt.s32.totalorder %s23, 0
        %s561 = scalar_select %p560, %s23, 0
        %s562 = sadd.s32 %s561, %s559
        %s563 = smul.addr %s562, 4
        %s564 = scalar_lea.vmem %s5, %s563
      $region52: #{hg_stage_forward.12} parent=47 // pred_fallthru
        _
    $region48: #{hg_stage_forward.12} parent=5 // pred_fallthru
      _
  $region6: #{hg_stage_forward.12} parent=0 // loop_footer
    %s15 = sadd.s32 1, %s11
  $region7: #{hg_stage_forward.12} parent=0 // loop_footer_branch
    %10 = sbr.rel target = $region3
  $region8: #{hg_stage_forward.12} parent=0 // loop_exit
    _

// kernel: hg_stage_forward.9
$region0: #{hg_stage_forward.9}
  #allocation0 [shape = 'u32[]', space=smem, size = 0x4, offset = 0x4, fixed_abs, tag = 'smem constant byte address 0x4 - core index']
  #allocation1 [shape = 'u32[72,128]{1,0:T(1,128)}', space=vmem, size = 0x9000, scoped, tag = 'internal scratch']
  %s0 = inlined_call_operand.vmem [shape: bf16[2,9,9,16], index: 0, kind: input, shape index: {}]
  %s1 = inlined_call_operand.vmem [shape: bf16[2,9,9,16], index: 1, kind: input, shape index: {}]
  %s2 = inlined_call_operand.vmem [shape: bf16[2,9,9,16], index: 2, kind: input, shape index: {}]
  %s3 = inlined_call_operand.vmem [shape: bf16[2,9,9,16], index: 3, kind: input, shape index: {}]
  %s4 = inlined_call_operand.vmem [shape: f32[9,16], index: 4, kind: input, shape index: {}]
  %s5 = inlined_call_operand.vmem [shape: f32[1,16], index: 5, kind: input, shape index: {}]
  %s6 = inlined_call_operand.vmem [shape: bf16[2,8,8,16], index: 6, kind: output, shape index: {}]
  %s7 = sld [smem:[#allocation0]]
  $region57: #{hg_stage_forward.9} parent=0
    _
  %s9 = ssub.s32 1, %s7
  %s10 = scalar_select 0, %s9, %s7
  loop: start=0, step=1, limit=6
  $region2: #{hg_stage_forward.9} parent=0 // loop_pre_header
    _
  $region3: #{hg_stage_forward.9} parent=0 // loop_header
    %s12 = sphi 0, %s16
    %p13 = scmp.ge.s32.totalorder %s12, 6
    %s19 = sphi 0, %s31
    %s20 = sphi 0, %s27
    %s21 = sphi 0, %s19
    %s22 = sphi 0, %s20
    %s23 = sphi 0, %s21
    %s24 = sphi 0, %s22
    %s34 = sphi 0, %s36
    %s37 = sphi 0, %s34
    %s38 = sphi 0, %s37
    %s54 = sphi 0, %s38
    %s60 = sphi 0, %s62
    %s63 = sphi 0, %s60
    %s64 = sphi 0, %s63
    %s80 = sphi 0, %s64
    %s86 = sphi 0, %s88
    %s89 = sphi 0, %s86
    %s90 = sphi 0, %s89
    %s106 = sphi 0, %s90
    %s112 = sphi 0, %s114
    %s115 = sphi 0, %s112
    %s116 = sphi 0, %s115
    %s132 = sphi 0, %s116
    %s136 = sphi 0, %s136
    %s138 = sphi 0, %s136
    %s139 = sphi 0, %s138
    %s153 = sphi 0, %s139
    %s157 = sphi 0, %s157
    %s159 = sphi 0, %s157
    %s160 = sphi 0, %s159
    %s174 = sphi 0, %s160
    %s182 = sphi 0, %s184
    %s185 = sphi 0, %s182
    %s186 = sphi 0, %s185
    %s202 = sphi 0, %s186
  $region4: #{hg_stage_forward.9} parent=0 // loop_header_branch
    %15 = sbr.rel (%p13) target = $region8
  $region5: #{hg_stage_forward.9} parent=0 // loop_body
    %s17 = ssub.s32 %s12, 1
    %s18 = ssub.s32 %s12, 2
    %s25 = sadd.s32 1, %s20
    %p26 = scmp.ge.s32.totalorder %s25, 2
    %s27 = scalar_select %p26, 0, %s25
    %s28 = sadd.s32 1, %s19
    %s29 = scalar_select %p26, %s28, %s19
    %p30 = scmp.ge.s32.totalorder %s29, 2
    %s31 = scalar_select %p30, 0, %s29
    %s32 = ssub.s32 %s19, %s31
    %p33 = scmp.eq.s32.totalorder %s32, 0
    %s35 = sadd.s32 %s34, 1
    %s36 = scalar_select %p33, %s34, %s35
    %p39 = pneg %p33
    %p40 = scmp.eq.s32.totalorder %s12, 3
    %p41 = por %p39, %p40
    %p42 = scmp.ne.s32.totalorder %s34, %s37
    %p43 = scmp.eq.s32.totalorder %s12, 0
    %p44 = por %p42, %p43
    %p45 = scmp.ne.s32.totalorder %s34, %s37
    %p46 = scmp.eq.s32.totalorder %s17, 3
    %p47 = por %p45, %p46
    %p48 = scmp.ne.s32.totalorder %s37, %s38
    %p49 = scmp.eq.s32.totalorder %s17, 0
    %p50 = por %p48, %p49
    %p51 = scmp.ne.s32.totalorder %s37, %s38
    %p52 = scmp.eq.s32.totalorder %s18, 3
    %p53 = por %p51, %p52
    %p55 = scmp.ne.s32.totalorder %s38, %s54
    %p56 = scmp.eq.s32.totalorder %s18, 0
    %p57 = por %p55, %p56
    %s58 = ssub.s32 %s19, %s31
    %p59 = scmp.eq.s32.totalorder %s58, 0
    %s61 = sadd.s32 %s60, 1
    %s62 = scalar_select %p59, %s60, %s61
    %p65 = pneg %p59
    %p66 = scmp.eq.s32.totalorder %s12, 3
    %p67 = por %p65, %p66
    %p68 = scmp.ne.s32.totalorder %s60, %s63
    %p69 = scmp.eq.s32.totalorder %s12, 0
    %p70 = por %p68, %p69
    %p71 = scmp.ne.s32.totalorder %s60, %s63
    %p72 = scmp.eq.s32.totalorder %s17, 3
    %p73 = por %p71, %p72
    %p74 = scmp.ne.s32.totalorder %s63, %s64
    %p75 = scmp.eq.s32.totalorder %s17, 0
    %p76 = por %p74, %p75
    %p77 = scmp.ne.s32.totalorder %s63, %s64
    %p78 = scmp.eq.s32.totalorder %s18, 3
    %p79 = por %p77, %p78
    %p81 = scmp.ne.s32.totalorder %s64, %s80
    %p82 = scmp.eq.s32.totalorder %s18, 0
    %p83 = por %p81, %p82
    %s84 = ssub.s32 %s19, %s31
    %p85 = scmp.eq.s32.totalorder %s84, 0
    %s87 = sadd.s32 %s86, 1
    %s88 = scalar_select %p85, %s86, %s87
    %p91 = pneg %p85
    %p92 = scmp.eq.s32.totalorder %s12, 3
    %p93 = por %p91, %p92
    %p94 = scmp.ne.s32.totalorder %s86, %s89
    %p95 = scmp.eq.s32.totalorder %s12, 0
    %p96 = por %p94, %p95
    %p97 = scmp.ne.s32.totalorder %s86, %s89
    %p98 = scmp.eq.s32.totalorder %s17, 3
    %p99 = por %p97, %p98
    %p100 = scmp.ne.s32.totalorder %s89, %s90
    %p101 = scmp.eq.s32.totalorder %s17, 0
    %p102 = por %p100, %p101
    %p103 = scmp.ne.s32.totalorder %s89, %s90
    %p104 = scmp.eq.s32.totalorder %s18, 3
    %p105 = por %p103, %p104
    %p107 = scmp.ne.s32.totalorder %s90, %s106
    %p108 = scmp.eq.s32.totalorder %s18, 0
    %p109 = por %p107, %p108
    %s110 = ssub.s32 %s19, %s31
    %p111 = scmp.eq.s32.totalorder %s110, 0
    %s113 = sadd.s32 %s112, 1
    %s114 = scalar_select %p111, %s112, %s113
    %p117 = pneg %p111
    %p118 = scmp.eq.s32.totalorder %s12, 3
    %p119 = por %p117, %p118
    %p120 = scmp.ne.s32.totalorder %s112, %s115
    %p121 = scmp.eq.s32.totalorder %s12, 0
    %p122 = por %p120, %p121
    %p123 = scmp.ne.s32.totalorder %s112, %s115
    %p124 = scmp.eq.s32.totalorder %s17, 3
    %p125 = por %p123, %p124
    %p126 = scmp.ne.s32.totalorder %s115, %s116
    %p127 = scmp.eq.s32.totalorder %s17, 0
    %p128 = por %p126, %p127
    %p129 = scmp.ne.s32.totalorder %s115, %s116
    %p130 = scmp.eq.s32.totalorder %s18, 3
    %p131 = por %p129, %p130
    %p133 = scmp.ne.s32.totalorder %s116, %s132
    %p134 = scmp.eq.s32.totalorder %s18, 0
    %p135 = por %p133, %p134
    %s137 = sadd.s32 %s136, 1
    %p140 = scmp.eq.s32.totalorder %s12, 3
    %p141 = scmp.ne.s32.totalorder %s136, %s138
    %p142 = scmp.eq.s32.totalorder %s12, 0
    %p143 = por %p141, %p142
    %p144 = scmp.ne.s32.totalorder %s136, %s138
    %p145 = scmp.eq.s32.totalorder %s17, 3
    %p146 = por %p144, %p145
    %p147 = scmp.ne.s32.totalorder %s138, %s139
    %p148 = scmp.eq.s32.totalorder %s17, 0
    %p149 = por %p147, %p148
    %p150 = scmp.ne.s32.totalorder %s138, %s139
    %p151 = scmp.eq.s32.totalorder %s18, 3
    %p152 = por %p150, %p151
    %p154 = scmp.ne.s32.totalorder %s139, %s153
    %p155 = scmp.eq.s32.totalorder %s18, 0
    %p156 = por %p154, %p155
    %s158 = sadd.s32 %s157, 1
    %p161 = scmp.eq.s32.totalorder %s12, 3
    %p162 = scmp.ne.s32.totalorder %s157, %s159
    %p163 = scmp.eq.s32.totalorder %s12, 0
    %p164 = por %p162, %p163
    %p165 = scmp.ne.s32.totalorder %s157, %s159
    %p166 = scmp.eq.s32.totalorder %s17, 3
    %p167 = por %p165, %p166
    %p168 = scmp.ne.s32.totalorder %s159, %s160
    %p169 = scmp.eq.s32.totalorder %s17, 0
    %p170 = por %p168, %p169
    %p171 = scmp.ne.s32.totalorder %s159, %s160
    %p172 = scmp.eq.s32.totalorder %s18, 3
    %p173 = por %p171, %p172
    %p175 = scmp.ne.s32.totalorder %s160, %s174
    %p176 = scmp.eq.s32.totalorder %s18, 0
    %p177 = por %p175, %p176
    %s178 = ssub.s32 %s19, %s31
    %s179 = ssub.s32 %s20, %s27
    %s180 = sor.u32 %s178, %s179
    %p181 = scmp.eq.s32.totalorder %s180, 0
    %s183 = sadd.s32 %s182, 1
    %s184 = scalar_select %p181, %s182, %s183
    %p187 = pneg %p181
    %p188 = scmp.eq.s32.totalorder %s12, 3
    %p189 = por %p187, %p188
    %p190 = scmp.ne.s32.totalorder %s182, %s185
    %p191 = scmp.eq.s32.totalorder %s12, 0
    %p192 = por %p190, %p191
    %p193 = scmp.ne.s32.totalorder %s182, %s185
    %p194 = scmp.eq.s32.totalorder %s17, 3
    %p195 = por %p193, %p194
    %p196 = scmp.ne.s32.totalorder %s185, %s186
    %p197 = scmp.eq.s32.totalorder %s17, 0
    %p198 = por %p196, %p197
    %p199 = scmp.ne.s32.totalorder %s185, %s186
    %p200 = scmp.eq.s32.totalorder %s18, 3
    %p201 = por %p199, %p200
    %p203 = scmp.ne.s32.totalorder %s186, %s202
    %p204 = scmp.eq.s32.totalorder %s18, 0
    %p205 = por %p203, %p204
    %p206 = scmp.le.s32.totalorder 1, %s12
    %p207 = scmp.lt.s32.totalorder %s12, 5
    %p208 = pnand %p206, %p207
    %p209 = pneg %p208
    // Predicated region
    $region9: #{hg_stage_forward.9} parent=5 // pred_check
      _
    $region10: #{hg_stage_forward.9} parent=5 // pred_check_branch
      %211 = sbr.rel (%p208) target = $region12
    $region11: #{hg_stage_forward.9} parent=5 // pred_region
      %s212 = ssub.s32 %s12, 1
      // Predicated region
      $region13: #{hg_stage_forward.9} parent=11 // pred_check
        %p213 = pneg %p149
      $region14: #{hg_stage_forward.9} parent=11 // pred_check_branch
        %215 = sbr.rel (%p213) target = $region16
      $region15: #{hg_stage_forward.9} parent=11 // pred_region
        _
      $region16: #{hg_stage_forward.9} parent=11 // pred_fallthru
        _
      // Predicated region
      $region17: #{hg_stage_forward.9} parent=11 // pred_check
        %p216 = pneg %p170
      $region18: #{hg_stage_forward.9} parent=11 // pred_check_branch
        %218 = sbr.rel (%p216) target = $region20
      $region19: #{hg_stage_forward.9} parent=11 // pred_region
        _
      $region20: #{hg_stage_forward.9} parent=11 // pred_fallthru
        _
    $region12: #{hg_stage_forward.9} parent=5 // pred_fallthru
      _
    %p219 = scmp.lt.s32.totalorder %s12, 4
    // Predicated region
    $region21: #{hg_stage_forward.9} parent=5 // pred_check
      %p220 = pneg %p219
    $region22: #{hg_stage_forward.9} parent=5 // pred_check_branch
      %222 = sbr.rel (%p220) target = $region24
    $region23: #{hg_stage_forward.9} parent=5 // pred_region
      // Predicated region
      $region25: #{hg_stage_forward.9} parent=23 // pred_check
        %p223 = pneg %p44
      $region26: #{hg_stage_forward.9} parent=23 // pred_check_branch
        %225 = sbr.rel (%p223) target = $region28
      $region27: #{hg_stage_forward.9} parent=23 // pred_region
        %p226 = scmp.lt.s32.totalorder %s19, 1
        %s227 = scalar_select %p226, %s19, 1
        %s228 = smul.addr %s227, 18
        %s229 = smul.addr %s228, 4
        %s230 = scalar_lea.vmem %s0, %s229
      $region28: #{hg_stage_forward.9} parent=23 // pred_fallthru
        _
      // Predicated region
      $region29: #{hg_stage_forward.9} parent=23 // pred_check
        %p231 = pneg %p70
      $region30: #{hg_stage_forward.9} parent=23 // pred_check_branch
        %233 = sbr.rel (%p231) target = $region32
      $region31: #{hg_stage_forward.9} parent=23 // pred_region
        %p234 = scmp.lt.s32.totalorder %s19, 1
        %s235 = scalar_select %p234, %s19, 1
        %s236 = smul.addr %s235, 18
        %s237 = smul.addr %s236, 4
        %s238 = scalar_lea.vmem %s1, %s237
      $region32: #{hg_stage_forward.9} parent=23 // pred_fallthru
        _
      // Predicated region
      $region33: #{hg_stage_forward.9} parent=23 // pred_check
        %p239 = pneg %p96
      $region34: #{hg_stage_forward.9} parent=23 // pred_check_branch
        %241 = sbr.rel (%p239) target = $region36
      $region35: #{hg_stage_forward.9} parent=23 // pred_region
        %p242 = scmp.lt.s32.totalorder %s19, 1
        %s243 = scalar_select %p242, %s19, 1
        %s244 = smul.addr %s243, 18
        %s245 = smul.addr %s244, 4
        %s246 = scalar_lea.vmem %s2, %s245
      $region36: #{hg_stage_forward.9} parent=23 // pred_fallthru
        _
      // Predicated region
      $region37: #{hg_stage_forward.9} parent=23 // pred_check
        %p247 = pneg %p122
      $region38: #{hg_stage_forward.9} parent=23 // pred_check_branch
        %249 = sbr.rel (%p247) target = $region40
      $region39: #{hg_stage_forward.9} parent=23 // pred_region
        %p250 = scmp.lt.s32.totalorder %s19, 1
        %s251 = scalar_select %p250, %s19, 1
        %s252 = smul.addr %s251, 18
        %s253 = smul.addr %s252, 4
        %s254 = scalar_lea.vmem %s3, %s253
      $region40: #{hg_stage_forward.9} parent=23 // pred_fallthru
        _
    $region24: #{hg_stage_forward.9} parent=5 // pred_fallthru
      _
    %p255 = scmp.le.s32.totalorder 1, %s12
    %p256 = scmp.lt.s32.totalorder %s12, 5
    %p257 = pnand %p255, %p256
    %p258 = pneg %p257
    // Predicated region
    $region41: #{hg_stage_forward.9} parent=5 // pred_check
      _
    $region42: #{hg_stage_forward.9} parent=5 // pred_check_branch
      %260 = sbr.rel (%p257) target = $region44
    $region43: #{hg_stage_forward.9} parent=5 // pred_region
      %s261 = ssub.s32 %s12, 1
      %p262 = scmp.lt.s32.totalorder %s21, 1
      %s263 = scalar_select %p262, %s21, 1
      %s264 = smul.addr %s263, 18
      %s265 = smul.addr %s264, 4
      %s266 = scalar_lea.vmem %s0, %s265
      %p267 = pneg %p50
      %p268 = pneg %p47
      %p269 = scmp.lt.s32.totalorder %s21, 1
      %s270 = scalar_select %p269, %s21, 1
      %s271 = smul.addr %s270, 18
      %s272 = smul.addr %s271, 4
      %s273 = scalar_lea.vmem %s1, %s272
      %p274 = pneg %p76
      %p275 = pneg %p73
      %p276 = scmp.lt.s32.totalorder %s21, 1
      %s277 = scalar_select %p276, %s21, 1
      %s278 = smul.addr %s277, 18
      %s279 = smul.addr %s278, 4
      %s280 = scalar_lea.vmem %s2, %s279
      %p281 = pneg %p102
      %p282 = pneg %p99
      %p283 = scmp.lt.s32.totalorder %s21, 1
      %s284 = scalar_select %p283, %s21, 1
      %s285 = smul.addr %s284, 18
      %s286 = smul.addr %s285, 4
      %s287 = scalar_lea.vmem %s3, %s286
      %p288 = pneg %p128
      %p289 = pneg %p125
      %p290 = pneg %p149
      %p291 = pneg %p146
      %p292 = pneg %p170
      %p293 = pneg %p167
      %p294 = pneg %p198
      %p295 = pneg %p195
      %s296 = smul.u32 4, %s22
      %p297 = scmp.lt.s32.totalorder %s21, 1
      %s298 = scalar_select %p297, %s21, 1
      %p299 = scmp.lt.s32.totalorder %s296, 7
      %s300 = scalar_select %p299, %s296, 7
      %s301 = smul.addr %s298, 8
      %s302 = sadd.s32 %s300, %s301
      %s303 = smul.addr %s302, 4
      %s304 = scalar_lea.vmem %s6, %s303
      %p305 = scmp.lt.s32.totalorder %s21, 1
      %s306 = scalar_select %p305, %s21, 1
      %s307 = smul.addr %s306, 18
      %s308 = smul.addr %s307, 4
      %s309 = scalar_lea.vmem %s0, %s308
      %p310 = scmp.lt.s32.totalorder %s21, 1
      %s311 = scalar_select %p310, %s21, 1
      %s312 = smul.addr %s311, 18
      %s313 = smul.addr %s312, 4
      %s314 = scalar_lea.vmem %s1, %s313
      %p315 = scmp.lt.s32.totalorder %s21, 1
      %s316 = scalar_select %p315, %s21, 1
      %s317 = smul.addr %s316, 18
      %s318 = smul.addr %s317, 4
      %s319 = scalar_lea.vmem %s2, %s318
      %p320 = scmp.lt.s32.totalorder %s21, 1
      %s321 = scalar_select %p320, %s21, 1
      %s322 = smul.addr %s321, 18
      %s323 = smul.addr %s322, 4
      %s324 = scalar_lea.vmem %s3, %s323
      %s325 = smul.u32 4, %s22
      %p326 = scmp.lt.s32.totalorder %s21, 1
      %s327 = scalar_select %p326, %s21, 1
      %p328 = scmp.lt.s32.totalorder %s325, 7
      %s329 = scalar_select %p328, %s325, 7
      %s330 = smul.addr %s327, 8
      %s331 = sadd.s32 %s329, %s330
      %s332 = smul.addr %s331, 4
      %s333 = scalar_lea.vmem %s6, %s332
      %s334 = smul.u32 4, %s22
      %s335 = smul.u32 %s22, 4
      %v336 = vld [vmem:[%s4] sm:$0xff]
      %v337 = vld [vmem:[%s4 + $0x8] sm:$0x1]
      %s338 = smul.u32 %s335, 2
      %s339 = smul.addr %s338, 4
      %s340 = scalar_lea.vmem %s309, %s339
      %v341 = vld [vmem:[%s340] sm:$0xf]
      %v342 = vld [vmem:[%s340 + $0x4] sm:$0x1]
      %v343 = vld [vmem:[%s340 + $0x8] sm:$0xf]
      %v344 = vld [vmem:[%s340 + $0xc] sm:$0x1]
      %v345 = vld [vmem:[%s340 + $0x10] sm:$0xf]
      %v346 = vld [vmem:[%s340 + $0x14] sm:$0x1]
      %v347 = vld [vmem:[%s340 + $0x18] sm:$0xf]
      %v348 = vld [vmem:[%s340 + $0x1c] sm:$0x1]
      %v349 = vld [vmem:[%s340 + $0x20] sm:$0xf]
      %v350 = vld [vmem:[%s340 + $0x24] sm:$0x1]
      %v351 = vunpack.c.l.bf16 %v341
      %v352 = vunpack.c.l.bf16 %v342
      %v353 = vunpack.c.l.bf16 %v343
      %v354 = vunpack.c.l.bf16 %v344
      %v355 = vunpack.c.l.bf16 %v345
      %v356 = vunpack.c.l.bf16 %v346
      %v357 = vunpack.c.l.bf16 %v347
      %v358 = vunpack.c.l.bf16 %v348
      %v359 = vunpack.c.l.bf16 %v349
      %v360 = vunpack.c.l.bf16 %v350
      %s361 = smul.addr %s338, 4
      %s362 = scalar_lea.vmem %s314, %s361
      %v363 = vld [vmem:[%s362] sm:$0xf]
      %v364 = vld [vmem:[%s362 + $0x8] sm:$0xf]
      %v365 = vld [vmem:[%s362 + $0x10] sm:$0xf]
      %v366 = vld [vmem:[%s362 + $0x18] sm:$0xf]
      %v367 = vld [vmem:[%s362 + $0x20] sm:$0xf]
      %v368 = vunpack.c.l.bf16 %v363
      %v369 = vunpack.c.l.bf16 %v364
      %v370 = vunpack.c.l.bf16 %v365
      %v371 = vunpack.c.l.bf16 %v366
      %v372 = vunpack.c.l.bf16 %v367
      %s373 = smul.addr %s338, 4
      %s374 = scalar_lea.vmem %s319, %s373
      %v375 = vld [vmem:[%s374] sm:$0xf]
      %v376 = vld [vmem:[%s374 + $0x4] sm:$0x1]
      %v377 = vld [vmem:[%s374 + $0x8] sm:$0xf]
      %v378 = vld [vmem:[%s374 + $0xc] sm:$0x1]
      %v379 = vld [vmem:[%s374 + $0x10] sm:$0xf]
      %v380 = vld [vmem:[%s374 + $0x14] sm:$0x1]
      %v381 = vld [vmem:[%s374 + $0x18] sm:$0xf]
      %v382 = vld [vmem:[%s374 + $0x1c] sm:$0x1]
      %v383 = vunpack.c.l.bf16 %v375
      %v384 = vunpack.c.l.bf16 %v376
      %v385 = vunpack.c.l.bf16 %v377
      %v386 = vunpack.c.l.bf16 %v378
      %v387 = vunpack.c.l.bf16 %v379
      %v388 = vunpack.c.l.bf16 %v380
      %v389 = vunpack.c.l.bf16 %v381
      %v390 = vunpack.c.l.bf16 %v382
      %s391 = smul.addr %s338, 4
      %s392 = scalar_lea.vmem %s324, %s391
      %v393 = vld [vmem:[%s392] sm:$0xf]
      %v394 = vld [vmem:[%s392 + $0x8] sm:$0xf]
      %v395 = vld [vmem:[%s392 + $0x10] sm:$0xf]
      %v396 = vld [vmem:[%s392 + $0x18] sm:$0xf]
      %v397 = vunpack.c.l.bf16 %v393
      %v398 = vunpack.c.l.bf16 %v394
      %v399 = vunpack.c.l.bf16 %v395
      %v400 = vunpack.c.l.bf16 %v396
      %v401 = vperm.slane %v336, 0
      %v402 = vmul.f32 %v351, %v401
      %v403 = vmul.f32 %v353, %v401
      %v404 = vmul.f32 %v355, %v401
      %v405 = vmul.f32 %v357, %v401
      %v406 = vadd.f32 %v402, 0.0
      %v407 = vadd.f32 %v403, 0.0
      %v408 = vadd.f32 %v404, 0.0
      %v409 = vadd.f32 %v405, 0.0
      %v410 = vperm.slane %v336, 1
      %v411 = vmul.f32 %v368, %v410
      %v412 = vmul.f32 %v369, %v410
      %v413 = vmul.f32 %v370, %v410
      %v414 = vmul.f32 %v371, %v410
      %v415 = vadd.f32 %v406, %v411
      %v416 = vadd.f32 %v407, %v412
      %v417 = vadd.f32 %v408, %v413
      %v418 = vadd.f32 %v409, %v414
      %v419 = vperm.slane %v336, 2
      %v420 = vmul.f32 %v351, %v419
      %v421 = vmul.f32 %v352, %v419
      %v422 = vmul.f32 %v353, %v419
      %v423 = vmul.f32 %v354, %v419
      %v424 = vmul.f32 %v355, %v419
      %v425 = vmul.f32 %v356, %v419
      %v426 = vmul.f32 %v357, %v419
      %v427 = vmul.f32 %v358, %v419
      %vm436 = vcmask 1046528
      %v437 = vrot.slane %v420, 1
      %v438 = vrot.slane %v421, 1
      %v439 = vsel %vm436, %v437, %v438
      %v440 = vrot.slane %v422, 1
      %v441 = vrot.slane %v423, 1
      %v442 = vsel %vm436, %v440, %v441
      %v443 = vrot.slane %v424, 1
      %v444 = vrot.slane %v425, 1
      %v445 = vsel %vm436, %v443, %v444
      %v446 = vrot.slane %v426, 1
      %v447 = vrot.slane %v427, 1
      %v448 = vsel %vm436, %v446, %v447
      %v453 = vadd.f32 %v415, %v439
      %v454 = vadd.f32 %v416, %v442
      %v455 = vadd.f32 %v417, %v445
      %v456 = vadd.f32 %v418, %v448
      %v457 = vperm.slane %v336, 3
      %v458 = vmul.f32 %v383, %v457
      %v459 = vmul.f32 %v385, %v457
      %v460 = vmul.f32 %v387, %v457
      %v461 = vmul.f32 %v389, %v457
      %v462 = vadd.f32 %v453, %v458
      %v463 = vadd.f32 %v454, %v459
      %v464 = vadd.f32 %v455, %v460
      %v465 = vadd.f32 %v456, %v461
      %v466 = vperm.slane %v336, 4
      %v467 = vmul.f32 %v397, %v466
      %v468 = vmul.f32 %v398, %v466
      %v469 = vmul.f32 %v399, %v466
      %v470 = vmul.f32 %v400, %v466
      %v471 = vadd.f32 %v462, %v467
      %v472 = vadd.f32 %v463, %v468
      %v473 = vadd.f32 %v464, %v469
      %v474 = vadd.f32 %v465, %v470
      %v475 = vperm.slane %v336, 5
      %v476 = vmul.f32 %v383, %v475
      %v477 = vmul.f32 %v384, %v475
      %v478 = vmul.f32 %v385, %v475
      %v479 = vmul.f32 %v386, %v475
      %v480 = vmul.f32 %v387, %v475
      %v481 = vmul.f32 %v388, %v475
      %v482 = vmul.f32 %v389, %v475
      %v483 = vmul.f32 %v390, %v475
      %v492 = vrot.slane %v476, 1
      %v493 = vrot.slane %v477, 1
      %v494 = vsel %vm436, %v492, %v493
      %v495 = vrot.slane %v478, 1
      %v496 = vrot.slane %v479, 1
      %v497 = vsel %vm436, %v495, %v496
      %v498 = vrot.slane %v480, 1
      %v499 = vrot.slane %v481, 1
      %v500 = vsel %vm436, %v498, %v499
      %v501 = vrot.slane %v482, 1
      %v502 = vrot.slane %v483, 1
      %v503 = vsel %vm436, %v501, %v502
      %v508 = vadd.f32 %v471, %v494
      %v509 = vadd.f32 %v472, %v497
      %v510 = vadd.f32 %v473, %v500
      %v511 = vadd.f32 %v474, %v503
      %v512 = vperm.slane %v336, 6
      %v513 = vmul.f32 %v353, %v512
      %v514 = vmul.f32 %v355, %v512
      %v515 = vmul.f32 %v357, %v512
      %v516 = vmul.f32 %v359, %v512
      %v517 = vadd.f32 %v508, %v513
      %v518 = vadd.f32 %v509, %v514
      %v519 = vadd.f32 %v510, %v515
      %v520 = vadd.f32 %v511, %v516
      %v521 = vperm.slane %v336, 7
      %v522 = vmul.f32 %v369, %v521
      %v523 = vmul.f32 %v370, %v521
      %v524 = vmul.f32 %v371, %v521
      %v525 = vmul.f32 %v372, %v521
      %v526 = vadd.f32 %v517, %v522
      %v527 = vadd.f32 %v518, %v523
      %v528 = vadd.f32 %v519, %v524
      %v529 = vadd.f32 %v520, %v525
      %v530 = vperm.slane %v337, 0
      %v531 = vmul.f32 %v353, %v530
      %v532 = vmul.f32 %v354, %v530
      %v533 = vmul.f32 %v355, %v530
      %v534 = vmul.f32 %v356, %v530
      %v535 = vmul.f32 %v357, %v530
      %v536 = vmul.f32 %v358, %v530
      %v537 = vmul.f32 %v359, %v530
      %v538 = vmul.f32 %v360, %v530
      %v547 = vrot.slane %v531, 1
      %v548 = vrot.slane %v532, 1
      %v549 = vsel %vm436, %v547, %v548
      %v550 = vrot.slane %v533, 1
      %v551 = vrot.slane %v534, 1
      %v552 = vsel %vm436, %v550, %v551
      %v553 = vrot.slane %v535, 1
      %v554 = vrot.slane %v536, 1
      %v555 = vsel %vm436, %v553, %v554
      %v556 = vrot.slane %v537, 1
      %v557 = vrot.slane %v538, 1
      %v558 = vsel %vm436, %v556, %v557
      %v563 = vadd.f32 %v526, %v549
      %v564 = vadd.f32 %v527, %v552
      %v565 = vadd.f32 %v528, %v555
      %v566 = vadd.f32 %v529, %v558
      %v567 = vld [vmem:[%s5] sm:$0x1]
      %v569 = vperm.slane %v567, 0
      %v571 = vadd.f32 %v563, %v569
      %v572 = vadd.f32 %v564, %v569
      %v573 = vadd.f32 %v565, %v569
      %v574 = vadd.f32 %v566, %v569
      %v575 = vpack.c.bf16 %v571, %v571
      %v576 = vpack.c.bf16 %v572, %v572
      %v577 = vpack.c.bf16 %v573, %v573
      %v578 = vpack.c.bf16 %v574, %v574
      %vm579 = vcmask 125952
      %580 = vst.msk [vmem:[%s333] sm:$0xf] %vm579, %v575
      %581 = vst.msk [vmem:[%s333 + $0x4] sm:$0xf] %vm579, %v576
      %582 = vst.msk [vmem:[%s333 + $0x8] sm:$0xf] %vm579, %v577
      %583 = vst.msk [vmem:[%s333 + $0xc] sm:$0xf] %vm579, %v578
      %s584 = smul.u32 4, %s22
      %p585 = scmp.lt.s32.totalorder %s21, 1
      %s586 = scalar_select %p585, %s21, 1
      %p587 = scmp.lt.s32.totalorder %s584, 7
      %s588 = scalar_select %p587, %s584, 7
      %s589 = smul.addr %s586, 8
      %s590 = sadd.s32 %s588, %s589
      %s591 = smul.addr %s590, 4
      %s592 = scalar_lea.vmem %s6, %s591
      // Predicated region
      $region45: #{hg_stage_forward.9} parent=43 // pred_check
        %p593 = pneg %p195
      $region46: #{hg_stage_forward.9} parent=43 // pred_check_branch
        %595 = sbr.rel (%p593) target = $region48
      $region47: #{hg_stage_forward.9} parent=43 // pred_region
        %s596 = smul.u32 4, %s22
      $region48: #{hg_stage_forward.9} parent=43 // pred_fallthru
        _
    $region44: #{hg_stage_forward.9} parent=5 // pred_fallthru
      _
    %p597 = scmp.le.s32.totalorder 2, %s12
    // Predicated region
    $region49: #{hg_stage_forward.9} parent=5 // pred_check
      %p598 = pneg %p597
    $region50: #{hg_stage_forward.9} parent=5 // pred_check_branch
      %600 = sbr.rel (%p598) target = $region52
    $region51: #{hg_stage_forward.9} parent=5 // pred_region
      %s601 = ssub.s32 %s12, 2
      // Predicated region
      $region53: #{hg_stage_forward.9} parent=51 // pred_check
        %p602 = pneg %p201
      $region54: #{hg_stage_forward.9} parent=51 // pred_check_branch
        %604 = sbr.rel (%p602) target = $region56
      $region55: #{hg_stage_forward.9} parent=51 // pred_region
        %s605 = smul.u32 4, %s24
        %p606 = scmp.lt.s32.totalorder %s23, 1
        %s607 = scalar_select %p606, %s23, 1
        %p608 = scmp.lt.s32.totalorder %s605, 7
        %s609 = scalar_select %p608, %s605, 7
        %s610 = smul.addr %s607, 8
        %s611 = sadd.s32 %s609, %s610
        %s612 = smul.addr %s611, 4
        %s613 = scalar_lea.vmem %s6, %s612
      $region56: #{hg_stage_forward.9} parent=51 // pred_fallthru
        _
    $region52: #{hg_stage_forward.9} parent=5 // pred_fallthru
      _
  $region6: #{hg_stage_forward.9} parent=0 // loop_footer
    %s16 = sadd.s32 1, %s12
  $region7: #{hg_stage_forward.9} parent=0 // loop_footer_branch
    %11 = sbr.rel target = $region3
  $region8: #{hg_stage_forward.9} parent=0 // loop_exit
    _

// kernel: hg_stage_forward.10
$region0: #{hg_stage_forward.10}
  #allocation0 [shape = 'u32[]', space=smem, size = 0x4, offset = 0x4, fixed_abs, tag = 'smem constant byte address 0x4 - core index']
  #allocation1 [shape = 'u32[72,128]{1,0:T(1,128)}', space=vmem, size = 0x9000, scoped, tag = 'internal scratch']
  %s0 = inlined_call_operand.vmem [shape: bf16[2,10,10,16], index: 0, kind: input, shape index: {}]
  %s1 = inlined_call_operand.vmem [shape: bf16[3,48,16], index: 1, kind: input, shape index: {}]
  %s2 = inlined_call_operand.vmem [shape: f32[1,16], index: 2, kind: input, shape index: {}]
  %s3 = inlined_call_operand.vmem [shape: bf16[128,16], index: 3, kind: output, shape index: {}]
  %s4 = sld [smem:[#allocation0]]
  $region45: #{hg_stage_forward.10} parent=0
    _
  %s6 = ssub.s32 1, %s4
  %s7 = scalar_select 0, %s6, %s4
  loop: start=0, step=1, limit=6
  $region2: #{hg_stage_forward.10} parent=0 // loop_pre_header
    _
  $region3: #{hg_stage_forward.10} parent=0 // loop_header
    %s9 = sphi 0, %s13
    %p10 = scmp.ge.s32.totalorder %s9, 6
    %s16 = sphi 0, %s35
    %s17 = sphi 0, %s31
    %s18 = sphi 0, %s27
    %s19 = sphi 0, %s16
    %s20 = sphi 0, %s17
    %s21 = sphi 0, %s18
    %s22 = sphi 0, %s19
    %s23 = sphi 0, %s20
    %s24 = sphi 0, %s21
    %s38 = sphi 0, %s40
    %s41 = sphi 0, %s38
    %s42 = sphi 0, %s41
    %s58 = sphi 0, %s42
    %s64 = sphi 0, %s66
    %s67 = sphi 0, %s64
    %s68 = sphi 0, %s67
    %s84 = sphi 0, %s68
    %s90 = sphi 0, %s92
    %s93 = sphi 0, %s90
    %s94 = sphi 0, %s93
    %s110 = sphi 0, %s94
    %s122 = sphi 0, %s124
    %s125 = sphi 0, %s122
    %s126 = sphi 0, %s125
    %s142 = sphi 0, %s126
  $region4: #{hg_stage_forward.10} parent=0 // loop_header_branch
    %12 = sbr.rel (%p10) target = $region8
  $region5: #{hg_stage_forward.10} parent=0 // loop_body
    %s14 = ssub.s32 %s9, 1
    %s15 = ssub.s32 %s9, 2
    %s25 = sadd.s32 1, %s18
    %p26 = scmp.ge.s32.totalorder %s25, 1
    %s27 = scalar_select %p26, 0, %s25
    %s28 = sadd.s32 1, %s17
    %s29 = scalar_select %p26, %s28, %s17
    %p30 = scmp.ge.s32.totalorder %s29, 2
    %s31 = scalar_select %p30, 0, %s29
    %s32 = sadd.s32 1, %s16
    %s33 = scalar_select %p30, %s32, %s16
    %p34 = scmp.ge.s32.totalorder %s33, 2
    %s35 = scalar_select %p34, 0, %s33
    %s36 = ssub.s32 %s16, %s35
    %p37 = scmp.eq.s32.totalorder %s36, 0
    %s39 = sadd.s32 %s38, 1
    %s40 = scalar_select %p37, %s38, %s39
    %p43 = pneg %p37
    %p44 = scmp.eq.s32.totalorder %s9, 3
    %p45 = por %p43, %p44
    %p46 = scmp.ne.s32.totalorder %s38, %s41
    %p47 = scmp.eq.s32.totalorder %s9, 0
    %p48 = por %p46, %p47
    %p49 = scmp.ne.s32.totalorder %s38, %s41
    %p50 = scmp.eq.s32.totalorder %s14, 3
    %p51 = por %p49, %p50
    %p52 = scmp.ne.s32.totalorder %s41, %s42
    %p53 = scmp.eq.s32.totalorder %s14, 0
    %p54 = por %p52, %p53
    %p55 = scmp.ne.s32.totalorder %s41, %s42
    %p56 = scmp.eq.s32.totalorder %s15, 3
    %p57 = por %p55, %p56
    %p59 = scmp.ne.s32.totalorder %s42, %s58
    %p60 = scmp.eq.s32.totalorder %s15, 0
    %p61 = por %p59, %p60
    %s62 = ssub.s32 %s18, %s27
    %p63 = scmp.eq.s32.totalorder %s62, 0
    %s65 = sadd.s32 %s64, 1
    %s66 = scalar_select %p63, %s64, %s65
    %p69 = pneg %p63
    %p70 = scmp.eq.s32.totalorder %s9, 3
    %p71 = por %p69, %p70
    %p72 = scmp.ne.s32.totalorder %s64, %s67
    %p73 = scmp.eq.s32.totalorder %s9, 0
    %p74 = por %p72, %p73
    %p75 = scmp.ne.s32.totalorder %s64, %s67
    %p76 = scmp.eq.s32.totalorder %s14, 3
    %p77 = por %p75, %p76
    %p78 = scmp.ne.s32.totalorder %s67, %s68
    %p79 = scmp.eq.s32.totalorder %s14, 0
    %p80 = por %p78, %p79
    %p81 = scmp.ne.s32.totalorder %s67, %s68
    %p82 = scmp.eq.s32.totalorder %s15, 3
    %p83 = por %p81, %p82
    %p85 = scmp.ne.s32.totalorder %s68, %s84
    %p86 = scmp.eq.s32.totalorder %s15, 0
    %p87 = por %p85, %p86
    %s88 = ssub.s32 %s18, %s27
    %p89 = scmp.eq.s32.totalorder %s88, 0
    %s91 = sadd.s32 %s90, 1
    %s92 = scalar_select %p89, %s90, %s91
    %p95 = pneg %p89
    %p96 = scmp.eq.s32.totalorder %s9, 3
    %p97 = por %p95, %p96
    %p98 = scmp.ne.s32.totalorder %s90, %s93
    %p99 = scmp.eq.s32.totalorder %s9, 0
    %p100 = por %p98, %p99
    %p101 = scmp.ne.s32.totalorder %s90, %s93
    %p102 = scmp.eq.s32.totalorder %s14, 3
    %p103 = por %p101, %p102
    %p104 = scmp.ne.s32.totalorder %s93, %s94
    %p105 = scmp.eq.s32.totalorder %s14, 0
    %p106 = por %p104, %p105
    %p107 = scmp.ne.s32.totalorder %s93, %s94
    %p108 = scmp.eq.s32.totalorder %s15, 3
    %p109 = por %p107, %p108
    %p111 = scmp.ne.s32.totalorder %s94, %s110
    %p112 = scmp.eq.s32.totalorder %s15, 0
    %p113 = por %p111, %p112
    %s114 = smul.u32 %s16, 2
    %s115 = sadd.s32 %s114, %s17
    %s116 = smul.u32 %s35, 2
    %s117 = sadd.s32 %s116, %s31
    %s118 = ssub.s32 %s115, %s117
    %s119 = ssub.s32 %s18, %s27
    %s120 = sor.u32 %s118, %s119
    %p121 = scmp.eq.s32.totalorder %s120, 0
    %s123 = sadd.s32 %s122, 1
    %s124 = scalar_select %p121, %s122, %s123
    %p127 = pneg %p121
    %p128 = scmp.eq.s32.totalorder %s9, 3
    %p129 = por %p127, %p128
    %p130 = scmp.ne.s32.totalorder %s122, %s125
    %p131 = scmp.eq.s32.totalorder %s9, 0
    %p132 = por %p130, %p131
    %p133 = scmp.ne.s32.totalorder %s122, %s125
    %p134 = scmp.eq.s32.totalorder %s14, 3
    %p135 = por %p133, %p134
    %p136 = scmp.ne.s32.totalorder %s125, %s126
    %p137 = scmp.eq.s32.totalorder %s14, 0
    %p138 = por %p136, %p137
    %p139 = scmp.ne.s32.totalorder %s125, %s126
    %p140 = scmp.eq.s32.totalorder %s15, 3
    %p141 = por %p139, %p140
    %p143 = scmp.ne.s32.totalorder %s126, %s142
    %p144 = scmp.eq.s32.totalorder %s15, 0
    %p145 = por %p143, %p144
    %p146 = scmp.le.s32.totalorder 1, %s9
    %p147 = scmp.lt.s32.totalorder %s9, 5
    %p148 = pnand %p146, %p147
    %p149 = pneg %p148
    // Predicated region
    $region9: #{hg_stage_forward.10} parent=5 // pred_check
      _
    $region10: #{hg_stage_forward.10} parent=5 // pred_check_branch
      %151 = sbr.rel (%p148) target = $region12
    $region11: #{hg_stage_forward.10} parent=5 // pred_region
      %s152 = ssub.s32 %s9, 1
      // Predicated region
      $region13: #{hg_stage_forward.10} parent=11 // pred_check
        %p153 = pneg %p80
      $region14: #{hg_stage_forward.10} parent=11 // pred_check_branch
        %155 = sbr.rel (%p153) target = $region16
      $region15: #{hg_stage_forward.10} parent=11 // pred_region
        %p156 = scmp.lt.s32.totalorder %s21, 0
        %s157 = scalar_select %p156, %s21, 0
        %s158 = smul.addr %s157, 4
        %s159 = scalar_lea.vmem %s1, %s158
      $region16: #{hg_stage_forward.10} parent=11 // pred_fallthru
        _
      // Predicated region
      $region17: #{hg_stage_forward.10} parent=11 // pred_check
        %p160 = pneg %p106
      $region18: #{hg_stage_forward.10} parent=11 // pred_check_branch
        %162 = sbr.rel (%p160) target = $region20
      $region19: #{hg_stage_forward.10} parent=11 // pred_region
        %p163 = scmp.lt.s32.totalorder %s21, 0
        %s164 = scalar_select %p163, %s21, 0
        %s165 = scalar_lea.vmem %s2, %s164
      $region20: #{hg_stage_forward.10} parent=11 // pred_fallthru
        _
    $region12: #{hg_stage_forward.10} parent=5 // pred_fallthru
      _
    %p166 = scmp.lt.s32.totalorder %s9, 4
    // Predicated region
    $region21: #{hg_stage_forward.10} parent=5 // pred_check
      %p167 = pneg %p166
    $region22: #{hg_stage_forward.10} parent=5 // pred_check_branch
      %169 = sbr.rel (%p167) target = $region24
    $region23: #{hg_stage_forward.10} parent=5 // pred_region
      // Predicated region
      $region25: #{hg_stage_forward.10} parent=23 // pred_check
        %p170 = pneg %p48
      $region26: #{hg_stage_forward.10} parent=23 // pred_check_branch
        %172 = sbr.rel (%p170) target = $region28
      $region27: #{hg_stage_forward.10} parent=23 // pred_region
        %p173 = scmp.lt.s32.totalorder %s16, 1
        %s174 = scalar_select %p173, %s16, 1
        %s175 = smul.addr %s174, 20
        %s176 = smul.addr %s175, 4
        %s177 = scalar_lea.vmem %s0, %s176
      $region28: #{hg_stage_forward.10} parent=23 // pred_fallthru
        _
    $region24: #{hg_stage_forward.10} parent=5 // pred_fallthru
      _
    %p178 = scmp.le.s32.totalorder 1, %s9
    %p179 = scmp.lt.s32.totalorder %s9, 5
    %p180 = pnand %p178, %p179
    %p181 = pneg %p180
    // Predicated region
    $region29: #{hg_stage_forward.10} parent=5 // pred_check
      _
    $region30: #{hg_stage_forward.10} parent=5 // pred_check_branch
      %183 = sbr.rel (%p180) target = $region32
    $region31: #{hg_stage_forward.10} parent=5 // pred_region
      %s184 = ssub.s32 %s9, 1
      %p185 = scmp.lt.s32.totalorder %s19, 1
      %s186 = scalar_select %p185, %s19, 1
      %s187 = smul.addr %s186, 20
      %s188 = smul.addr %s187, 4
      %s189 = scalar_lea.vmem %s0, %s188
      %p190 = pneg %p54
      %p191 = pneg %p51
      %p192 = scmp.lt.s32.totalorder %s21, 0
      %s193 = scalar_select %p192, %s21, 0
      %s194 = smul.addr %s193, 4
      %s195 = scalar_lea.vmem %s1, %s194
      %p196 = pneg %p80
      %p197 = pneg %p77
      %p198 = scmp.lt.s32.totalorder %s21, 0
      %s199 = scalar_select %p198, %s21, 0
      %s200 = scalar_lea.vmem %s2, %s199
      %p201 = pneg %p106
      %p202 = pneg %p103
      %p203 = pneg %p138
      %p204 = pneg %p135
      %s205 = smul.u32 %s19, 2
      %s206 = sadd.s32 %s205, %s20
      %s207 = smul.u32 4, %s206
      %p208 = scmp.lt.s32.totalorder %s207, 15
      %s209 = scalar_select %p208, %s207, 15
      %p210 = scmp.lt.s32.totalorder %s21, 0
      %s211 = scalar_select %p210, %s21, 0
      %s212 = sadd.s32 %s211, %s209
      %s213 = smul.addr %s212, 4
      %s214 = scalar_lea.vmem %s3, %s213
      %p215 = scmp.lt.s32.totalorder %s19, 1
      %s216 = scalar_select %p215, %s19, 1
      %s217 = smul.addr %s216, 20
      %s218 = smul.addr %s217, 4
      %s219 = scalar_lea.vmem %s0, %s218
      %p220 = scmp.lt.s32.totalorder %s21, 0
      %s221 = scalar_select %p220, %s21, 0
      %s222 = smul.addr %s221, 4
      %s223 = scalar_lea.vmem %s1, %s222
      %p224 = scmp.lt.s32.totalorder %s21, 0
      %s225 = scalar_select %p224, %s21, 0
      %s226 = scalar_lea.vmem %s2, %s225
      %s227 = smul.u32 %s19, 2
      %s228 = sadd.s32 %s227, %s20
      %s229 = smul.u32 4, %s228
      %p230 = scmp.lt.s32.totalorder %s229, 15
      %s231 = scalar_select %p230, %s229, 15
      %p232 = scmp.lt.s32.totalorder %s21, 0
      %s233 = scalar_select %p232, %s21, 0
      %s234 = sadd.s32 %s233, %s231
      %s235 = smul.addr %s234, 4
      %s236 = scalar_lea.vmem %s3, %s235
      %s237 = smul.u32 %s19, 2
      %s238 = sadd.s32 %s237, %s20
      %s239 = smul.u32 4, %s238
      %s241 = smul.u32 %s20, 4
      %s242 = smul.u32 %s241, 2
      %s243 = smul.addr %s242, 4
      %s244 = scalar_lea.vmem %s219, %s243
      %v245 = vld [vmem:[%s244] sm:$0xf]
      %v246 = vld [vmem:[%s244 + $0x4] sm:$0x1]
      %v247 = vld [vmem:[%s244 + $0x8] sm:$0xf]
      %v248 = vld [vmem:[%s244 + $0xc] sm:$0x1]
      %v249 = vld [vmem:[%s244 + $0x10] sm:$0xf]
      %v250 = vld [vmem:[%s244 + $0x14] sm:$0x1]
      %v251 = vld [vmem:[%s244 + $0x18] sm:$0xf]
      %v252 = vld [vmem:[%s244 + $0x1c] sm:$0x1]
      %v261 = vunpack.c.l.b16 %v245
      %v262 = vunpack.c.l.b16 %v246
      %v263 = vunpack.c.l.b16 %v247
      %v264 = vunpack.c.l.b16 %v248
      %v265 = vunpack.c.l.b16 %v249
      %v266 = vunpack.c.l.b16 %v250
      %v267 = vunpack.c.l.b16 %v251
      %v268 = vunpack.c.l.b16 %v252
      %v269 = vpack.c.b16 %v262, %v261
      %v270 = vpack.c.b16 %v264, %v263
      %v271 = vpack.c.b16 %v266, %v265
      %v272 = vpack.c.b16 %v268, %v267
      %v274 = vshrl.u32 %v269, 16
      %v276 = vshll.u32 %v269, 16
      %v278 = vrot.slane %v276, 1
      %v279 = vor.u32 %v274, %v278
      %v281 = vshrl.u32 %v270, 16
      %v283 = vshll.u32 %v270, 16
      %v285 = vrot.slane %v283, 1
      %v286 = vor.u32 %v281, %v285
      %v288 = vshrl.u32 %v271, 16
      %v290 = vshll.u32 %v271, 16
      %v292 = vrot.slane %v290, 1
      %v293 = vor.u32 %v288, %v292
      %v295 = vshrl.u32 %v272, 16
      %v297 = vshll.u32 %v272, 16
      %v299 = vrot.slane %v297, 1
      %v300 = vor.u32 %v295, %v299
      %301 = vrot.lane.b32.xlu0 %v279, 16
      %v302 = vpop.permute.xlu0 %301
      %303 = vrot.lane.b32.xlu0 %v286, 16
      %v304 = vpop.permute.xlu0 %303
      %305 = vrot.lane.b32.xlu0 %v293, 16
      %v306 = vpop.permute.xlu0 %305
      %307 = vrot.lane.b32.xlu0 %v300, 16
      %v308 = vpop.permute.xlu0 %307
      %v309 = vrot.slane %v269, 1
      %v310 = vrot.slane %v270, 1
      %v311 = vrot.slane %v271, 1
      %v312 = vrot.slane %v272, 1
      %313 = vrot.lane.b32.xlu0 %v309, 32
      %v314 = vpop.permute.xlu0 %313
      %315 = vrot.lane.b32.xlu0 %v310, 32
      %v316 = vpop.permute.xlu0 %315
      %317 = vrot.lane.b32.xlu0 %v311, 32
      %v318 = vpop.permute.xlu0 %317
      %319 = vrot.lane.b32.xlu0 %v312, 32
      %v320 = vpop.permute.xlu0 %319
      %vm321 = vcmask 130048
      %v324 = vsel %vm321, %v245, %v302
      %v327 = vsel %vm321, %v247, %v304
      %v330 = vsel %vm321, %v249, %v306
      %v333 = vsel %vm321, %v251, %v308
      %vm334 = vcmask 261120
      %v336 = vsel %vm334, %v324, %v314
      %v338 = vsel %vm334, %v327, %v316
      %v340 = vsel %vm334, %v330, %v318
      %v342 = vsel %vm334, %v333, %v320
      %v343 = vld [vmem:[%s223] sm:$0xf]
      %v344 = vld [vmem:[%s223 + $0x4] sm:$0xf]
      %v345 = vld [vmem:[%s223 + $0x8] sm:$0xf]
      %v346 = vld [vmem:[%s223 + $0xc] sm:$0xf]
      %v347 = vld [vmem:[%s223 + $0x10] sm:$0xf]
      %v348 = vld [vmem:[%s223 + $0x14] sm:$0xf]
      %s349 = sadd.s32 %s241, 1
      %s350 = smul.u32 %s349, 2
      %s351 = smul.addr %s350, 4
      %s352 = scalar_lea.vmem %s219, %s351
      %v353 = vld [vmem:[%s352] sm:$0xf]
      %v354 = vld [vmem:[%s352 + $0x4] sm:$0x1]
      %v355 = vld [vmem:[%s352 + $0x8] sm:$0xf]
      %v356 = vld [vmem:[%s352 + $0xc] sm:$0x1]
      %v357 = vld [vmem:[%s352 + $0x10] sm:$0xf]
      %v358 = vld [vmem:[%s352 + $0x14] sm:$0x1]
      %v359 = vld [vmem:[%s352 + $0x18] sm:$0xf]
      %v360 = vld [vmem:[%s352 + $0x1c] sm:$0x1]
      %v369 = vunpack.c.l.b16 %v353
      %v370 = vunpack.c.l.b16 %v354
      %v371 = vunpack.c.l.b16 %v355
      %v372 = vunpack.c.l.b16 %v356
      %v373 = vunpack.c.l.b16 %v357
      %v374 = vunpack.c.l.b16 %v358
      %v375 = vunpack.c.l.b16 %v359
      %v376 = vunpack.c.l.b16 %v360
      %v377 = vpack.c.b16 %v370, %v369
      %v378 = vpack.c.b16 %v372, %v371
      %v379 = vpack.c.b16 %v374, %v373
      %v380 = vpack.c.b16 %v376, %v375
      %v382 = vshrl.u32 %v377, 16
      %v384 = vshll.u32 %v377, 16
      %v386 = vrot.slane %v384, 1
      %v387 = vor.u32 %v382, %v386
      %v389 = vshrl.u32 %v378, 16
      %v391 = vshll.u32 %v378, 16
      %v393 = vrot.slane %v391, 1
      %v394 = vor.u32 %v389, %v393
      %v396 = vshrl.u32 %v379, 16
      %v398 = vshll.u32 %v379, 16
      %v400 = vrot.slane %v398, 1
      %v401 = vor.u32 %v396, %v400
      %v403 = vshrl.u32 %v380, 16
      %v405 = vshll.u32 %v380, 16
      %v407 = vrot.slane %v405, 1
      %v408 = vor.u32 %v403, %v407
      %409 = vrot.lane.b32.xlu0 %v387, 16
      %v410 = vpop.permute.xlu0 %409
      %411 = vrot.lane.b32.xlu0 %v394, 16
      %v412 = vpop.permute.xlu0 %411
      %413 = vrot.lane.b32.xlu0 %v401, 16
      %v414 = vpop.permute.xlu0 %413
      %415 = vrot.lane.b32.xlu0 %v408, 16
      %v416 = vpop.permute.xlu0 %415
      %v417 = vrot.slane %v377, 1
      %v418 = vrot.slane %v378, 1
      %v419 = vrot.slane %v379, 1
      %v420 = vrot.slane %v380, 1
      %421 = vrot.lane.b32.xlu0 %v417, 32
      %v422 = vpop.permute.xlu0 %421
      %423 = vrot.lane.b32.xlu0 %v418, 32
      %v424 = vpop.permute.xlu0 %423
      %425 = vrot.lane.b32.xlu0 %v419, 32
      %v426 = vpop.permute.xlu0 %425
      %427 = vrot.lane.b32.xlu0 %v420, 32
      %v428 = vpop.permute.xlu0 %427
      %v431 = vsel %vm321, %v353, %v410
      %v434 = vsel %vm321, %v355, %v412
      %v437 = vsel %vm321, %v357, %v414
      %v440 = vsel %vm321, %v359, %v416
      %v442 = vsel %vm334, %v431, %v422
      %v444 = vsel %vm334, %v434, %v424
      %v446 = vsel %vm334, %v437, %v426
      %v448 = vsel %vm334, %v440, %v428
      %s449 = scalar_lea.vmem %s223, 24
      %v450 = vld [vmem:[%s449] sm:$0xf]
      %v451 = vld [vmem:[%s449 + $0x4] sm:$0xf]
      %v452 = vld [vmem:[%s449 + $0x8] sm:$0xf]
      %v453 = vld [vmem:[%s449 + $0xc] sm:$0xf]
      %v454 = vld [vmem:[%s449 + $0x10] sm:$0xf]
      %v455 = vld [vmem:[%s449 + $0x14] sm:$0xf]
      %v460 = vunpack.c.l.b16 %v442
      %v461 = vunpack.c.l.b16 %v444
      %v462 = vunpack.c.l.b16 %v446
      %v463 = vunpack.c.l.b16 %v448
      %v464 = vpack.c.b16 %v461, %v460
      %v465 = vpack.c.b16 %v463, %v462
      %v472 = vunpack.c.l.b16 %v450
      %v473 = vunpack.c.l.b16 %v451
      %v474 = vunpack.c.l.b16 %v452
      %v475 = vunpack.c.l.b16 %v453
      %v476 = vunpack.c.l.b16 %v454
      %v477 = vunpack.c.l.b16 %v455
      %v478 = vpack.c.b16 %v473, %v472
      %v479 = vpack.c.b16 %v475, %v474
      %v480 = vpack.c.b16 %v477, %v476
      %vm484 = vcmask 392192
      %v486 = vsel %vm484, %v464, 0
      %v489 = vsel %vm484, %v465, 0
      %491 = vmatpush.bf16.msra.mxu0 0
      %492 = vmatpush.bf16.msra.mxu0 0
      %493 = vmatpush.bf16.msra.mxu0 0
      %494 = vmatpush.bf16.msra.mxu0 0
      %495 = vmatpush.bf16.msra.mxu0 0
      %496 = vmatpush.bf16.msra.mxu0 %v480
      %497 = vmatpush.bf16.msra.mxu0 %v479
      %498 = vmatpush.bf16.msra.mxu0 %v478
      %499 = vmatmul.bf16.gmra.mxu0 %v486
      %v500 = vpop.f32.mrf.mxu0
      %v501 = vadd.f32 0.0, %v500
      %v502 = vpop.f32.mrf.mxu0
      %v503 = vadd.f32 0.0, %v502
      %504 = vmatmul.bf16.gmra.mxu0 %v489
      %v505 = vpop.f32.mrf.mxu0
      %v506 = vadd.f32 0.0, %v505
      %v507 = vpop.f32.mrf.mxu0
      %v508 = vadd.f32 0.0, %v507
      %509 = vdwg.mxu0
      %v514 = vunpack.c.l.b16 %v336
      %v515 = vunpack.c.l.b16 %v338
      %v516 = vunpack.c.l.b16 %v340
      %v517 = vunpack.c.l.b16 %v342
      %v518 = vpack.c.b16 %v515, %v514
      %v519 = vpack.c.b16 %v517, %v516
      %v526 = vunpack.c.l.b16 %v343
      %v527 = vunpack.c.l.b16 %v344
      %v528 = vunpack.c.l.b16 %v345
      %v529 = vunpack.c.l.b16 %v346
      %v530 = vunpack.c.l.b16 %v347
      %v531 = vunpack.c.l.b16 %v348
      %v532 = vpack.c.b16 %v527, %v526
      %v533 = vpack.c.b16 %v529, %v528
      %v534 = vpack.c.b16 %v531, %v530
      %v539 = vsel %vm484, %v518, 0
      %v542 = vsel %vm484, %v519, 0
      %544 = vmatpush.bf16.msra.mxu0 0
      %545 = vmatpush.bf16.msra.mxu0 0
      %546 = vmatpush.bf16.msra.mxu0 0
      %547 = vmatpush.bf16.msra.mxu0 0
      %548 = vmatpush.bf16.msra.mxu0 0
      %549 = vmatpush.bf16.msra.mxu0 %v534
      %550 = vmatpush.bf16.msra.mxu0 %v533
      %551 = vmatpush.bf16.msra.mxu0 %v532
      %552 = vmatmul.bf16.gmra.mxu0 %v539
      %v553 = vpop.f32.mrf.mxu0
      %v554 = vadd.f32 %v501, %v553
      %v555 = vpop.f32.mrf.mxu0
      %v556 = vadd.f32 %v503, %v555
      %557 = vmatmul.bf16.gmra.mxu0 %v542
      %v558 = vpop.f32.mrf.mxu0
      %v559 = vadd.f32 %v506, %v558
      %v560 = vpop.f32.mrf.mxu0
      %v561 = vadd.f32 %v508, %v560
      %562 = vdwg.mxu0
      %s563 = sadd.s32 %s241, 2
      %s564 = smul.u32 %s563, 2
      %s565 = smul.addr %s564, 4
      %s566 = scalar_lea.vmem %s219, %s565
      %v567 = vld [vmem:[%s566] sm:$0xf]
      %v568 = vld [vmem:[%s566 + $0x4] sm:$0x1]
      %v569 = vld [vmem:[%s566 + $0x8] sm:$0xf]
      %v570 = vld [vmem:[%s566 + $0xc] sm:$0x1]
      %v571 = vld [vmem:[%s566 + $0x10] sm:$0xf]
      %v572 = vld [vmem:[%s566 + $0x14] sm:$0x1]
      %v573 = vld [vmem:[%s566 + $0x18] sm:$0xf]
      %v574 = vld [vmem:[%s566 + $0x1c] sm:$0x1]
      %v583 = vunpack.c.l.b16 %v567
      %v584 = vunpack.c.l.b16 %v568
      %v585 = vunpack.c.l.b16 %v569
      %v586 = vunpack.c.l.b16 %v570
      %v587 = vunpack.c.l.b16 %v571
      %v588 = vunpack.c.l.b16 %v572
      %v589 = vunpack.c.l.b16 %v573
      %v590 = vunpack.c.l.b16 %v574
      %v591 = vpack.c.b16 %v584, %v583
      %v592 = vpack.c.b16 %v586, %v585
      %v593 = vpack.c.b16 %v588, %v587
      %v594 = vpack.c.b16 %v590, %v589
      %v596 = vshrl.u32 %v591, 16
      %v598 = vshll.u32 %v591, 16
      %v600 = vrot.slane %v598, 1
      %v601 = vor.u32 %v596, %v600
      %v603 = vshrl.u32 %v592, 16
      %v605 = vshll.u32 %v592, 16
      %v607 = vrot.slane %v605, 1
      %v608 = vor.u32 %v603, %v607
      %v610 = vshrl.u32 %v593, 16
      %v612 = vshll.u32 %v593, 16
      %v614 = vrot.slane %v612, 1
      %v615 = vor.u32 %v610, %v614
      %v617 = vshrl.u32 %v594, 16
      %v619 = vshll.u32 %v594, 16
      %v621 = vrot.slane %v619, 1
      %v622 = vor.u32 %v617, %v621
      %623 = vrot.lane.b32.xlu0 %v601, 16
      %v624 = vpop.permute.xlu0 %623
      %625 = vrot.lane.b32.xlu0 %v608, 16
      %v626 = vpop.permute.xlu0 %625
      %627 = vrot.lane.b32.xlu0 %v615, 16
      %v628 = vpop.permute.xlu0 %627
      %629 = vrot.lane.b32.xlu0 %v622, 16
      %v630 = vpop.permute.xlu0 %629
      %v631 = vrot.slane %v591, 1
      %v632 = vrot.slane %v592, 1
      %v633 = vrot.slane %v593, 1
      %v634 = vrot.slane %v594, 1
      %635 = vrot.lane.b32.xlu0 %v631, 32
      %v636 = vpop.permute.xlu0 %635
      %637 = vrot.lane.b32.xlu0 %v632, 32
      %v638 = vpop.permute.xlu0 %637
      %639 = vrot.lane.b32.xlu0 %v633, 32
      %v640 = vpop.permute.xlu0 %639
      %641 = vrot.lane.b32.xlu0 %v634, 32
      %v642 = vpop.permute.xlu0 %641
      %v645 = vsel %vm321, %v567, %v624
      %v648 = vsel %vm321, %v569, %v626
      %v651 = vsel %vm321, %v571, %v628
      %v654 = vsel %vm321, %v573, %v630
      %v656 = vsel %vm334, %v645, %v636
      %v658 = vsel %vm334, %v648, %v638
      %v660 = vsel %vm334, %v651, %v640
      %v662 = vsel %vm334, %v654, %v642
      %s663 = scalar_lea.vmem %s223, 48
      %v664 = vld [vmem:[%s663] sm:$0xf]
      %v665 = vld [vmem:[%s663 + $0x4] sm:$0xf]
      %v666 = vld [vmem:[%s663 + $0x8] sm:$0xf]
      %v667 = vld [vmem:[%s663 + $0xc] sm:$0xf]
      %v668 = vld [vmem:[%s663 + $0x10] sm:$0xf]
      %v669 = vld [vmem:[%s663 + $0x14] sm:$0xf]
      %v674 = vunpack.c.l.b16 %v656
      %v675 = vunpack.c.l.b16 %v658
      %v676 = vunpack.c.l.b16 %v660
      %v677 = vunpack.c.l.b16 %v662
      %v678 = vpack.c.b16 %v675, %v674
      %v679 = vpack.c.b16 %v677, %v676
      %v686 = vunpack.c.l.b16 %v664
      %v687 = vunpack.c.l.b16 %v665
      %v688 = vunpack.c.l.b16 %v666
      %v689 = vunpack.c.l.b16 %v667
      %v690 = vunpack.c.l.b16 %v668
      %v691 = vunpack.c.l.b16 %v669
      %v692 = vpack.c.b16 %v687, %v686
      %v693 = vpack.c.b16 %v689, %v688
      %v694 = vpack.c.b16 %v691, %v690
      %v699 = vsel %vm484, %v678, 0
      %v702 = vsel %vm484, %v679, 0
      %704 = vmatpush.bf16.msra.mxu0 0
      %705 = vmatpush.bf16.msra.mxu0 0
      %706 = vmatpush.bf16.msra.mxu0 0
      %707 = vmatpush.bf16.msra.mxu0 0
      %708 = vmatpush.bf16.msra.mxu0 0
      %709 = vmatpush.bf16.msra.mxu0 %v694
      %710 = vmatpush.bf16.msra.mxu0 %v693
      %711 = vmatpush.bf16.msra.mxu0 %v692
      %712 = vmatmul.bf16.gmra.mxu0 %v699
      %v713 = vpop.f32.mrf.mxu0
      %v714 = vadd.f32 0.0, %v713
      %v715 = vpop.f32.mrf.mxu0
      %v716 = vadd.f32 0.0, %v715
      %717 = vmatmul.bf16.gmra.mxu0 %v702
      %v718 = vpop.f32.mrf.mxu0
      %v719 = vadd.f32 0.0, %v718
      %v720 = vpop.f32.mrf.mxu0
      %v721 = vadd.f32 0.0, %v720
      %722 = vdwg.mxu0
      %v723 = vadd.f32 %v554, %v714
      %v724 = vadd.f32 %v556, %v716
      %v725 = vadd.f32 %v559, %v719
      %v726 = vadd.f32 %v561, %v721
      %v727 = vld [vmem:[%s226] sm:$0x1]
      %v729 = vperm.slane %v727, 0
      %v731 = vadd.f32 %v723, %v729
      %v732 = vadd.f32 %v724, %v729
      %v733 = vadd.f32 %v725, %v729
      %v734 = vadd.f32 %v726, %v729
      %v735 = vmax.f32 %v731, 0.0
      %v736 = vmax.f32 %v732, 0.0
      %v737 = vmax.f32 %v733, 0.0
      %v738 = vmax.f32 %v734, 0.0
      %v739 = vpack.c.bf16 %v735, %v735
      %v740 = vpack.c.bf16 %v736, %v736
      %v741 = vpack.c.bf16 %v737, %v737
      %v742 = vpack.c.bf16 %v738, %v738
      %vm743 = vcmask 125952
      %744 = vst.msk [vmem:[%s236] sm:$0xf] %vm743, %v739
      %745 = vst.msk [vmem:[%s236 + $0x4] sm:$0xf] %vm743, %v740
      %746 = vst.msk [vmem:[%s236 + $0x8] sm:$0xf] %vm743, %v741
      %747 = vst.msk [vmem:[%s236 + $0xc] sm:$0xf] %vm743, %v742
      %s748 = smul.u32 %s19, 2
      %s749 = sadd.s32 %s748, %s20
      %s750 = smul.u32 4, %s749
      %p751 = scmp.lt.s32.totalorder %s750, 15
      %s752 = scalar_select %p751, %s750, 15
      %p753 = scmp.lt.s32.totalorder %s21, 0
      %s754 = scalar_select %p753, %s21, 0
      %s755 = sadd.s32 %s754, %s752
      %s756 = smul.addr %s755, 4
      %s757 = scalar_lea.vmem %s3, %s756
      // Predicated region
      $region33: #{hg_stage_forward.10} parent=31 // pred_check
        %p758 = pneg %p135
      $region34: #{hg_stage_forward.10} parent=31 // pred_check_branch
        %760 = sbr.rel (%p758) target = $region36
      $region35: #{hg_stage_forward.10} parent=31 // pred_region
        %s761 = smul.u32 %s19, 2
        %s762 = sadd.s32 %s761, %s20
        %s763 = smul.u32 4, %s762
      $region36: #{hg_stage_forward.10} parent=31 // pred_fallthru
        _
    $region32: #{hg_stage_forward.10} parent=5 // pred_fallthru
      _
    %p764 = scmp.le.s32.totalorder 2, %s9
    // Predicated region
    $region37: #{hg_stage_forward.10} parent=5 // pred_check
      %p765 = pneg %p764
    $region38: #{hg_stage_forward.10} parent=5 // pred_check_branch
      %767 = sbr.rel (%p765) target = $region40
    $region39: #{hg_stage_forward.10} parent=5 // pred_region
      %s768 = ssub.s32 %s9, 2
      // Predicated region
      $region41: #{hg_stage_forward.10} parent=39 // pred_check
        %p769 = pneg %p141
      $region42: #{hg_stage_forward.10} parent=39 // pred_check_branch
        %771 = sbr.rel (%p769) target = $region44
      $region43: #{hg_stage_forward.10} parent=39 // pred_region
        %s772 = smul.u32 %s22, 2
        %s773 = sadd.s32 %s772, %s23
        %s774 = smul.u32 4, %s773
        %p775 = scmp.lt.s32.totalorder %s774, 15
        %s776 = scalar_select %p775, %s774, 15
        %p777 = scmp.lt.s32.totalorder %s24, 0
        %s778 = scalar_select %p777, %s24, 0
        %s779 = sadd.s32 %s778, %s776
        %s780 = smul.addr %s779, 4
        %s781 = scalar_lea.vmem %s3, %s780
      $region44: #{hg_stage_forward.10} parent=39 // pred_fallthru
        _
    $region40: #{hg_stage_forward.10} parent=5 // pred_fallthru
      _
  $region6: #{hg_stage_forward.10} parent=0 // loop_footer
    %s13 = sadd.s32 1, %s9
  $region7: #{hg_stage_forward.10} parent=0 // loop_footer_branch
    %8 = sbr.rel target = $region3
  $region8: #{hg_stage_forward.10} parent=0 // loop_exit
    _

// kernel: hg_stage_forward.17
$region0: #{hg_stage_forward.17}
  #allocation0 [shape = 'u32[]', space=smem, size = 0x4, offset = 0x4, fixed_abs, tag = 'smem constant byte address 0x4 - core index']
  #allocation1 [shape = 'u32[72,128]{1,0:T(1,128)}', space=vmem, size = 0x9000, scoped, tag = 'internal scratch']
  %s0 = inlined_call_operand.vmem [shape: bf16[128,16], index: 0, kind: input, shape index: {}]
  %s1 = inlined_call_operand.vmem [shape: bf16[16,32], index: 1, kind: input, shape index: {}]
  %s2 = inlined_call_operand.vmem [shape: f32[1,32], index: 2, kind: input, shape index: {}]
  %s3 = inlined_call_operand.vmem [shape: bf16[128,32], index: 3, kind: input, shape index: {}]
  %s4 = inlined_call_operand.hbm [shape: f32[128,32], index: 4, kind: output, shape index: {}]
  %s5 = sld [smem:[#allocation0]]
  $region49: #{hg_stage_forward.17} parent=0
    _
  %s7 = ssub.s32 1, %s5
  %s8 = scalar_select 0, %s7, %s5
  $region1: #{hg_stage_forward.17} parent=0
    #allocation2 [shape = 'u8[65536]{0}', space=vmem, size = 0x10000, scoped, tag = 'output window, operand 0']
    #allocation3 [shape = 's32[2]{0}', space=sflag, size = 0x8, scoped, tag = 'scoped memory for hg_stage_forward.17']
    %9 = vsyncpa [#allocation3], 0
    %s10 = scalar_lea.sflag [#allocation3], 1
    %11 = vsyncpa %s10, 0
    loop: start=0, step=1, limit=4
    $region2: #{hg_stage_forward.17} parent=1 // loop_pre_header
      _
    $region3: #{hg_stage_forward.17} parent=1 // loop_header
      %s13 = sphi 0, %s17
      %p14 = scmp.ge.s32.totalorder %s13, 4
      %s20 = sphi 0, %s32
      %s21 = sphi 0, %s28
      %s22 = sphi 0, %s20
      %s23 = sphi 0, %s21
      %s24 = sphi 0, %s22
      %s25 = sphi 0, %s23
      %s35 = sphi 0, %s37
      %s38 = sphi 0, %s35
      %s39 = sphi 0, %s38
      %s55 = sphi 0, %s39
      %s61 = sphi 0, %s63
      %s64 = sphi 0, %s61
      %s65 = sphi 0, %s64
      %s81 = sphi 0, %s65
      %s87 = sphi 0, %s89
      %s90 = sphi 0, %s87
      %s91 = sphi 0, %s90
      %s107 = sphi 0, %s91
      %s115 = sphi 0, %s117
      %s118 = sphi 0, %s115
      %s119 = sphi 0, %s118
      %s135 = sphi 0, %s119
      %s143 = sphi 0, %s145
      %s146 = sphi 0, %s143
      %s147 = sphi 0, %s146
      %s163 = sphi 0, %s147
    $region4: #{hg_stage_forward.17} parent=1 // loop_header_branch
      %16 = sbr.rel (%p14) target = $region8
    $region5: #{hg_stage_forward.17} parent=1 // loop_body
      %s18 = ssub.s32 %s13, 1
      %s19 = ssub.s32 %s13, 2
      %s26 = sadd.s32 1, %s21
      %p27 = scmp.ge.s32.totalorder %s26, 1
      %s28 = scalar_select %p27, 0, %s26
      %s29 = sadd.s32 1, %s20
      %s30 = scalar_select %p27, %s29, %s20
      %p31 = scmp.ge.s32.totalorder %s30, 2
      %s32 = scalar_select %p31, 0, %s30
      %s33 = ssub.s32 %s20, %s32
      %p34 = scmp.eq.s32.totalorder %s33, 0
      %s36 = sadd.s32 %s35, 1
      %s37 = scalar_select %p34, %s35, %s36
      %p40 = pneg %p34
      %p41 = scmp.eq.s32.totalorder %s13, 1
      %p42 = por %p40, %p41
      %p43 = scmp.ne.s32.totalorder %s35, %s38
      %p44 = scmp.eq.s32.totalorder %s13, 0
      %p45 = por %p43, %p44
      %p46 = scmp.ne.s32.totalorder %s35, %s38
      %p47 = scmp.eq.s32.totalorder %s18, 1
      %p48 = por %p46, %p47
      %p49 = scmp.ne.s32.totalorder %s38, %s39
      %p50 = scmp.eq.s32.totalorder %s18, 0
      %p51 = por %p49, %p50
      %p52 = scmp.ne.s32.totalorder %s38, %s39
      %p53 = scmp.eq.s32.totalorder %s19, 1
      %p54 = por %p52, %p53
      %p56 = scmp.ne.s32.totalorder %s39, %s55
      %p57 = scmp.eq.s32.totalorder %s19, 0
      %p58 = por %p56, %p57
      %s59 = ssub.s32 %s21, %s28
      %p60 = scmp.eq.s32.totalorder %s59, 0
      %s62 = sadd.s32 %s61, 1
      %s63 = scalar_select %p60, %s61, %s62
      %p66 = pneg %p60
      %p67 = scmp.eq.s32.totalorder %s13, 1
      %p68 = por %p66, %p67
      %p69 = scmp.ne.s32.totalorder %s61, %s64
      %p70 = scmp.eq.s32.totalorder %s13, 0
      %p71 = por %p69, %p70
      %p72 = scmp.ne.s32.totalorder %s61, %s64
      %p73 = scmp.eq.s32.totalorder %s18, 1
      %p74 = por %p72, %p73
      %p75 = scmp.ne.s32.totalorder %s64, %s65
      %p76 = scmp.eq.s32.totalorder %s18, 0
      %p77 = por %p75, %p76
      %p78 = scmp.ne.s32.totalorder %s64, %s65
      %p79 = scmp.eq.s32.totalorder %s19, 1
      %p80 = por %p78, %p79
      %p82 = scmp.ne.s32.totalorder %s65, %s81
      %p83 = scmp.eq.s32.totalorder %s19, 0
      %p84 = por %p82, %p83
      %s85 = ssub.s32 %s21, %s28
      %p86 = scmp.eq.s32.totalorder %s85, 0
      %s88 = sadd.s32 %s87, 1
      %s89 = scalar_select %p86, %s87, %s88
      %p92 = pneg %p86
      %p93 = scmp.eq.s32.totalorder %s13, 1
      %p94 = por %p92, %p93
      %p95 = scmp.ne.s32.totalorder %s87, %s90
      %p96 = scmp.eq.s32.totalorder %s13, 0
      %p97 = por %p95, %p96
      %p98 = scmp.ne.s32.totalorder %s87, %s90
      %p99 = scmp.eq.s32.totalorder %s18, 1
      %p100 = por %p98, %p99
      %p101 = scmp.ne.s32.totalorder %s90, %s91
      %p102 = scmp.eq.s32.totalorder %s18, 0
      %p103 = por %p101, %p102
      %p104 = scmp.ne.s32.totalorder %s90, %s91
      %p105 = scmp.eq.s32.totalorder %s19, 1
      %p106 = por %p104, %p105
      %p108 = scmp.ne.s32.totalorder %s91, %s107
      %p109 = scmp.eq.s32.totalorder %s19, 0
      %p110 = por %p108, %p109
      %s111 = ssub.s32 %s20, %s32
      %s112 = ssub.s32 %s21, %s28
      %s113 = sor.u32 %s111, %s112
      %p114 = scmp.eq.s32.totalorder %s113, 0
      %s116 = sadd.s32 %s115, 1
      %s117 = scalar_select %p114, %s115, %s116
      %p120 = pneg %p114
      %p121 = scmp.eq.s32.totalorder %s13, 1
      %p122 = por %p120, %p121
      %p123 = scmp.ne.s32.totalorder %s115, %s118
      %p124 = scmp.eq.s32.totalorder %s13, 0
      %p125 = por %p123, %p124
      %p126 = scmp.ne.s32.totalorder %s115, %s118
      %p127 = scmp.eq.s32.totalorder %s18, 1
      %p128 = por %p126, %p127
      %p129 = scmp.ne.s32.totalorder %s118, %s119
      %p130 = scmp.eq.s32.totalorder %s18, 0
      %p131 = por %p129, %p130
      %p132 = scmp.ne.s32.totalorder %s118, %s119
      %p133 = scmp.eq.s32.totalorder %s19, 1
      %p134 = por %p132, %p133
      %p136 = scmp.ne.s32.totalorder %s119, %s135
      %p137 = scmp.eq.s32.totalorder %s19, 0
      %p138 = por %p136, %p137
      %s139 = ssub.s32 %s20, %s32
      %s140 = ssub.s32 %s21, %s28
      %s141 = sor.u32 %s139, %s140
      %p142 = scmp.eq.s32.totalorder %s141, 0
      %s144 = sadd.s32 %s143, 1
      %s145 = scalar_select %p142, %s143, %s144
      %p148 = pneg %p142
      %p149 = scmp.eq.s32.totalorder %s13, 1
      %p150 = por %p148, %p149
      %p151 = scmp.ne.s32.totalorder %s143, %s146
      %p152 = scmp.eq.s32.totalorder %s13, 0
      %p153 = por %p151, %p152
      %p154 = scmp.ne.s32.totalorder %s143, %s146
      %p155 = scmp.eq.s32.totalorder %s18, 1
      %p156 = por %p154, %p155
      %p157 = scmp.ne.s32.totalorder %s146, %s147
      %p158 = scmp.eq.s32.totalorder %s18, 0
      %p159 = por %p157, %p158
      %p160 = scmp.ne.s32.totalorder %s146, %s147
      %p161 = scmp.eq.s32.totalorder %s19, 1
      %p162 = por %p160, %p161
      %p164 = scmp.ne.s32.totalorder %s147, %s163
      %p165 = scmp.eq.s32.totalorder %s19, 0
      %p166 = por %p164, %p165
      %p167 = scmp.le.s32.totalorder 1, %s13
      %p168 = scmp.lt.s32.totalorder %s13, 3
      %p169 = pnand %p167, %p168
      %p170 = pneg %p169
      // Predicated region
      $region9: #{hg_stage_forward.17} parent=5 // pred_check
        _
      $region10: #{hg_stage_forward.17} parent=5 // pred_check_branch
        %172 = sbr.rel (%p169) target = $region12
      $region11: #{hg_stage_forward.17} parent=5 // pred_region
        %s173 = ssub.s32 %s13, 1
        // Predicated region
        $region13: #{hg_stage_forward.17} parent=11 // pred_check
          %p174 = pneg %p77
        $region14: #{hg_stage_forward.17} parent=11 // pred_check_branch
          %176 = sbr.rel (%p174) target = $region16
        $region15: #{hg_stage_forward.17} parent=11 // pred_region
          %p177 = scmp.lt.s32.totalorder %s23, 0
          %s178 = scalar_select %p177, %s23, 0
          %s179 = smul.addr %s178, 4
          %s180 = scalar_lea.vmem %s1, %s179
        $region16: #{hg_stage_forward.17} parent=11 // pred_fallthru
          _
        // Predicated region
        $region17: #{hg_stage_forward.17} parent=11 // pred_check
          %p181 = pneg %p103
        $region18: #{hg_stage_forward.17} parent=11 // pred_check_branch
          %183 = sbr.rel (%p181) target = $region20
        $region19: #{hg_stage_forward.17} parent=11 // pred_region
          %p184 = scmp.lt.s32.totalorder %s23, 0
          %s185 = scalar_select %p184, %s23, 0
          %s186 = scalar_lea.vmem %s2, %s185
        $region20: #{hg_stage_forward.17} parent=11 // pred_fallthru
          _
      $region12: #{hg_stage_forward.17} parent=5 // pred_fallthru
        _
      %p187 = scmp.lt.s32.totalorder %s13, 2
      // Predicated region
      $region21: #{hg_stage_forward.17} parent=5 // pred_check
        %p188 = pneg %p187
      $region22: #{hg_stage_forward.17} parent=5 // pred_check_branch
        %190 = sbr.rel (%p188) target = $region24
      $region23: #{hg_stage_forward.17} parent=5 // pred_region
        // Predicated region
        $region25: #{hg_stage_forward.17} parent=23 // pred_check
          %p191 = pneg %p45
        $region26: #{hg_stage_forward.17} parent=23 // pred_check_branch
          %193 = sbr.rel (%p191) target = $region28
        $region27: #{hg_stage_forward.17} parent=23 // pred_region
          %s194 = smul.u32 8, %s20
          %p195 = scmp.lt.s32.totalorder %s194, 15
          %s196 = scalar_select %p195, %s194, 15
          %s197 = smul.addr %s196, 4
          %s198 = scalar_lea.vmem %s0, %s197
          %s199 = smul.u32 8, %s20
        $region28: #{hg_stage_forward.17} parent=23 // pred_fallthru
          _
        // Predicated region
        $region29: #{hg_stage_forward.17} parent=23 // pred_check
          %p200 = pneg %p125
        $region30: #{hg_stage_forward.17} parent=23 // pred_check_branch
          %202 = sbr.rel (%p200) target = $region32
        $region31: #{hg_stage_forward.17} parent=23 // pred_region
          %s203 = smul.u32 8, %s20
          %p204 = scmp.lt.s32.totalorder %s203, 15
          %s205 = scalar_select %p204, %s203, 15
          %p206 = scmp.lt.s32.totalorder %s21, 0
          %s207 = scalar_select %p206, %s21, 0
          %s208 = sadd.s32 %s207, %s205
          %s209 = smul.addr %s208, 4
          %s210 = scalar_lea.vmem %s3, %s209
          %s211 = smul.u32 8, %s20
        $region32: #{hg_stage_forward.17} parent=23 // pred_fallthru
          _
      $region24: #{hg_stage_forward.17} parent=5 // pred_fallthru
        _
      %p212 = scmp.le.s32.totalorder 1, %s13
      %p213 = scmp.lt.s32.totalorder %s13, 3
      %p214 = pnand %p212, %p213
      %p215 = pneg %p214
      // Predicated region
      $region33: #{hg_stage_forward.17} parent=5 // pred_check
        _
      $region34: #{hg_stage_forward.17} parent=5 // pred_check_branch
        %217 = sbr.rel (%p214) target = $region36
      $region35: #{hg_stage_forward.17} parent=5 // pred_region
        %s218 = ssub.s32 %s13, 1
        %s219 = smul.u32 8, %s22
        %p220 = scmp.lt.s32.totalorder %s219, 15
        %s221 = scalar_select %p220, %s219, 15
        %s222 = smul.addr %s221, 4
        %s223 = scalar_lea.vmem %s0, %s222
        %p224 = pneg %p51
        %p225 = pneg %p48
        %p226 = scmp.lt.s32.totalorder %s23, 0
        %s227 = scalar_select %p226, %s23, 0
        %s228 = smul.addr %s227, 4
        %s229 = scalar_lea.vmem %s1, %s228
        %p230 = pneg %p77
        %p231 = pneg %p74
        %p232 = scmp.lt.s32.totalorder %s23, 0
        %s233 = scalar_select %p232, %s23, 0
        %s234 = scalar_lea.vmem %s2, %s233
        %p235 = pneg %p103
        %p236 = pneg %p100
        %s237 = smul.u32 8, %s22
        %p238 = scmp.lt.s32.totalorder %s237, 15
        %s239 = scalar_select %p238, %s237, 15
        %p240 = scmp.lt.s32.totalorder %s23, 0
        %s241 = scalar_select %p240, %s23, 0
        %s242 = sadd.s32 %s241, %s239
        %s243 = smul.addr %s242, 4
        %s244 = scalar_lea.vmem %s3, %s243
        %p245 = pneg %p131
        %p246 = pneg %p128
        %p247 = pneg %p159
        %p248 = pneg %p156
        %s249 = sand.u32 %s146, 1
        %s250 = scalar_lea.sflag [#allocation3], %s249
        %s251 = sand.u32 %s146, 1
        %s252 = smul.addr %s251, 64
        %s253 = scalar_lea.vmem [#allocation2], %s252
        %s254 = smul.u32 8, %s22
        %p255 = scmp.lt.s32.totalorder %s254, 15
        %s256 = scalar_select %p255, %s254, 15
        %s257 = smul.addr %s256, 4
        %s258 = scalar_lea.vmem %s0, %s257
        %s259 = smul.u32 8, %s22
        %p260 = scmp.lt.s32.totalorder %s23, 0
        %s261 = scalar_select %p260, %s23, 0
        %s262 = smul.addr %s261, 4
        %s263 = scalar_lea.vmem %s1, %s262
        %p264 = scmp.lt.s32.totalorder %s23, 0
        %s265 = scalar_select %p264, %s23, 0
        %s266 = scalar_lea.vmem %s2, %s265
        %s267 = smul.u32 8, %s22
        %p268 = scmp.lt.s32.totalorder %s267, 15
        %s269 = scalar_select %p268, %s267, 15
        %p270 = scmp.lt.s32.totalorder %s23, 0
        %s271 = scalar_select %p270, %s23, 0
        %s272 = sadd.s32 %s271, %s269
        %s273 = smul.addr %s272, 4
        %s274 = scalar_lea.vmem %s3, %s273
        %s275 = smul.u32 8, %s22
        %s276 = smul.u32 8, %s22
        %v278 = vld [vmem:[%s258] sm:$0xf]
        %v279 = vld [vmem:[%s258 + $0x4] sm:$0xf]
        %v280 = vld [vmem:[%s258 + $0x8] sm:$0xf]
        %v281 = vld [vmem:[%s258 + $0xc] sm:$0xf]
        %v282 = vld [vmem:[%s258 + $0x10] sm:$0xf]
        %v283 = vld [vmem:[%s258 + $0x14] sm:$0xf]
        %v284 = vld [vmem:[%s258 + $0x18] sm:$0xf]
        %v285 = vld [vmem:[%s258 + $0x1c] sm:$0xf]
        %v286 = vld [vmem:[%s263] sm:$0xf]
        %v287 = vld [vmem:[%s263 + $0x4] sm:$0xf]
        %v288 = vld [vmem:[%s266] sm:$0x1]
        %v290 = vperm.slane %v288, 0
        %v300 = vunpack.c.l.b16 %v278
        %v301 = vunpack.c.l.b16 %v279
        %v302 = vunpack.c.l.b16 %v280
        %v303 = vunpack.c.l.b16 %v281
        %v304 = vunpack.c.l.b16 %v282
        %v305 = vunpack.c.l.b16 %v283
        %v306 = vunpack.c.l.b16 %v284
        %v307 = vunpack.c.l.b16 %v285
        %v308 = vpack.c.b16 %v301, %v300
        %v309 = vpack.c.b16 %v303, %v302
        %v310 = vpack.c.b16 %v305, %v304
        %v311 = vpack.c.b16 %v307, %v306
        %v314 = vunpack.c.l.b16 %v286
        %v315 = vunpack.c.l.b16 %v287
        %v316 = vpack.c.b16 %v315, %v314
        %vm318 = vcmask 130048
        %v320 = vsel %vm318, %v308, 0
        %v323 = vsel %vm318, %v309, 0
        %v326 = vsel %vm318, %v310, 0
        %v329 = vsel %vm318, %v311, 0
        %331 = vmatpush.bf16.msra.mxu0 0
        %332 = vmatpush.bf16.msra.mxu0 0
        %333 = vmatpush.bf16.msra.mxu0 0
        %334 = vmatpush.bf16.msra.mxu0 0
        %335 = vmatpush.bf16.msra.mxu0 0
        %336 = vmatpush.bf16.msra.mxu0 0
        %337 = vmatpush.bf16.msra.mxu0 0
        %338 = vmatpush.bf16.msra.mxu0 %v316
        %339 = vmatmul.bf16.gmra.mxu0 %v320
        %v340 = vpop.f32.mrf.mxu0
        %v341 = vadd.f32 %v290, %v340
        %v342 = vpop.f32.mrf.mxu0
        %v343 = vadd.f32 %v290, %v342
        %344 = vmatmul.bf16.gmra.mxu0 %v323
        %v345 = vpop.f32.mrf.mxu0
        %v346 = vadd.f32 %v290, %v345
        %v347 = vpop.f32.mrf.mxu0
        %v348 = vadd.f32 %v290, %v347
        %349 = vmatmul.bf16.gmra.mxu0 %v326
        %v350 = vpop.f32.mrf.mxu0
        %v351 = vadd.f32 %v290, %v350
        %v352 = vpop.f32.mrf.mxu0
        %v353 = vadd.f32 %v290, %v352
        %354 = vmatmul.bf16.gmra.mxu0 %v329
        %v355 = vpop.f32.mrf.mxu0
        %v356 = vadd.f32 %v290, %v355
        %v357 = vpop.f32.mrf.mxu0
        %v358 = vadd.f32 %v290, %v357
        %359 = vdwg.mxu0
        %v360 = vmax.f32 %v341, 0.0
        %v361 = vmax.f32 %v343, 0.0
        %v362 = vmax.f32 %v346, 0.0
        %v363 = vmax.f32 %v348, 0.0
        %v364 = vmax.f32 %v351, 0.0
        %v365 = vmax.f32 %v353, 0.0
        %v366 = vmax.f32 %v356, 0.0
        %v367 = vmax.f32 %v358, 0.0
        %v368 = vld [vmem:[%s274] sm:$0xf]
        %v369 = vld [vmem:[%s274 + $0x4] sm:$0xf]
        %v370 = vld [vmem:[%s274 + $0x8] sm:$0xf]
        %v371 = vld [vmem:[%s274 + $0xc] sm:$0xf]
        %v372 = vld [vmem:[%s274 + $0x10] sm:$0xf]
        %v373 = vld [vmem:[%s274 + $0x14] sm:$0xf]
        %v374 = vld [vmem:[%s274 + $0x18] sm:$0xf]
        %v375 = vld [vmem:[%s274 + $0x1c] sm:$0xf]
        %v376 = vunpack.c.l.bf16 %v368
        %v377 = vunpack.c.l.bf16 %v369
        %v378 = vunpack.c.l.bf16 %v370
        %v379 = vunpack.c.l.bf16 %v371
        %v380 = vunpack.c.l.bf16 %v372
        %v381 = vunpack.c.l.bf16 %v373
        %v382 = vunpack.c.l.bf16 %v374
        %v383 = vunpack.c.l.bf16 %v375
        %v384 = vadd.f32 %v360, %v376
        %v385 = vadd.f32 %v361, %v377
        %v386 = vadd.f32 %v362, %v378
        %v387 = vadd.f32 %v363, %v379
        %v388 = vadd.f32 %v364, %v380
        %v389 = vadd.f32 %v365, %v381
        %v390 = vadd.f32 %v366, %v382
        %v391 = vadd.f32 %v367, %v383
        %vm392 = vcmask 261120
        %393 = vst.msk [vmem:[%s253] sm:$0xff] %vm392, %v384
        %394 = vst.msk [vmem:[%s253 + $0x8] sm:$0xff] %vm392, %v385
        %395 = vst.msk [vmem:[%s253 + $0x10] sm:$0xff] %vm392, %v386
        %396 = vst.msk [vmem:[%s253 + $0x18] sm:$0xff] %vm392, %v387
        %397 = vst.msk [vmem:[%s253 + $0x20] sm:$0xff] %vm392, %v388
        %398 = vst.msk [vmem:[%s253 + $0x28] sm:$0xff] %vm392, %v389
        %399 = vst.msk [vmem:[%s253 + $0x30] sm:$0xff] %vm392, %v390
        %400 = vst.msk [vmem:[%s253 + $0x38] sm:$0xff] %vm392, %v391
        %s401 = sand.u32 %s146, 1
        %s402 = scalar_lea.sflag [#allocation3], %s401
        %s403 = sand.u32 %s146, 1
        %s404 = smul.addr %s403, 64
        %s405 = scalar_lea.vmem [#allocation2], %s404
        // Predicated region
        $region37: #{hg_stage_forward.17} parent=35 // pred_check
          %p406 = pneg %p156
        $region38: #{hg_stage_forward.17} parent=35 // pred_check_branch
          %408 = sbr.rel (%p406) target = $region40
        $region39: #{hg_stage_forward.17} parent=35 // pred_region
          %s409 = smul.u32 8, %s22
          %411 = vsyncadd %s402, 0
          %s412 = sadd.s32 %s23, %s409
          %s413 = smul.addr %s412, 8
          %s414 = scalar_lea.hbm %s4, %s413
          %s415 = sshll.u32 %s405, 4
          %s416 = int_to_ptr.vmem [resolvable:$true] %s415
          %s417 = sshll.u32 %s414, 4
          %s418 = int_to_ptr.hbm [resolvable:$true] %s417
          %423 = dma.vmem_to_hbm [thread:$0]  %s416, 1024, %s418, %s402, 128, 128, 8
        $region40: #{hg_stage_forward.17} parent=35 // pred_fallthru
          _
      $region36: #{hg_stage_forward.17} parent=5 // pred_fallthru
        _
      %p424 = scmp.le.s32.totalorder 2, %s13
      // Predicated region
      $region41: #{hg_stage_forward.17} parent=5 // pred_check
        %p425 = pneg %p424
      $region42: #{hg_stage_forward.17} parent=5 // pred_check_branch
        %427 = sbr.rel (%p425) target = $region44
      $region43: #{hg_stage_forward.17} parent=5 // pred_region
        %s428 = ssub.s32 %s13, 2
        // Predicated region
        $region45: #{hg_stage_forward.17} parent=43 // pred_check
          %p429 = pneg %p162
        $region46: #{hg_stage_forward.17} parent=43 // pred_check_branch
          %431 = sbr.rel (%p429) target = $region48
        $region47: #{hg_stage_forward.17} parent=43 // pred_region
          %s432 = sand.u32 %s147, 1
          %s433 = scalar_lea.sflag [#allocation3], %s432
          %s434 = sand.u32 %s147, 1
          %s435 = smul.addr %s434, 64
          %s436 = scalar_lea.vmem [#allocation2], %s435
          %438 = dma.done %s433, 1024
        $region48: #{hg_stage_forward.17} parent=43 // pred_fallthru
          _
      $region44: #{hg_stage_forward.17} parent=5 // pred_fallthru
        _
    $region6: #{hg_stage_forward.17} parent=1 // loop_footer
      %s17 = sadd.s32 1, %s13
    $region7: #{hg_stage_forward.17} parent=1 // loop_footer_branch
      %12 = sbr.rel target = $region3
    $region8: #{hg_stage_forward.17} parent=1 // loop_exit
      _
    %439 = vsyncpa [#allocation3], 1
    %s440 = scalar_lea.sflag [#allocation3], 1
    %441 = vsyncpa %s440, 1

// kernel: hg_stage_forward.16
$region0: #{hg_stage_forward.16}
  #allocation0 [shape = 'u32[]', space=smem, size = 0x4, offset = 0x4, fixed_abs, tag = 'smem constant byte address 0x4 - core index']
  #allocation1 [shape = 'u32[72,128]{1,0:T(1,128)}', space=vmem, size = 0x9000, scoped, tag = 'internal scratch']
  %s0 = inlined_call_operand.vmem [shape: bf16[128,32], index: 0, kind: input, shape index: {}]
  %s1 = inlined_call_operand.vmem [shape: bf16[128,16], index: 1, kind: input, shape index: {}]
  %s2 = inlined_call_operand.vmem [shape: bf16[128,16], index: 2, kind: input, shape index: {}]
  %s3 = inlined_call_operand.vmem [shape: bf16[64,16], index: 3, kind: input, shape index: {}]
  %s4 = inlined_call_operand.vmem [shape: f32[1,16], index: 4, kind: input, shape index: {}]
  %s5 = inlined_call_operand.vmem [shape: bf16[128,16], index: 5, kind: output, shape index: {}]
  %s6 = sld [smem:[#allocation0]]
  $region53: #{hg_stage_forward.16} parent=0
    _
  %s8 = ssub.s32 1, %s6
  %s9 = scalar_select 0, %s8, %s6
  loop: start=0, step=1, limit=4
  $region2: #{hg_stage_forward.16} parent=0 // loop_pre_header
    _
  $region3: #{hg_stage_forward.16} parent=0 // loop_header
    %s11 = sphi 0, %s15
    %p12 = scmp.ge.s32.totalorder %s11, 4
    %s18 = sphi 0, %s30
    %s19 = sphi 0, %s26
    %s20 = sphi 0, %s18
    %s21 = sphi 0, %s19
    %s22 = sphi 0, %s20
    %s23 = sphi 0, %s21
    %s33 = sphi 0, %s35
    %s36 = sphi 0, %s33
    %s37 = sphi 0, %s36
    %s53 = sphi 0, %s37
    %s59 = sphi 0, %s61
    %s62 = sphi 0, %s59
    %s63 = sphi 0, %s62
    %s79 = sphi 0, %s63
    %s85 = sphi 0, %s87
    %s88 = sphi 0, %s85
    %s89 = sphi 0, %s88
    %s105 = sphi 0, %s89
    %s111 = sphi 0, %s113
    %s114 = sphi 0, %s111
    %s115 = sphi 0, %s114
    %s131 = sphi 0, %s115
    %s137 = sphi 0, %s139
    %s140 = sphi 0, %s137
    %s141 = sphi 0, %s140
    %s157 = sphi 0, %s141
    %s165 = sphi 0, %s167
    %s168 = sphi 0, %s165
    %s169 = sphi 0, %s168
    %s185 = sphi 0, %s169
  $region4: #{hg_stage_forward.16} parent=0 // loop_header_branch
    %14 = sbr.rel (%p12) target = $region8
  $region5: #{hg_stage_forward.16} parent=0 // loop_body
    %s16 = ssub.s32 %s11, 1
    %s17 = ssub.s32 %s11, 2
    %s24 = sadd.s32 1, %s19
    %p25 = scmp.ge.s32.totalorder %s24, 1
    %s26 = scalar_select %p25, 0, %s24
    %s27 = sadd.s32 1, %s18
    %s28 = scalar_select %p25, %s27, %s18
    %p29 = scmp.ge.s32.totalorder %s28, 2
    %s30 = scalar_select %p29, 0, %s28
    %s31 = ssub.s32 %s18, %s30
    %p32 = scmp.eq.s32.totalorder %s31, 0
    %s34 = sadd.s32 %s33, 1
    %s35 = scalar_select %p32, %s33, %s34
    %p38 = pneg %p32
    %p39 = scmp.eq.s32.totalorder %s11, 1
    %p40 = por %p38, %p39
    %p41 = scmp.ne.s32.totalorder %s33, %s36
    %p42 = scmp.eq.s32.totalorder %s11, 0
    %p43 = por %p41, %p42
    %p44 = scmp.ne.s32.totalorder %s33, %s36
    %p45 = scmp.eq.s32.totalorder %s16, 1
    %p46 = por %p44, %p45
    %p47 = scmp.ne.s32.totalorder %s36, %s37
    %p48 = scmp.eq.s32.totalorder %s16, 0
    %p49 = por %p47, %p48
    %p50 = scmp.ne.s32.totalorder %s36, %s37
    %p51 = scmp.eq.s32.totalorder %s17, 1
    %p52 = por %p50, %p51
    %p54 = scmp.ne.s32.totalorder %s37, %s53
    %p55 = scmp.eq.s32.totalorder %s17, 0
    %p56 = por %p54, %p55
    %s57 = ssub.s32 %s18, %s30
    %p58 = scmp.eq.s32.totalorder %s57, 0
    %s60 = sadd.s32 %s59, 1
    %s61 = scalar_select %p58, %s59, %s60
    %p64 = pneg %p58
    %p65 = scmp.eq.s32.totalorder %s11, 1
    %p66 = por %p64, %p65
    %p67 = scmp.ne.s32.totalorder %s59, %s62
    %p68 = scmp.eq.s32.totalorder %s11, 0
    %p69 = por %p67, %p68
    %p70 = scmp.ne.s32.totalorder %s59, %s62
    %p71 = scmp.eq.s32.totalorder %s16, 1
    %p72 = por %p70, %p71
    %p73 = scmp.ne.s32.totalorder %s62, %s63
    %p74 = scmp.eq.s32.totalorder %s16, 0
    %p75 = por %p73, %p74
    %p76 = scmp.ne.s32.totalorder %s62, %s63
    %p77 = scmp.eq.s32.totalorder %s17, 1
    %p78 = por %p76, %p77
    %p80 = scmp.ne.s32.totalorder %s63, %s79
    %p81 = scmp.eq.s32.totalorder %s17, 0
    %p82 = por %p80, %p81
    %s83 = ssub.s32 %s18, %s30
    %p84 = scmp.eq.s32.totalorder %s83, 0
    %s86 = sadd.s32 %s85, 1
    %s87 = scalar_select %p84, %s85, %s86
    %p90 = pneg %p84
    %p91 = scmp.eq.s32.totalorder %s11, 1
    %p92 = por %p90, %p91
    %p93 = scmp.ne.s32.totalorder %s85, %s88
    %p94 = scmp.eq.s32.totalorder %s11, 0
    %p95 = por %p93, %p94
    %p96 = scmp.ne.s32.totalorder %s85, %s88
    %p97 = scmp.eq.s32.totalorder %s16, 1
    %p98 = por %p96, %p97
    %p99 = scmp.ne.s32.totalorder %s88, %s89
    %p100 = scmp.eq.s32.totalorder %s16, 0
    %p101 = por %p99, %p100
    %p102 = scmp.ne.s32.totalorder %s88, %s89
    %p103 = scmp.eq.s32.totalorder %s17, 1
    %p104 = por %p102, %p103
    %p106 = scmp.ne.s32.totalorder %s89, %s105
    %p107 = scmp.eq.s32.totalorder %s17, 0
    %p108 = por %p106, %p107
    %s109 = ssub.s32 %s19, %s26
    %p110 = scmp.eq.s32.totalorder %s109, 0
    %s112 = sadd.s32 %s111, 1
    %s113 = scalar_select %p110, %s111, %s112
    %p116 = pneg %p110
    %p117 = scmp.eq.s32.totalorder %s11, 1
    %p118 = por %p116, %p117
    %p119 = scmp.ne.s32.totalorder %s111, %s114
    %p120 = scmp.eq.s32.totalorder %s11, 0
    %p121 = por %p119, %p120
    %p122 = scmp.ne.s32.totalorder %s111, %s114
    %p123 = scmp.eq.s32.totalorder %s16, 1
    %p124 = por %p122, %p123
    %p125 = scmp.ne.s32.totalorder %s114, %s115
    %p126 = scmp.eq.s32.totalorder %s16, 0
    %p127 = por %p125, %p126
    %p128 = scmp.ne.s32.totalorder %s114, %s115
    %p129 = scmp.eq.s32.totalorder %s17, 1
    %p130 = por %p128, %p129
    %p132 = scmp.ne.s32.totalorder %s115, %s131
    %p133 = scmp.eq.s32.totalorder %s17, 0
    %p134 = por %p132, %p133
    %s135 = ssub.s32 %s19, %s26
    %p136 = scmp.eq.s32.totalorder %s135, 0
    %s138 = sadd.s32 %s137, 1
    %s139 = scalar_select %p136, %s137, %s138
    %p142 = pneg %p136
    %p143 = scmp.eq.s32.totalorder %s11, 1
    %p144 = por %p142, %p143
    %p145 = scmp.ne.s32.totalorder %s137, %s140
    %p146 = scmp.eq.s32.totalorder %s11, 0
    %p147 = por %p145, %p146
    %p148 = scmp.ne.s32.totalorder %s137, %s140
    %p149 = scmp.eq.s32.totalorder %s16, 1
    %p150 = por %p148, %p149
    %p151 = scmp.ne.s32.totalorder %s140, %s141
    %p152 = scmp.eq.s32.totalorder %s16, 0
    %p153 = por %p151, %p152
    %p154 = scmp.ne.s32.totalorder %s140, %s141
    %p155 = scmp.eq.s32.totalorder %s17, 1
    %p156 = por %p154, %p155
    %p158 = scmp.ne.s32.totalorder %s141, %s157
    %p159 = scmp.eq.s32.totalorder %s17, 0
    %p160 = por %p158, %p159
    %s161 = ssub.s32 %s18, %s30
    %s162 = ssub.s32 %s19, %s26
    %s163 = sor.u32 %s161, %s162
    %p164 = scmp.eq.s32.totalorder %s163, 0
    %s166 = sadd.s32 %s165, 1
    %s167 = scalar_select %p164, %s165, %s166
    %p170 = pneg %p164
    %p171 = scmp.eq.s32.totalorder %s11, 1
    %p172 = por %p170, %p171
    %p173 = scmp.ne.s32.totalorder %s165, %s168
    %p174 = scmp.eq.s32.totalorder %s11, 0
    %p175 = por %p173, %p174
    %p176 = scmp.ne.s32.totalorder %s165, %s168
    %p177 = scmp.eq.s32.totalorder %s16, 1
    %p178 = por %p176, %p177
    %p179 = scmp.ne.s32.totalorder %s168, %s169
    %p180 = scmp.eq.s32.totalorder %s16, 0
    %p181 = por %p179, %p180
    %p182 = scmp.ne.s32.totalorder %s168, %s169
    %p183 = scmp.eq.s32.totalorder %s17, 1
    %p184 = por %p182, %p183
    %p186 = scmp.ne.s32.totalorder %s169, %s185
    %p187 = scmp.eq.s32.totalorder %s17, 0
    %p188 = por %p186, %p187
    %p189 = scmp.le.s32.totalorder 1, %s11
    %p190 = scmp.lt.s32.totalorder %s11, 3
    %p191 = pnand %p189, %p190
    %p192 = pneg %p191
    // Predicated region
    $region9: #{hg_stage_forward.16} parent=5 // pred_check
      _
    $region10: #{hg_stage_forward.16} parent=5 // pred_check_branch
      %194 = sbr.rel (%p191) target = $region12
    $region11: #{hg_stage_forward.16} parent=5 // pred_region
      %s195 = ssub.s32 %s11, 1
      // Predicated region
      $region13: #{hg_stage_forward.16} parent=11 // pred_check
        %p196 = pneg %p127
      $region14: #{hg_stage_forward.16} parent=11 // pred_check_branch
        %198 = sbr.rel (%p196) target = $region16
      $region15: #{hg_stage_forward.16} parent=11 // pred_region
        %p199 = scmp.lt.s32.totalorder %s21, 0
        %s200 = scalar_select %p199, %s21, 0
        %s201 = smul.addr %s200, 4
        %s202 = scalar_lea.vmem %s3, %s201
      $region16: #{hg_stage_forward.16} parent=11 // pred_fallthru
        _
      // Predicated region
      $region17: #{hg_stage_forward.16} parent=11 // pred_check
        %p203 = pneg %p153
      $region18: #{hg_stage_forward.16} parent=11 // pred_check_branch
        %205 = sbr.rel (%p203) target = $region20
      $region19: #{hg_stage_forward.16} parent=11 // pred_region
        %p206 = scmp.lt.s32.totalorder %s21, 0
        %s207 = scalar_select %p206, %s21, 0
        %s208 = scalar_lea.vmem %s4, %s207
      $region20: #{hg_stage_forward.16} parent=11 // pred_fallthru
        _
    $region12: #{hg_stage_forward.16} parent=5 // pred_fallthru
      _
    %p209 = scmp.lt.s32.totalorder %s11, 2
    // Predicated region
    $region21: #{hg_stage_forward.16} parent=5 // pred_check
      %p210 = pneg %p209
    $region22: #{hg_stage_forward.16} parent=5 // pred_check_branch
      %212 = sbr.rel (%p210) target = $region24
    $region23: #{hg_stage_forward.16} parent=5 // pred_region
      // Predicated region
      $region25: #{hg_stage_forward.16} parent=23 // pred_check
        %p213 = pneg %p43
      $region26: #{hg_stage_forward.16} parent=23 // pred_check_branch
        %215 = sbr.rel (%p213) target = $region28
      $region27: #{hg_stage_forward.16} parent=23 // pred_region
        %s216 = smul.u32 8, %s18
        %p217 = scmp.lt.s32.totalorder %s216, 15
        %s218 = scalar_select %p217, %s216, 15
        %s219 = smul.addr %s218, 4
        %s220 = scalar_lea.vmem %s0, %s219
        %s221 = smul.u32 8, %s18
      $region28: #{hg_stage_forward.16} parent=23 // pred_fallthru
        _
      // Predicated region
      $region29: #{hg_stage_forward.16} parent=23 // pred_check
        %p222 = pneg %p69
      $region30: #{hg_stage_forward.16} parent=23 // pred_check_branch
        %224 = sbr.rel (%p222) target = $region32
      $region31: #{hg_stage_forward.16} parent=23 // pred_region
        %s225 = smul.u32 8, %s18
        %p226 = scmp.lt.s32.totalorder %s225, 15
        %s227 = scalar_select %p226, %s225, 15
        %s228 = smul.addr %s227, 4
        %s229 = scalar_lea.vmem %s1, %s228
        %s230 = smul.u32 8, %s18
      $region32: #{hg_stage_forward.16} parent=23 // pred_fallthru
        _
      // Predicated region
      $region33: #{hg_stage_forward.16} parent=23 // pred_check
        %p231 = pneg %p95
      $region34: #{hg_stage_forward.16} parent=23 // pred_check_branch
        %233 = sbr.rel (%p231) target = $region36
      $region35: #{hg_stage_forward.16} parent=23 // pred_region
        %s234 = smul.u32 8, %s18
        %p235 = scmp.lt.s32.totalorder %s234, 15
        %s236 = scalar_select %p235, %s234, 15
        %s237 = smul.addr %s236, 4
        %s238 = scalar_lea.vmem %s2, %s237
        %s239 = smul.u32 8, %s18
      $region36: #{hg_stage_forward.16} parent=23 // pred_fallthru
        _
    $region24: #{hg_stage_forward.16} parent=5 // pred_fallthru
      _
    %p240 = scmp.le.s32.totalorder 1, %s11
    %p241 = scmp.lt.s32.totalorder %s11, 3
    %p242 = pnand %p240, %p241
    %p243 = pneg %p242
    // Predicated region
    $region37: #{hg_stage_forward.16} parent=5 // pred_check
      _
    $region38: #{hg_stage_forward.16} parent=5 // pred_check_branch
      %245 = sbr.rel (%p242) target = $region40
    $region39: #{hg_stage_forward.16} parent=5 // pred_region
      %s246 = ssub.s32 %s11, 1
      %s247 = smul.u32 8, %s20
      %p248 = scmp.lt.s32.totalorder %s247, 15
      %s249 = scalar_select %p248, %s247, 15
      %s250 = smul.addr %s249, 4
      %s251 = scalar_lea.vmem %s0, %s250
      %p252 = pneg %p49
      %p253 = pneg %p46
      %s254 = smul.u32 8, %s20
      %p255 = scmp.lt.s32.totalorder %s254, 15
      %s256 = scalar_select %p255, %s254, 15
      %s257 = smul.addr %s256, 4
      %s258 = scalar_lea.vmem %s1, %s257
      %p259 = pneg %p75
      %p260 = pneg %p72
      %s261 = smul.u32 8, %s20
      %p262 = scmp.lt.s32.totalorder %s261, 15
      %s263 = scalar_select %p262, %s261, 15
      %s264 = smul.addr %s263, 4
      %s265 = scalar_lea.vmem %s2, %s264
      %p266 = pneg %p101
      %p267 = pneg %p98
      %p268 = scmp.lt.s32.totalorder %s21, 0
      %s269 = scalar_select %p268, %s21, 0
      %s270 = smul.addr %s269, 4
      %s271 = scalar_lea.vmem %s3, %s270
      %p272 = pneg %p127
      %p273 = pneg %p124
      %p274 = scmp.lt.s32.totalorder %s21, 0
      %s275 = scalar_select %p274, %s21, 0
      %s276 = scalar_lea.vmem %s4, %s275
      %p277 = pneg %p153
      %p278 = pneg %p150
      %p279 = pneg %p181
      %p280 = pneg %p178
      %s281 = smul.u32 8, %s20
      %p282 = scmp.lt.s32.totalorder %s281, 15
      %s283 = scalar_select %p282, %s281, 15
      %p284 = scmp.lt.s32.totalorder %s21, 0
      %s285 = scalar_select %p284, %s21, 0
      %s286 = sadd.s32 %s285, %s283
      %s287 = smul.addr %s286, 4
      %s288 = scalar_lea.vmem %s5, %s287
      %s289 = smul.u32 8, %s20
      %p290 = scmp.lt.s32.totalorder %s289, 15
      %s291 = scalar_select %p290, %s289, 15
      %s292 = smul.addr %s291, 4
      %s293 = scalar_lea.vmem %s0, %s292
      %s294 = smul.u32 8, %s20
      %s295 = smul.u32 8, %s20
      %p296 = scmp.lt.s32.totalorder %s295, 15
      %s297 = scalar_select %p296, %s295, 15
      %s298 = smul.addr %s297, 4
      %s299 = scalar_lea.vmem %s1, %s298
      %s300 = smul.u32 8, %s20
      %s301 = smul.u32 8, %s20
      %p302 = scmp.lt.s32.totalorder %s301, 15
      %s303 = scalar_select %p302, %s301, 15
      %s304 = smul.addr %s303, 4
      %s305 = scalar_lea.vmem %s2, %s304
      %s306 = smul.u32 8, %s20
      %p307 = scmp.lt.s32.totalorder %s21, 0
      %s308 = scalar_select %p307, %s21, 0
      %s309 = smul.addr %s308, 4
      %s310 = scalar_lea.vmem %s3, %s309
      %p311 = scmp.lt.s32.totalorder %s21, 0
      %s312 = scalar_select %p311, %s21, 0
      %s313 = scalar_lea.vmem %s4, %s312
      %s314 = smul.u32 8, %s20
      %p315 = scmp.lt.s32.totalorder %s314, 15
      %s316 = scalar_select %p315, %s314, 15
      %p317 = scmp.lt.s32.totalorder %s21, 0
      %s318 = scalar_select %p317, %s21, 0
      %s319 = sadd.s32 %s318, %s316
      %s320 = smul.addr %s319, 4
      %s321 = scalar_lea.vmem %s5, %s320
      %s322 = smul.u32 8, %s20
      %v324 = vld [vmem:[%s293] sm:$0xf]
      %v325 = vld [vmem:[%s293 + $0x4] sm:$0xf]
      %v326 = vld [vmem:[%s293 + $0x8] sm:$0xf]
      %v327 = vld [vmem:[%s293 + $0xc] sm:$0xf]
      %v328 = vld [vmem:[%s293 + $0x10] sm:$0xf]
      %v329 = vld [vmem:[%s293 + $0x14] sm:$0xf]
      %v330 = vld [vmem:[%s293 + $0x18] sm:$0xf]
      %v331 = vld [vmem:[%s293 + $0x1c] sm:$0xf]
      %v332 = vld [vmem:[%s299] sm:$0xf]
      %v333 = vld [vmem:[%s299 + $0x4] sm:$0xf]
      %v334 = vld [vmem:[%s299 + $0x8] sm:$0xf]
      %v335 = vld [vmem:[%s299 + $0xc] sm:$0xf]
      %v336 = vld [vmem:[%s299 + $0x10] sm:$0xf]
      %v337 = vld [vmem:[%s299 + $0x14] sm:$0xf]
      %v338 = vld [vmem:[%s299 + $0x18] sm:$0xf]
      %v339 = vld [vmem:[%s299 + $0x1c] sm:$0xf]
      %v340 = vld [vmem:[%s305] sm:$0xf]
      %v341 = vld [vmem:[%s305 + $0x4] sm:$0xf]
      %v342 = vld [vmem:[%s305 + $0x8] sm:$0xf]
      %v343 = vld [vmem:[%s305 + $0xc] sm:$0xf]
      %v344 = vld [vmem:[%s305 + $0x10] sm:$0xf]
      %v345 = vld [vmem:[%s305 + $0x14] sm:$0xf]
      %v346 = vld [vmem:[%s305 + $0x18] sm:$0xf]
      %v347 = vld [vmem:[%s305 + $0x1c] sm:$0xf]
      %v356 = vunpack.c.l.b16 %v324
      %v357 = vunpack.c.l.b16 %v325
      %v358 = vunpack.c.l.b16 %v326
      %v359 = vunpack.c.l.b16 %v327
      %v360 = vunpack.c.l.b16 %v328
      %v361 = vunpack.c.l.b16 %v329
      %v362 = vunpack.c.l.b16 %v330
      %v363 = vunpack.c.l.b16 %v331
      %v364 = vpack.c.b16 %v357, %v356
      %v365 = vpack.c.b16 %v359, %v358
      %v366 = vpack.c.b16 %v361, %v360
      %v367 = vpack.c.b16 %v363, %v362
      %v376 = vunpack.c.l.b16 %v332
      %v377 = vunpack.c.l.b16 %v333
      %v378 = vunpack.c.l.b16 %v334
      %v379 = vunpack.c.l.b16 %v335
      %v380 = vunpack.c.l.b16 %v336
      %v381 = vunpack.c.l.b16 %v337
      %v382 = vunpack.c.l.b16 %v338
      %v383 = vunpack.c.l.b16 %v339
      %v384 = vpack.c.b16 %v377, %v376
      %v385 = vpack.c.b16 %v379, %v378
      %v386 = vpack.c.b16 %v381, %v380
      %v387 = vpack.c.b16 %v383, %v382
      %388 = vrot.lane.b32.xlu0 %v384, 32
      %v389 = vpop.permute.xlu0 %388
      %390 = vrot.lane.b32.xlu0 %v385, 32
      %v391 = vpop.permute.xlu0 %390
      %392 = vrot.lane.b32.xlu0 %v386, 32
      %v393 = vpop.permute.xlu0 %392
      %394 = vrot.lane.b32.xlu0 %v387, 32
      %v395 = vpop.permute.xlu0 %394
      %v404 = vunpack.c.l.b16 %v340
      %v405 = vunpack.c.l.b16 %v341
      %v406 = vunpack.c.l.b16 %v342
      %v407 = vunpack.c.l.b16 %v343
      %v408 = vunpack.c.l.b16 %v344
      %v409 = vunpack.c.l.b16 %v345
      %v410 = vunpack.c.l.b16 %v346
      %v411 = vunpack.c.l.b16 %v347
      %v412 = vpack.c.b16 %v405, %v404
      %v413 = vpack.c.b16 %v407, %v406
      %v414 = vpack.c.b16 %v409, %v408
      %v415 = vpack.c.b16 %v411, %v410
      %416 = vrot.lane.b32.xlu0 %v412, 48
      %v417 = vpop.permute.xlu0 %416
      %418 = vrot.lane.b32.xlu0 %v413, 48
      %v419 = vpop.permute.xlu0 %418
      %420 = vrot.lane.b32.xlu0 %v414, 48
      %v421 = vpop.permute.xlu0 %420
      %422 = vrot.lane.b32.xlu0 %v415, 48
      %v423 = vpop.permute.xlu0 %422
      %vm424 = vcmask 261120
      %v427 = vsel %vm424, %v364, %v389
      %v430 = vsel %vm424, %v365, %v391
      %v433 = vsel %vm424, %v366, %v393
      %v436 = vsel %vm424, %v367, %v395
      %vm437 = vcmask 392192
      %v439 = vsel %vm437, %v427, %v417
      %v441 = vsel %vm437, %v430, %v419
      %v443 = vsel %vm437, %v433, %v421
      %v445 = vsel %vm437, %v436, %v423
      %v446 = vld [vmem:[%s310] sm:$0xf]
      %v447 = vld [vmem:[%s310 + $0x4] sm:$0xf]
      %v448 = vld [vmem:[%s310 + $0x8] sm:$0xf]
      %v449 = vld [vmem:[%s310 + $0xc] sm:$0xf]
      %v450 = vld [vmem:[%s310 + $0x10] sm:$0xf]
      %v451 = vld [vmem:[%s310 + $0x14] sm:$0xf]
      %v452 = vld [vmem:[%s310 + $0x18] sm:$0xf]
      %v453 = vld [vmem:[%s310 + $0x1c] sm:$0xf]
      %v454 = vld [vmem:[%s313] sm:$0x1]
      %v456 = vperm.slane %v454, 0
      %v466 = vunpack.c.l.b16 %v446
      %v467 = vunpack.c.l.b16 %v447
      %v468 = vunpack.c.l.b16 %v448
      %v469 = vunpack.c.l.b16 %v449
      %v470 = vunpack.c.l.b16 %v450
      %v471 = vunpack.c.l.b16 %v451
      %v472 = vunpack.c.l.b16 %v452
      %v473 = vunpack.c.l.b16 %v453
      %v474 = vpack.c.b16 %v467, %v466
      %v475 = vpack.c.b16 %v469, %v468
      %v476 = vpack.c.b16 %v471, %v470
      %v477 = vpack.c.b16 %v473, %v472
      %vm482 = vcmask 523264
      %v483 = vsel %vm482, %v439, 0
      %v485 = vsel %vm482, %v441, 0
      %v487 = vsel %vm482, %v443, 0
      %v489 = vsel %vm482, %v445, 0
      %491 = vmatpush.bf16.msra.mxu0 0
      %492 = vmatpush.bf16.msra.mxu0 0
      %493 = vmatpush.bf16.msra.mxu0 0
      %494 = vmatpush.bf16.msra.mxu0 0
      %495 = vmatpush.bf16.msra.mxu0 %v477
      %496 = vmatpush.bf16.msra.mxu0 %v476
      %497 = vmatpush.bf16.msra.mxu0 %v475
      %498 = vmatpush.bf16.msra.mxu0 %v474
      %499 = vmatmul.bf16.gmra.mxu0 %v483
      %v500 = vpop.f32.mrf.mxu0
      %v501 = vadd.f32 %v456, %v500
      %v502 = vpop.f32.mrf.mxu0
      %v503 = vadd.f32 %v456, %v502
      %504 = vmatmul.bf16.gmra.mxu0 %v485
      %v505 = vpop.f32.mrf.mxu0
      %v506 = vadd.f32 %v456, %v505
      %v507 = vpop.f32.mrf.mxu0
      %v508 = vadd.f32 %v456, %v507
      %509 = vmatmul.bf16.gmra.mxu0 %v487
      %v510 = vpop.f32.mrf.mxu0
      %v511 = vadd.f32 %v456, %v510
      %v512 = vpop.f32.mrf.mxu0
      %v513 = vadd.f32 %v456, %v512
      %514 = vmatmul.bf16.gmra.mxu0 %v489
      %v515 = vpop.f32.mrf.mxu0
      %v516 = vadd.f32 %v456, %v515
      %v517 = vpop.f32.mrf.mxu0
      %v518 = vadd.f32 %v456, %v517
      %519 = vdwg.mxu0
      %v520 = vmax.f32 %v501, 0.0
      %v521 = vmax.f32 %v503, 0.0
      %v522 = vmax.f32 %v506, 0.0
      %v523 = vmax.f32 %v508, 0.0
      %v524 = vmax.f32 %v511, 0.0
      %v525 = vmax.f32 %v513, 0.0
      %v526 = vmax.f32 %v516, 0.0
      %v527 = vmax.f32 %v518, 0.0
      %v528 = vpack.c.bf16 %v520, %v520
      %v529 = vpack.c.bf16 %v521, %v521
      %v530 = vpack.c.bf16 %v522, %v522
      %v531 = vpack.c.bf16 %v523, %v523
      %v532 = vpack.c.bf16 %v524, %v524
      %v533 = vpack.c.bf16 %v525, %v525
      %v534 = vpack.c.bf16 %v526, %v526
      %v535 = vpack.c.bf16 %v527, %v527
      %vm536 = vcmask 125952
      %537 = vst.msk [vmem:[%s321] sm:$0xf] %vm536, %v528
      %538 = vst.msk [vmem:[%s321 + $0x4] sm:$0xf] %vm536, %v529
      %539 = vst.msk [vmem:[%s321 + $0x8] sm:$0xf] %vm536, %v530
      %540 = vst.msk [vmem:[%s321 + $0xc] sm:$0xf] %vm536, %v531
      %541 = vst.msk [vmem:[%s321 + $0x10] sm:$0xf] %vm536, %v532
      %542 = vst.msk [vmem:[%s321 + $0x14] sm:$0xf] %vm536, %v533
      %543 = vst.msk [vmem:[%s321 + $0x18] sm:$0xf] %vm536, %v534
      %544 = vst.msk [vmem:[%s321 + $0x1c] sm:$0xf] %vm536, %v535
      %s545 = smul.u32 8, %s20
      %p546 = scmp.lt.s32.totalorder %s545, 15
      %s547 = scalar_select %p546, %s545, 15
      %p548 = scmp.lt.s32.totalorder %s21, 0
      %s549 = scalar_select %p548, %s21, 0
      %s550 = sadd.s32 %s549, %s547
      %s551 = smul.addr %s550, 4
      %s552 = scalar_lea.vmem %s5, %s551
      // Predicated region
      $region41: #{hg_stage_forward.16} parent=39 // pred_check
        %p553 = pneg %p178
      $region42: #{hg_stage_forward.16} parent=39 // pred_check_branch
        %555 = sbr.rel (%p553) target = $region44
      $region43: #{hg_stage_forward.16} parent=39 // pred_region
        %s556 = smul.u32 8, %s20
      $region44: #{hg_stage_forward.16} parent=39 // pred_fallthru
        _
    $region40: #{hg_stage_forward.16} parent=5 // pred_fallthru
      _
    %p557 = scmp.le.s32.totalorder 2, %s11
    // Predicated region
    $region45: #{hg_stage_forward.16} parent=5 // pred_check
      %p558 = pneg %p557
    $region46: #{hg_stage_forward.16} parent=5 // pred_check_branch
      %560 = sbr.rel (%p558) target = $region48
    $region47: #{hg_stage_forward.16} parent=5 // pred_region
      %s561 = ssub.s32 %s11, 2
      // Predicated region
      $region49: #{hg_stage_forward.16} parent=47 // pred_check
        %p562 = pneg %p184
      $region50: #{hg_stage_forward.16} parent=47 // pred_check_branch
        %564 = sbr.rel (%p562) target = $region52
      $region51: #{hg_stage_forward.16} parent=47 // pred_region
        %s565 = smul.u32 8, %s22
        %p566 = scmp.lt.s32.totalorder %s565, 15
        %s567 = scalar_select %p566, %s565, 15
        %p568 = scmp.lt.s32.totalorder %s23, 0
        %s569 = scalar_select %p568, %s23, 0
        %s570 = sadd.s32 %s569, %s567
        %s571 = smul.addr %s570, 4
        %s572 = scalar_lea.vmem %s5, %s571
      $region52: #{hg_stage_forward.16} parent=47 // pred_fallthru
        _
    $region48: #{hg_stage_forward.16} parent=5 // pred_fallthru
      _
  $region6: #{hg_stage_forward.16} parent=0 // loop_footer
    %s15 = sadd.s32 1, %s11
  $region7: #{hg_stage_forward.16} parent=0 // loop_footer_branch
    %10 = sbr.rel target = $region3
  $region8: #{hg_stage_forward.16} parent=0 // loop_exit
    _

// kernel: hg_stage_forward.14
$region0: #{hg_stage_forward.14}
  #allocation0 [shape = 'u32[]', space=smem, size = 0x4, offset = 0x4, fixed_abs, tag = 'smem constant byte address 0x4 - core index']
  #allocation1 [shape = 'u32[72,128]{1,0:T(1,128)}', space=vmem, size = 0x9000, scoped, tag = 'internal scratch']
  %s0 = inlined_call_operand.vmem [shape: bf16[2,10,10,32], index: 0, kind: input, shape index: {}]
  %s1 = inlined_call_operand.vmem [shape: bf16[3,96,16], index: 1, kind: input, shape index: {}]
  %s2 = inlined_call_operand.vmem [shape: f32[1,16], index: 2, kind: input, shape index: {}]
  %s3 = inlined_call_operand.vmem [shape: bf16[128,16], index: 3, kind: output, shape index: {}]
  %s4 = sld [smem:[#allocation0]]
  $region45: #{hg_stage_forward.14} parent=0
    _
  %s6 = ssub.s32 1, %s4
  %s7 = scalar_select 0, %s6, %s4
  loop: start=0, step=1, limit=6
  $region2: #{hg_stage_forward.14} parent=0 // loop_pre_header
    _
  $region3: #{hg_stage_forward.14} parent=0 // loop_header
    %s9 = sphi 0, %s13
    %p10 = scmp.ge.s32.totalorder %s9, 6
    %s16 = sphi 0, %s35
    %s17 = sphi 0, %s31
    %s18 = sphi 0, %s27
    %s19 = sphi 0, %s16
    %s20 = sphi 0, %s17
    %s21 = sphi 0, %s18
    %s22 = sphi 0, %s19
    %s23 = sphi 0, %s20
    %s24 = sphi 0, %s21
    %s38 = sphi 0, %s40
    %s41 = sphi 0, %s38
    %s42 = sphi 0, %s41
    %s58 = sphi 0, %s42
    %s64 = sphi 0, %s66
    %s67 = sphi 0, %s64
    %s68 = sphi 0, %s67
    %s84 = sphi 0, %s68
    %s90 = sphi 0, %s92
    %s93 = sphi 0, %s90
    %s94 = sphi 0, %s93
    %s110 = sphi 0, %s94
    %s122 = sphi 0, %s124
    %s125 = sphi 0, %s122
    %s126 = sphi 0, %s125
    %s142 = sphi 0, %s126
  $region4: #{hg_stage_forward.14} parent=0 // loop_header_branch
    %12 = sbr.rel (%p10) target = $region8
  $region5: #{hg_stage_forward.14} parent=0 // loop_body
    %s14 = ssub.s32 %s9, 1
    %s15 = ssub.s32 %s9, 2
    %s25 = sadd.s32 1, %s18
    %p26 = scmp.ge.s32.totalorder %s25, 1
    %s27 = scalar_select %p26, 0, %s25
    %s28 = sadd.s32 1, %s17
    %s29 = scalar_select %p26, %s28, %s17
    %p30 = scmp.ge.s32.totalorder %s29, 2
    %s31 = scalar_select %p30, 0, %s29
    %s32 = sadd.s32 1, %s16
    %s33 = scalar_select %p30, %s32, %s16
    %p34 = scmp.ge.s32.totalorder %s33, 2
    %s35 = scalar_select %p34, 0, %s33
    %s36 = ssub.s32 %s16, %s35
    %p37 = scmp.eq.s32.totalorder %s36, 0
    %s39 = sadd.s32 %s38, 1
    %s40 = scalar_select %p37, %s38, %s39
    %p43 = pneg %p37
    %p44 = scmp.eq.s32.totalorder %s9, 3
    %p45 = por %p43, %p44
    %p46 = scmp.ne.s32.totalorder %s38, %s41
    %p47 = scmp.eq.s32.totalorder %s9, 0
    %p48 = por %p46, %p47
    %p49 = scmp.ne.s32.totalorder %s38, %s41
    %p50 = scmp.eq.s32.totalorder %s14, 3
    %p51 = por %p49, %p50
    %p52 = scmp.ne.s32.totalorder %s41, %s42
    %p53 = scmp.eq.s32.totalorder %s14, 0
    %p54 = por %p52, %p53
    %p55 = scmp.ne.s32.totalorder %s41, %s42
    %p56 = scmp.eq.s32.totalorder %s15, 3
    %p57 = por %p55, %p56
    %p59 = scmp.ne.s32.totalorder %s42, %s58
    %p60 = scmp.eq.s32.totalorder %s15, 0
    %p61 = por %p59, %p60
    %s62 = ssub.s32 %s18, %s27
    %p63 = scmp.eq.s32.totalorder %s62, 0
    %s65 = sadd.s32 %s64, 1
    %s66 = scalar_select %p63, %s64, %s65
    %p69 = pneg %p63
    %p70 = scmp.eq.s32.totalorder %s9, 3
    %p71 = por %p69, %p70
    %p72 = scmp.ne.s32.totalorder %s64, %s67
    %p73 = scmp.eq.s32.totalorder %s9, 0
    %p74 = por %p72, %p73
    %p75 = scmp.ne.s32.totalorder %s64, %s67
    %p76 = scmp.eq.s32.totalorder %s14, 3
    %p77 = por %p75, %p76
    %p78 = scmp.ne.s32.totalorder %s67, %s68
    %p79 = scmp.eq.s32.totalorder %s14, 0
    %p80 = por %p78, %p79
    %p81 = scmp.ne.s32.totalorder %s67, %s68
    %p82 = scmp.eq.s32.totalorder %s15, 3
    %p83 = por %p81, %p82
    %p85 = scmp.ne.s32.totalorder %s68, %s84
    %p86 = scmp.eq.s32.totalorder %s15, 0
    %p87 = por %p85, %p86
    %s88 = ssub.s32 %s18, %s27
    %p89 = scmp.eq.s32.totalorder %s88, 0
    %s91 = sadd.s32 %s90, 1
    %s92 = scalar_select %p89, %s90, %s91
    %p95 = pneg %p89
    %p96 = scmp.eq.s32.totalorder %s9, 3
    %p97 = por %p95, %p96
    %p98 = scmp.ne.s32.totalorder %s90, %s93
    %p99 = scmp.eq.s32.totalorder %s9, 0
    %p100 = por %p98, %p99
    %p101 = scmp.ne.s32.totalorder %s90, %s93
    %p102 = scmp.eq.s32.totalorder %s14, 3
    %p103 = por %p101, %p102
    %p104 = scmp.ne.s32.totalorder %s93, %s94
    %p105 = scmp.eq.s32.totalorder %s14, 0
    %p106 = por %p104, %p105
    %p107 = scmp.ne.s32.totalorder %s93, %s94
    %p108 = scmp.eq.s32.totalorder %s15, 3
    %p109 = por %p107, %p108
    %p111 = scmp.ne.s32.totalorder %s94, %s110
    %p112 = scmp.eq.s32.totalorder %s15, 0
    %p113 = por %p111, %p112
    %s114 = smul.u32 %s16, 2
    %s115 = sadd.s32 %s114, %s17
    %s116 = smul.u32 %s35, 2
    %s117 = sadd.s32 %s116, %s31
    %s118 = ssub.s32 %s115, %s117
    %s119 = ssub.s32 %s18, %s27
    %s120 = sor.u32 %s118, %s119
    %p121 = scmp.eq.s32.totalorder %s120, 0
    %s123 = sadd.s32 %s122, 1
    %s124 = scalar_select %p121, %s122, %s123
    %p127 = pneg %p121
    %p128 = scmp.eq.s32.totalorder %s9, 3
    %p129 = por %p127, %p128
    %p130 = scmp.ne.s32.totalorder %s122, %s125
    %p131 = scmp.eq.s32.totalorder %s9, 0
    %p132 = por %p130, %p131
    %p133 = scmp.ne.s32.totalorder %s122, %s125
    %p134 = scmp.eq.s32.totalorder %s14, 3
    %p135 = por %p133, %p134
    %p136 = scmp.ne.s32.totalorder %s125, %s126
    %p137 = scmp.eq.s32.totalorder %s14, 0
    %p138 = por %p136, %p137
    %p139 = scmp.ne.s32.totalorder %s125, %s126
    %p140 = scmp.eq.s32.totalorder %s15, 3
    %p141 = por %p139, %p140
    %p143 = scmp.ne.s32.totalorder %s126, %s142
    %p144 = scmp.eq.s32.totalorder %s15, 0
    %p145 = por %p143, %p144
    %p146 = scmp.le.s32.totalorder 1, %s9
    %p147 = scmp.lt.s32.totalorder %s9, 5
    %p148 = pnand %p146, %p147
    %p149 = pneg %p148
    // Predicated region
    $region9: #{hg_stage_forward.14} parent=5 // pred_check
      _
    $region10: #{hg_stage_forward.14} parent=5 // pred_check_branch
      %151 = sbr.rel (%p148) target = $region12
    $region11: #{hg_stage_forward.14} parent=5 // pred_region
      %s152 = ssub.s32 %s9, 1
      // Predicated region
      $region13: #{hg_stage_forward.14} parent=11 // pred_check
        %p153 = pneg %p80
      $region14: #{hg_stage_forward.14} parent=11 // pred_check_branch
        %155 = sbr.rel (%p153) target = $region16
      $region15: #{hg_stage_forward.14} parent=11 // pred_region
        %p156 = scmp.lt.s32.totalorder %s21, 0
        %s157 = scalar_select %p156, %s21, 0
        %s158 = smul.addr %s157, 4
        %s159 = scalar_lea.vmem %s1, %s158
      $region16: #{hg_stage_forward.14} parent=11 // pred_fallthru
        _
      // Predicated region
      $region17: #{hg_stage_forward.14} parent=11 // pred_check
        %p160 = pneg %p106
      $region18: #{hg_stage_forward.14} parent=11 // pred_check_branch
        %162 = sbr.rel (%p160) target = $region20
      $region19: #{hg_stage_forward.14} parent=11 // pred_region
        %p163 = scmp.lt.s32.totalorder %s21, 0
        %s164 = scalar_select %p163, %s21, 0
        %s165 = scalar_lea.vmem %s2, %s164
      $region20: #{hg_stage_forward.14} parent=11 // pred_fallthru
        _
    $region12: #{hg_stage_forward.14} parent=5 // pred_fallthru
      _
    %p166 = scmp.lt.s32.totalorder %s9, 4
    // Predicated region
    $region21: #{hg_stage_forward.14} parent=5 // pred_check
      %p167 = pneg %p166
    $region22: #{hg_stage_forward.14} parent=5 // pred_check_branch
      %169 = sbr.rel (%p167) target = $region24
    $region23: #{hg_stage_forward.14} parent=5 // pred_region
      // Predicated region
      $region25: #{hg_stage_forward.14} parent=23 // pred_check
        %p170 = pneg %p48
      $region26: #{hg_stage_forward.14} parent=23 // pred_check_branch
        %172 = sbr.rel (%p170) target = $region28
      $region27: #{hg_stage_forward.14} parent=23 // pred_region
        %p173 = scmp.lt.s32.totalorder %s16, 1
        %s174 = scalar_select %p173, %s16, 1
        %s175 = smul.addr %s174, 20
        %s176 = smul.addr %s175, 4
        %s177 = scalar_lea.vmem %s0, %s176
      $region28: #{hg_stage_forward.14} parent=23 // pred_fallthru
        _
    $region24: #{hg_stage_forward.14} parent=5 // pred_fallthru
      _
    %p178 = scmp.le.s32.totalorder 1, %s9
    %p179 = scmp.lt.s32.totalorder %s9, 5
    %p180 = pnand %p178, %p179
    %p181 = pneg %p180
    // Predicated region
    $region29: #{hg_stage_forward.14} parent=5 // pred_check
      _
    $region30: #{hg_stage_forward.14} parent=5 // pred_check_branch
      %183 = sbr.rel (%p180) target = $region32
    $region31: #{hg_stage_forward.14} parent=5 // pred_region
      %s184 = ssub.s32 %s9, 1
      %p185 = scmp.lt.s32.totalorder %s19, 1
      %s186 = scalar_select %p185, %s19, 1
      %s187 = smul.addr %s186, 20
      %s188 = smul.addr %s187, 4
      %s189 = scalar_lea.vmem %s0, %s188
      %p190 = pneg %p54
      %p191 = pneg %p51
      %p192 = scmp.lt.s32.totalorder %s21, 0
      %s193 = scalar_select %p192, %s21, 0
      %s194 = smul.addr %s193, 4
      %s195 = scalar_lea.vmem %s1, %s194
      %p196 = pneg %p80
      %p197 = pneg %p77
      %p198 = scmp.lt.s32.totalorder %s21, 0
      %s199 = scalar_select %p198, %s21, 0
      %s200 = scalar_lea.vmem %s2, %s199
      %p201 = pneg %p106
      %p202 = pneg %p103
      %p203 = pneg %p138
      %p204 = pneg %p135
      %s205 = smul.u32 %s19, 2
      %s206 = sadd.s32 %s205, %s20
      %s207 = smul.u32 4, %s206
      %p208 = scmp.lt.s32.totalorder %s207, 15
      %s209 = scalar_select %p208, %s207, 15
      %p210 = scmp.lt.s32.totalorder %s21, 0
      %s211 = scalar_select %p210, %s21, 0
      %s212 = sadd.s32 %s211, %s209
      %s213 = smul.addr %s212, 4
      %s214 = scalar_lea.vmem %s3, %s213
      %p215 = scmp.lt.s32.totalorder %s19, 1
      %s216 = scalar_select %p215, %s19, 1
      %s217 = smul.addr %s216, 20
      %s218 = smul.addr %s217, 4
      %s219 = scalar_lea.vmem %s0, %s218
      %p220 = scmp.lt.s32.totalorder %s21, 0
      %s221 = scalar_select %p220, %s21, 0
      %s222 = smul.addr %s221, 4
      %s223 = scalar_lea.vmem %s1, %s222
      %p224 = scmp.lt.s32.totalorder %s21, 0
      %s225 = scalar_select %p224, %s21, 0
      %s226 = scalar_lea.vmem %s2, %s225
      %s227 = smul.u32 %s19, 2
      %s228 = sadd.s32 %s227, %s20
      %s229 = smul.u32 4, %s228
      %p230 = scmp.lt.s32.totalorder %s229, 15
      %s231 = scalar_select %p230, %s229, 15
      %p232 = scmp.lt.s32.totalorder %s21, 0
      %s233 = scalar_select %p232, %s21, 0
      %s234 = sadd.s32 %s233, %s231
      %s235 = smul.addr %s234, 4
      %s236 = scalar_lea.vmem %s3, %s235
      %s237 = smul.u32 %s19, 2
      %s238 = sadd.s32 %s237, %s20
      %s239 = smul.u32 4, %s238
      %s241 = smul.u32 %s20, 4
      %s242 = smul.u32 %s241, 2
      %s243 = smul.addr %s242, 4
      %s244 = scalar_lea.vmem %s219, %s243
      %v245 = vld [vmem:[%s244] sm:$0xf]
      %v246 = vld [vmem:[%s244 + $0x4] sm:$0x1]
      %v247 = vld [vmem:[%s244 + $0x8] sm:$0xf]
      %v248 = vld [vmem:[%s244 + $0xc] sm:$0x1]
      %v249 = vld [vmem:[%s244 + $0x10] sm:$0xf]
      %v250 = vld [vmem:[%s244 + $0x14] sm:$0x1]
      %v251 = vld [vmem:[%s244 + $0x18] sm:$0xf]
      %v252 = vld [vmem:[%s244 + $0x1c] sm:$0x1]
      %v261 = vunpack.c.l.b16 %v245
      %v262 = vunpack.c.l.b16 %v246
      %v263 = vunpack.c.l.b16 %v247
      %v264 = vunpack.c.l.b16 %v248
      %v265 = vunpack.c.l.b16 %v249
      %v266 = vunpack.c.l.b16 %v250
      %v267 = vunpack.c.l.b16 %v251
      %v268 = vunpack.c.l.b16 %v252
      %v269 = vpack.c.b16 %v262, %v261
      %v270 = vpack.c.b16 %v264, %v263
      %v271 = vpack.c.b16 %v266, %v265
      %v272 = vpack.c.b16 %v268, %v267
      %v274 = vshrl.u32 %v269, 16
      %v276 = vshll.u32 %v269, 16
      %v278 = vrot.slane %v276, 1
      %v279 = vor.u32 %v274, %v278
      %v281 = vshrl.u32 %v270, 16
      %v283 = vshll.u32 %v270, 16
      %v285 = vrot.slane %v283, 1
      %v286 = vor.u32 %v281, %v285
      %v288 = vshrl.u32 %v271, 16
      %v290 = vshll.u32 %v271, 16
      %v292 = vrot.slane %v290, 1
      %v293 = vor.u32 %v288, %v292
      %v295 = vshrl.u32 %v272, 16
      %v297 = vshll.u32 %v272, 16
      %v299 = vrot.slane %v297, 1
      %v300 = vor.u32 %v295, %v299
      %301 = vrot.lane.b32.xlu0 %v279, 32
      %v302 = vpop.permute.xlu0 %301
      %303 = vrot.lane.b32.xlu0 %v286, 32
      %v304 = vpop.permute.xlu0 %303
      %305 = vrot.lane.b32.xlu0 %v293, 32
      %v306 = vpop.permute.xlu0 %305
      %307 = vrot.lane.b32.xlu0 %v300, 32
      %v308 = vpop.permute.xlu0 %307
      %v309 = vrot.slane %v269, 1
      %v310 = vrot.slane %v270, 1
      %v311 = vrot.slane %v271, 1
      %v312 = vrot.slane %v272, 1
      %313 = vrot.lane.b32.xlu0 %v309, 64
      %v314 = vpop.permute.xlu0 %313
      %315 = vrot.lane.b32.xlu0 %v310, 64
      %v316 = vpop.permute.xlu0 %315
      %317 = vrot.lane.b32.xlu0 %v311, 64
      %v318 = vpop.permute.xlu0 %317
      %319 = vrot.lane.b32.xlu0 %v312, 64
      %v320 = vpop.permute.xlu0 %319
      %vm321 = vcmask 261120
      %v324 = vsel %vm321, %v245, %v302
      %v327 = vsel %vm321, %v247, %v304
      %v330 = vsel %vm321, %v249, %v306
      %v333 = vsel %vm321, %v251, %v308
      %vm334 = vcmask 523264
      %v336 = vsel %vm334, %v324, %v314
      %v338 = vsel %vm334, %v327, %v316
      %v340 = vsel %vm334, %v330, %v318
      %v342 = vsel %vm334, %v333, %v320
      %v343 = vld [vmem:[%s223] sm:$0xf]
      %v344 = vld [vmem:[%s223 + $0x4] sm:$0xf]
      %v345 = vld [vmem:[%s223 + $0x8] sm:$0xf]
      %v346 = vld [vmem:[%s223 + $0xc] sm:$0xf]
      %v347 = vld [vmem:[%s223 + $0x10] sm:$0xf]
      %v348 = vld [vmem:[%s223 + $0x14] sm:$0xf]
      %v349 = vld [vmem:[%s223 + $0x18] sm:$0xf]
      %v350 = vld [vmem:[%s223 + $0x1c] sm:$0xf]
      %v351 = vld [vmem:[%s223 + $0x20] sm:$0xf]
      %v352 = vld [vmem:[%s223 + $0x24] sm:$0xf]
      %v353 = vld [vmem:[%s223 + $0x28] sm:$0xf]
      %v354 = vld [vmem:[%s223 + $0x2c] sm:$0xf]
      %s355 = sadd.s32 %s241, 1
      %s356 = smul.u32 %s355, 2
      %s357 = smul.addr %s356, 4
      %s358 = scalar_lea.vmem %s219, %s357
      %v359 = vld [vmem:[%s358] sm:$0xf]
      %v360 = vld [vmem:[%s358 + $0x4] sm:$0x1]
      %v361 = vld [vmem:[%s358 + $0x8] sm:$0xf]
      %v362 = vld [vmem:[%s358 + $0xc] sm:$0x1]
      %v363 = vld [vmem:[%s358 + $0x10] sm:$0xf]
      %v364 = vld [vmem:[%s358 + $0x14] sm:$0x1]
      %v365 = vld [vmem:[%s358 + $0x18] sm:$0xf]
      %v366 = vld [vmem:[%s358 + $0x1c] sm:$0x1]
      %v375 = vunpack.c.l.b16 %v359
      %v376 = vunpack.c.l.b16 %v360
      %v377 = vunpack.c.l.b16 %v361
      %v378 = vunpack.c.l.b16 %v362
      %v379 = vunpack.c.l.b16 %v363
      %v380 = vunpack.c.l.b16 %v364
      %v381 = vunpack.c.l.b16 %v365
      %v382 = vunpack.c.l.b16 %v366
      %v383 = vpack.c.b16 %v376, %v375
      %v384 = vpack.c.b16 %v378, %v377
      %v385 = vpack.c.b16 %v380, %v379
      %v386 = vpack.c.b16 %v382, %v381
      %v388 = vshrl.u32 %v383, 16
      %v390 = vshll.u32 %v383, 16
      %v392 = vrot.slane %v390, 1
      %v393 = vor.u32 %v388, %v392
      %v395 = vshrl.u32 %v384, 16
      %v397 = vshll.u32 %v384, 16
      %v399 = vrot.slane %v397, 1
      %v400 = vor.u32 %v395, %v399
      %v402 = vshrl.u32 %v385, 16
      %v404 = vshll.u32 %v385, 16
      %v406 = vrot.slane %v404, 1
      %v407 = vor.u32 %v402, %v406
      %v409 = vshrl.u32 %v386, 16
      %v411 = vshll.u32 %v386, 16
      %v413 = vrot.slane %v411, 1
      %v414 = vor.u32 %v409, %v413
      %415 = vrot.lane.b32.xlu0 %v393, 32
      %v416 = vpop.permute.xlu0 %415
      %417 = vrot.lane.b32.xlu0 %v400, 32
      %v418 = vpop.permute.xlu0 %417
      %419 = vrot.lane.b32.xlu0 %v407, 32
      %v420 = vpop.permute.xlu0 %419
      %421 = vrot.lane.b32.xlu0 %v414, 32
      %v422 = vpop.permute.xlu0 %421
      %v423 = vrot.slane %v383, 1
      %v424 = vrot.slane %v384, 1
      %v425 = vrot.slane %v385, 1
      %v426 = vrot.slane %v386, 1
      %427 = vrot.lane.b32.xlu0 %v423, 64
      %v428 = vpop.permute.xlu0 %427
      %429 = vrot.lane.b32.xlu0 %v424, 64
      %v430 = vpop.permute.xlu0 %429
      %431 = vrot.lane.b32.xlu0 %v425, 64
      %v432 = vpop.permute.xlu0 %431
      %433 = vrot.lane.b32.xlu0 %v426, 64
      %v434 = vpop.permute.xlu0 %433
      %v437 = vsel %vm321, %v359, %v416
      %v440 = vsel %vm321, %v361, %v418
      %v443 = vsel %vm321, %v363, %v420
      %v446 = vsel %vm321, %v365, %v422
      %v448 = vsel %vm334, %v437, %v428
      %v450 = vsel %vm334, %v440, %v430
      %v452 = vsel %vm334, %v443, %v432
      %v454 = vsel %vm334, %v446, %v434
      %s455 = scalar_lea.vmem %s223, 48
      %v456 = vld [vmem:[%s455] sm:$0xf]
      %v457 = vld [vmem:[%s455 + $0x4] sm:$0xf]
      %v458 = vld [vmem:[%s455 + $0x8] sm:$0xf]
      %v459 = vld [vmem:[%s455 + $0xc] sm:$0xf]
      %v460 = vld [vmem:[%s455 + $0x10] sm:$0xf]
      %v461 = vld [vmem:[%s455 + $0x14] sm:$0xf]
      %v462 = vld [vmem:[%s455 + $0x18] sm:$0xf]
      %v463 = vld [vmem:[%s455 + $0x1c] sm:$0xf]
      %v464 = vld [vmem:[%s455 + $0x20] sm:$0xf]
      %v465 = vld [vmem:[%s455 + $0x24] sm:$0xf]
      %v466 = vld [vmem:[%s455 + $0x28] sm:$0xf]
      %v467 = vld [vmem:[%s455 + $0x2c] sm:$0xf]
      %v472 = vunpack.c.l.b16 %v448
      %v473 = vunpack.c.l.b16 %v450
      %v474 = vunpack.c.l.b16 %v452
      %v475 = vunpack.c.l.b16 %v454
      %v476 = vpack.c.b16 %v473, %v472
      %v477 = vpack.c.b16 %v475, %v474
      %v490 = vunpack.c.l.b16 %v456
      %v491 = vunpack.c.l.b16 %v457
      %v492 = vunpack.c.l.b16 %v458
      %v493 = vunpack.c.l.b16 %v459
      %v494 = vunpack.c.l.b16 %v460
      %v495 = vunpack.c.l.b16 %v461
      %v496 = vunpack.c.l.b16 %v462
      %v497 = vunpack.c.l.b16 %v463
      %v498 = vunpack.c.l.b16 %v464
      %v499 = vunpack.c.l.b16 %v465
      %v500 = vunpack.c.l.b16 %v466
      %v501 = vunpack.c.l.b16 %v467
      %v502 = vpack.c.b16 %v491, %v490
      %v503 = vpack.c.b16 %v493, %v492
      %v504 = vpack.c.b16 %v495, %v494
      %v505 = vpack.c.b16 %v497, %v496
      %v506 = vpack.c.b16 %v499, %v498
      %v507 = vpack.c.b16 %v501, %v500
      %vm514 = vcmask 785408
      %v516 = vsel %vm514, %v476, 0
      %v519 = vsel %vm514, %v477, 0
      %521 = vmatpush.bf16.msra.mxu0 0
      %522 = vmatpush.bf16.msra.mxu0 0
      %523 = vmatpush.bf16.msra.mxu0 %v507
      %524 = vmatpush.bf16.msra.mxu0 %v506
      %525 = vmatpush.bf16.msra.mxu0 %v505
      %526 = vmatpush.bf16.msra.mxu0 %v504
      %527 = vmatpush.bf16.msra.mxu0 %v503
      %528 = vmatpush.bf16.msra.mxu0 %v502
      %529 = vmatmul.bf16.gmra.mxu0 %v516
      %v530 = vpop.f32.mrf.mxu0
      %v531 = vadd.f32 0.0, %v530
      %v532 = vpop.f32.mrf.mxu0
      %v533 = vadd.f32 0.0, %v532
      %534 = vmatmul.bf16.gmra.mxu0 %v519
      %v535 = vpop.f32.mrf.mxu0
      %v536 = vadd.f32 0.0, %v535
      %v537 = vpop.f32.mrf.mxu0
      %v538 = vadd.f32 0.0, %v537
      %539 = vdwg.mxu0
      %v544 = vunpack.c.l.b16 %v336
      %v545 = vunpack.c.l.b16 %v338
      %v546 = vunpack.c.l.b16 %v340
      %v547 = vunpack.c.l.b16 %v342
      %v548 = vpack.c.b16 %v545, %v544
      %v549 = vpack.c.b16 %v547, %v546
      %v562 = vunpack.c.l.b16 %v343
      %v563 = vunpack.c.l.b16 %v344
      %v564 = vunpack.c.l.b16 %v345
      %v565 = vunpack.c.l.b16 %v346
      %v566 = vunpack.c.l.b16 %v347
      %v567 = vunpack.c.l.b16 %v348
      %v568 = vunpack.c.l.b16 %v349
      %v569 = vunpack.c.l.b16 %v350
      %v570 = vunpack.c.l.b16 %v351
      %v571 = vunpack.c.l.b16 %v352
      %v572 = vunpack.c.l.b16 %v353
      %v573 = vunpack.c.l.b16 %v354
      %v574 = vpack.c.b16 %v563, %v562
      %v575 = vpack.c.b16 %v565, %v564
      %v576 = vpack.c.b16 %v567, %v566
      %v577 = vpack.c.b16 %v569, %v568
      %v578 = vpack.c.b16 %v571, %v570
      %v579 = vpack.c.b16 %v573, %v572
      %v587 = vsel %vm514, %v548, 0
      %v590 = vsel %vm514, %v549, 0
      %592 = vmatpush.bf16.msra.mxu0 0
      %593 = vmatpush.bf16.msra.mxu0 0
      %594 = vmatpush.bf16.msra.mxu0 %v579
      %595 = vmatpush.bf16.msra.mxu0 %v578
      %596 = vmatpush.bf16.msra.mxu0 %v577
      %597 = vmatpush.bf16.msra.mxu0 %v576
      %598 = vmatpush.bf16.msra.mxu0 %v575
      %599 = vmatpush.bf16.msra.mxu0 %v574
      %600 = vmatmul.bf16.gmra.mxu0 %v587
      %v601 = vpop.f32.mrf.mxu0
      %v602 = vadd.f32 %v531, %v601
      %v603 = vpop.f32.mrf.mxu0
      %v604 = vadd.f32 %v533, %v603
      %605 = vmatmul.bf16.gmra.mxu0 %v590
      %v606 = vpop.f32.mrf.mxu0
      %v607 = vadd.f32 %v536, %v606
      %v608 = vpop.f32.mrf.mxu0
      %v609 = vadd.f32 %v538, %v608
      %610 = vdwg.mxu0
      %s611 = sadd.s32 %s241, 2
      %s612 = smul.u32 %s611, 2
      %s613 = smul.addr %s612, 4
      %s614 = scalar_lea.vmem %s219, %s613
      %v615 = vld [vmem:[%s614] sm:$0xf]
      %v616 = vld [vmem:[%s614 + $0x4] sm:$0x1]
      %v617 = vld [vmem:[%s614 + $0x8] sm:$0xf]
      %v618 = vld [vmem:[%s614 + $0xc] sm:$0x1]
      %v619 = vld [vmem:[%s614 + $0x10] sm:$0xf]
      %v620 = vld [vmem:[%s614 + $0x14] sm:$0x1]
      %v621 = vld [vmem:[%s614 + $0x18] sm:$0xf]
      %v622 = vld [vmem:[%s614 + $0x1c] sm:$0x1]
      %v631 = vunpack.c.l.b16 %v615
      %v632 = vunpack.c.l.b16 %v616
      %v633 = vunpack.c.l.b16 %v617
      %v634 = vunpack.c.l.b16 %v618
      %v635 = vunpack.c.l.b16 %v619
      %v636 = vunpack.c.l.b16 %v620
      %v637 = vunpack.c.l.b16 %v621
      %v638 = vunpack.c.l.b16 %v622
      %v639 = vpack.c.b16 %v632, %v631
      %v640 = vpack.c.b16 %v634, %v633
      %v641 = vpack.c.b16 %v636, %v635
      %v642 = vpack.c.b16 %v638, %v637
      %v644 = vshrl.u32 %v639, 16
      %v646 = vshll.u32 %v639, 16
      %v648 = vrot.slane %v646, 1
      %v649 = vor.u32 %v644, %v648
      %v651 = vshrl.u32 %v640, 16
      %v653 = vshll.u32 %v640, 16
      %v655 = vrot.slane %v653, 1
      %v656 = vor.u32 %v651, %v655
      %v658 = vshrl.u32 %v641, 16
      %v660 = vshll.u32 %v641, 16
      %v662 = vrot.slane %v660, 1
      %v663 = vor.u32 %v658, %v662
      %v665 = vshrl.u32 %v642, 16
      %v667 = vshll.u32 %v642, 16
      %v669 = vrot.slane %v667, 1
      %v670 = vor.u32 %v665, %v669
      %671 = vrot.lane.b32.xlu0 %v649, 32
      %v672 = vpop.permute.xlu0 %671
      %673 = vrot.lane.b32.xlu0 %v656, 32
      %v674 = vpop.permute.xlu0 %673
      %675 = vrot.lane.b32.xlu0 %v663, 32
      %v676 = vpop.permute.xlu0 %675
      %677 = vrot.lane.b32.xlu0 %v670, 32
      %v678 = vpop.permute.xlu0 %677
      %v679 = vrot.slane %v639, 1
      %v680 = vrot.slane %v640, 1
      %v681 = vrot.slane %v641, 1
      %v682 = vrot.slane %v642, 1
      %683 = vrot.lane.b32.xlu0 %v679, 64
      %v684 = vpop.permute.xlu0 %683
      %685 = vrot.lane.b32.xlu0 %v680, 64
      %v686 = vpop.permute.xlu0 %685
      %687 = vrot.lane.b32.xlu0 %v681, 64
      %v688 = vpop.permute.xlu0 %687
      %689 = vrot.lane.b32.xlu0 %v682, 64
      %v690 = vpop.permute.xlu0 %689
      %v693 = vsel %vm321, %v615, %v672
      %v696 = vsel %vm321, %v617, %v674
      %v699 = vsel %vm321, %v619, %v676
      %v702 = vsel %vm321, %v621, %v678
      %v704 = vsel %vm334, %v693, %v684
      %v706 = vsel %vm334, %v696, %v686
      %v708 = vsel %vm334, %v699, %v688
      %v710 = vsel %vm334, %v702, %v690
      %s711 = scalar_lea.vmem %s223, 96
      %v712 = vld [vmem:[%s711] sm:$0xf]
      %v713 = vld [vmem:[%s711 + $0x4] sm:$0xf]
      %v714 = vld [vmem:[%s711 + $0x8] sm:$0xf]
      %v715 = vld [vmem:[%s711 + $0xc] sm:$0xf]
      %v716 = vld [vmem:[%s711 + $0x10] sm:$0xf]
      %v717 = vld [vmem:[%s711 + $0x14] sm:$0xf]
      %v718 = vld [vmem:[%s711 + $0x18] sm:$0xf]
      %v719 = vld [vmem:[%s711 + $0x1c] sm:$0xf]
      %v720 = vld [vmem:[%s711 + $0x20] sm:$0xf]
      %v721 = vld [vmem:[%s711 + $0x24] sm:$0xf]
      %v722 = vld [vmem:[%s711 + $0x28] sm:$0xf]
      %v723 = vld [vmem:[%s711 + $0x2c] sm:$0xf]
      %v728 = vunpack.c.l.b16 %v704
      %v729 = vunpack.c.l.b16 %v706
      %v730 = vunpack.c.l.b16 %v708
      %v731 = vunpack.c.l.b16 %v710
      %v732 = vpack.c.b16 %v729, %v728
      %v733 = vpack.c.b16 %v731, %v730
      %v746 = vunpack.c.l.b16 %v712
      %v747 = vunpack.c.l.b16 %v713
      %v748 = vunpack.c.l.b16 %v714
      %v749 = vunpack.c.l.b16 %v715
      %v750 = vunpack.c.l.b16 %v716
      %v751 = vunpack.c.l.b16 %v717
      %v752 = vunpack.c.l.b16 %v718
      %v753 = vunpack.c.l.b16 %v719
      %v754 = vunpack.c.l.b16 %v720
      %v755 = vunpack.c.l.b16 %v721
      %v756 = vunpack.c.l.b16 %v722
      %v757 = vunpack.c.l.b16 %v723
      %v758 = vpack.c.b16 %v747, %v746
      %v759 = vpack.c.b16 %v749, %v748
      %v760 = vpack.c.b16 %v751, %v750
      %v761 = vpack.c.b16 %v753, %v752
      %v762 = vpack.c.b16 %v755, %v754
      %v763 = vpack.c.b16 %v757, %v756
      %v771 = vsel %vm514, %v732, 0
      %v774 = vsel %vm514, %v733, 0
      %776 = vmatpush.bf16.msra.mxu0 0
      %777 = vmatpush.bf16.msra.mxu0 0
      %778 = vmatpush.bf16.msra.mxu0 %v763
      %779 = vmatpush.bf16.msra.mxu0 %v762
      %780 = vmatpush.bf16.msra.mxu0 %v761
      %781 = vmatpush.bf16.msra.mxu0 %v760
      %782 = vmatpush.bf16.msra.mxu0 %v759
      %783 = vmatpush.bf16.msra.mxu0 %v758
      %784 = vmatmul.bf16.gmra.mxu0 %v771
      %v785 = vpop.f32.mrf.mxu0
      %v786 = vadd.f32 0.0, %v785
      %v787 = vpop.f32.mrf.mxu0
      %v788 = vadd.f32 0.0, %v787
      %789 = vmatmul.bf16.gmra.mxu0 %v774
      %v790 = vpop.f32.mrf.mxu0
      %v791 = vadd.f32 0.0, %v790
      %v792 = vpop.f32.mrf.mxu0
      %v793 = vadd.f32 0.0, %v792
      %794 = vdwg.mxu0
      %v795 = vadd.f32 %v602, %v786
      %v796 = vadd.f32 %v604, %v788
      %v797 = vadd.f32 %v607, %v791
      %v798 = vadd.f32 %v609, %v793
      %v799 = vld [vmem:[%s226] sm:$0x1]
      %v801 = vperm.slane %v799, 0
      %v803 = vadd.f32 %v795, %v801
      %v804 = vadd.f32 %v796, %v801
      %v805 = vadd.f32 %v797, %v801
      %v806 = vadd.f32 %v798, %v801
      %v807 = vmax.f32 %v803, 0.0
      %v808 = vmax.f32 %v804, 0.0
      %v809 = vmax.f32 %v805, 0.0
      %v810 = vmax.f32 %v806, 0.0
      %v811 = vpack.c.bf16 %v807, %v807
      %v812 = vpack.c.bf16 %v808, %v808
      %v813 = vpack.c.bf16 %v809, %v809
      %v814 = vpack.c.bf16 %v810, %v810
      %vm815 = vcmask 125952
      %816 = vst.msk [vmem:[%s236] sm:$0xf] %vm815, %v811
      %817 = vst.msk [vmem:[%s236 + $0x4] sm:$0xf] %vm815, %v812
      %818 = vst.msk [vmem:[%s236 + $0x8] sm:$0xf] %vm815, %v813
      %819 = vst.msk [vmem:[%s236 + $0xc] sm:$0xf] %vm815, %v814
      %s820 = smul.u32 %s19, 2
      %s821 = sadd.s32 %s820, %s20
      %s822 = smul.u32 4, %s821
      %p823 = scmp.lt.s32.totalorder %s822, 15
      %s824 = scalar_select %p823, %s822, 15
      %p825 = scmp.lt.s32.totalorder %s21, 0
      %s826 = scalar_select %p825, %s21, 0
      %s827 = sadd.s32 %s826, %s824
      %s828 = smul.addr %s827, 4
      %s829 = scalar_lea.vmem %s3, %s828
      // Predicated region
      $region33: #{hg_stage_forward.14} parent=31 // pred_check
        %p830 = pneg %p135
      $region34: #{hg_stage_forward.14} parent=31 // pred_check_branch
        %832 = sbr.rel (%p830) target = $region36
      $region35: #{hg_stage_forward.14} parent=31 // pred_region
        %s833 = smul.u32 %s19, 2
        %s834 = sadd.s32 %s833, %s20
        %s835 = smul.u32 4, %s834
      $region36: #{hg_stage_forward.14} parent=31 // pred_fallthru
        _
    $region32: #{hg_stage_forward.14} parent=5 // pred_fallthru
      _
    %p836 = scmp.le.s32.totalorder 2, %s9
    // Predicated region
    $region37: #{hg_stage_forward.14} parent=5 // pred_check
      %p837 = pneg %p836
    $region38: #{hg_stage_forward.14} parent=5 // pred_check_branch
      %839 = sbr.rel (%p837) target = $region40
    $region39: #{hg_stage_forward.14} parent=5 // pred_region
      %s840 = ssub.s32 %s9, 2
      // Predicated region
      $region41: #{hg_stage_forward.14} parent=39 // pred_check
        %p841 = pneg %p141
      $region42: #{hg_stage_forward.14} parent=39 // pred_check_branch
        %843 = sbr.rel (%p841) target = $region44
      $region43: #{hg_stage_forward.14} parent=39 // pred_region
        %s844 = smul.u32 %s22, 2
        %s845 = sadd.s32 %s844, %s23
        %s846 = smul.u32 4, %s845
        %p847 = scmp.lt.s32.totalorder %s846, 15
        %s848 = scalar_select %p847, %s846, 15
        %p849 = scmp.lt.s32.totalorder %s24, 0
        %s850 = scalar_select %p849, %s24, 0
        %s851 = sadd.s32 %s850, %s848
        %s852 = smul.addr %s851, 4
        %s853 = scalar_lea.vmem %s3, %s852
      $region44: #{hg_stage_forward.14} parent=39 // pred_fallthru
        _
    $region40: #{hg_stage_forward.14} parent=5 // pred_fallthru
      _
  $region6: #{hg_stage_forward.14} parent=0 // loop_footer
    %s13 = sadd.s32 1, %s9
  $region7: #{hg_stage_forward.14} parent=0 // loop_footer_branch
    %8 = sbr.rel target = $region3
  $region8: #{hg_stage_forward.14} parent=0 // loop_exit
    _

</llo_original>
